<compile_context>
chip_gen: v7x
topology: tpu7x:2x2x1
jax: 0.10.0
libtpu: 0.0.40
codegen_flags: <defaults>
</compile_context>

<pallas_src>
import functools

import jax
import jax.numpy as jnp
from jax.experimental import pallas as pl
from jax.experimental.pallas import tpu as pltpu

# ----- model hyper-parameters (small, consistent with the module's __init__) -----
VOCAB = 50          # input_dim
HID_DIM = 32        # hid_dim
N_HEADS = 4         # n_heads
HEAD_DIM = HID_DIM // N_HEADS
PF_DIM = 64         # pf_dim
N_LAYERS = 2        # n_layers
MAX_LEN = 150       # max_length
LN_EPS = 1e-5       # PyTorch nn.LayerNorm default eps
PARAMS_PER_LAYER = 14


# --------------------------------------------------------------------------------
# Fused kernel: embedding gather + combine + N_LAYERS encoder layers, one sequence
# per grid step (grid over batch, "parallel").
# --------------------------------------------------------------------------------
def _encoder_kernel(ids_ref, mask_ref, tok_ref, pos_ref, *rest,
                    n_layers, n_heads, head_dim, emb_scale):
    o_ref = rest[-1]
    params = rest[:-1]

    S, H = pos_ref.shape
    V = tok_ref.shape[0]
    bf16 = jnp.bfloat16

    # ---- token embedding gather (exact one-hot matmul) + positional embedding ----
    ids = ids_ref[0]                                           # (S, 1) int32
    col = jax.lax.broadcasted_iota(jnp.int32, (S, V), 1)       # (S, V)
    onehot = (ids == col).astype(jnp.float32)                  # (S, V)
    x = (jnp.dot(onehot, tok_ref[...], preferred_element_type=jnp.float32)
         * jnp.float32(emb_scale) + pos_ref[...])              # (S, H) f32

    # ---- additive attention-mask bias, computed once per sequence ----
    mask = mask_ref[0]                                         # (1, S) f32 (1=keep, 0=pad)
    neg_bias = jnp.where(mask == 0.0, jnp.float32(-1e10), jnp.float32(0.0))
    neg_bias = neg_bias[None]                                  # (1, 1, S) -> bcast (n, S, S)

    inv_scale = jnp.float32(1.0 / (float(head_dim) ** 0.5))

    def layer_norm(y, g, b):
        mu = jnp.mean(y, axis=-1, keepdims=True)
        var = jnp.mean((y - mu) ** 2, axis=-1, keepdims=True)
        return (y - mu) * jax.lax.rsqrt(var + LN_EPS) * g + b

    for l in range(n_layers):                                  # static unroll over layers
        (wq, bq, wk, bk, wv, bv, wo, bo, g_r, b_r,
         w1, b1, w2, b2) = params[l * PARAMS_PER_LAYER:(l + 1) * PARAMS_PER_LAYER]
        g = g_r[...]
        beta = b_r[...]

        # ---- head-batched Q/K/V projections: (n, S, H) @ (n, H, d) -> (n, S, d) ----
        # Weights arrive already in bf16 (cast once in the wrapper); activations cast here.
        xb = jnp.broadcast_to(x.astype(bf16)[None], (n_heads, S, H))
        q = jnp.einsum('nsh,nhd->nsd', xb, wq[...],
                       preferred_element_type=jnp.float32) + bq[...]
        k = jnp.einsum('nsh,nhd->nsd', xb, wk[...],
                       preferred_element_type=jnp.float32) + bk[...]
        v = jnp.einsum('nsh,nhd->nsd', xb, wv[...],
                       preferred_element_type=jnp.float32) + bv[...]

        # ---- scaled dot-product attention (scale folded into q) ----
        q = q * inv_scale
        energy = jnp.einsum('nqd,nkd->nqk', q.astype(bf16), k.astype(bf16),
                            preferred_element_type=jnp.float32) + neg_bias  # (n, S, S)
        m = jnp.max(energy, axis=-1, keepdims=True)
        pexp = jnp.exp(energy - m)
        denom = jnp.sum(pexp, axis=-1, keepdims=True)
        attn = pexp * pl.reciprocal(denom, approx=True)                      # softmax
        ctx = jnp.einsum('nqk,nkd->nqd', attn.astype(bf16), v.astype(bf16),
                         preferred_element_type=jnp.float32)                 # (n, S, d)

        # ---- output projection decomposed per head: sum_n ctx_n @ Wo[rows_n] ----
        proj = jnp.einsum('nsd,ndh->nsh', ctx.astype(bf16), wo[...],
                          preferred_element_type=jnp.float32)                # (n, S, H)
        attn_out = jnp.sum(proj, axis=0) + bo[...]                           # (S, H)

        # ---- residual + shared LayerNorm (same params twice, as in PyTorch layer) ----
        src = layer_norm(x + attn_out, g, beta)

        # ---- position-wise feedforward ----
        h1 = jnp.maximum(
            jnp.dot(src.astype(bf16), w1[...],
                    preferred_element_type=jnp.float32) + b1[...], 0.0)
        ff = jnp.dot(h1.astype(bf16), w2[...],
                     preferred_element_type=jnp.float32) + b2[...]

        x = layer_norm(src + ff, g, beta)

    o_ref[0] = x.astype(o_ref.dtype)


# --------------------------------------------------------------------------------
# Wrapper: reshape weights per head and pre-cast matmul weights to bf16 (trace-time,
# outside the kernel), then launch the single fused pallas_call.
# --------------------------------------------------------------------------------
def _prep_layer_params(layer):
    wq, bq, wk, bk, wv, bv, wo, bo, g, beta, w1, b1, w2, b2 = layer
    bf16 = jnp.bfloat16

    def head_w(w):   # (H, H) -> (n_heads, H, d);  [n] == w[:, n*d:(n+1)*d]
        return jnp.transpose(w.reshape(HID_DIM, N_HEADS, HEAD_DIM), (1, 0, 2)).astype(bf16)

    def head_b(b):   # (1, H) -> (n_heads, 1, d)   (bias stays f32)
        return b.reshape(N_HEADS, 1, HEAD_DIM)

    wo_h = wo.reshape(N_HEADS, HEAD_DIM, HID_DIM).astype(bf16)  # [n, m, :] == wo[n*d + m, :]
    return [head_w(wq), head_b(bq), head_w(wk), head_b(bk), head_w(wv), head_b(bv),
            wo_h, bo, g, beta, w1.astype(bf16), b1, w2.astype(bf16), b2]


def encoder_forward(src_ids, src_mask, tok_emb, pos_emb, layers):
    B, S = src_ids.shape
    H = HID_DIM

    ids3 = src_ids.reshape(B, S, 1).astype(jnp.int32)
    mask3 = src_mask.reshape(B, 1, S).astype(jnp.float32)
    pos = pos_emb[:S]                                  # (S, H): pos ids are arange(S)

    flat_params = []
    for layer in layers:
        flat_params.extend(_prep_layer_params(layer))

    kernel = functools.partial(
        _encoder_kernel,
        n_layers=N_LAYERS, n_heads=N_HEADS, head_dim=HEAD_DIM,
        emb_scale=float(HID_DIM) ** 0.5)

    def full_spec(p):
        zeros = (0,) * p.ndim
        return pl.BlockSpec(p.shape, lambda b, z=zeros: z)   # resident across grid steps

    in_specs = [
        pl.BlockSpec((1, S, 1), lambda b: (b, 0, 0)),   # token ids
        pl.BlockSpec((1, 1, S), lambda b: (b, 0, 0)),   # mask
        full_spec(tok_emb),                             # whole embedding table in VMEM
        full_spec(pos),
    ] + [full_spec(p) for p in flat_params]

    return pl.pallas_call(
        kernel,
        out_shape=jax.ShapeDtypeStruct((B, S, H), jnp.float32),
        grid=(B,),
        in_specs=in_specs,
        out_specs=pl.BlockSpec((1, S, H), lambda b: (b, 0, 0)),
        compiler_params=pltpu.CompilerParams(dimension_semantics=("parallel",)),
    )(ids3, mask3, tok_emb, pos, *flat_params)


# --------------------------------------------------------------------------------
# Parameter init (deterministic, mirroring the nn.Module shapes; weights stored (in, out))
# --------------------------------------------------------------------------------
def _linear(key, fan_in, fan_out):
    k1, k2 = jax.random.split(key)
    bound = 1.0 / (fan_in ** 0.5)
    w = jax.random.uniform(k1, (fan_in, fan_out), jnp.float32, -bound, bound)
    b = jax.random.uniform(k2, (1, fan_out), jnp.float32, -bound, bound)
    return w, b


def init_encoder_params(key):
    keys = jax.random.split(key, 2 + N_LAYERS)
    tok_emb = jax.random.normal(keys[0], (VOCAB, HID_DIM), jnp.float32)
    pos_emb = jax.random.normal(keys[1], (MAX_LEN, HID_DIM), jnp.float32)
    layers = []
    for i in range(N_LAYERS):
        lk = jax.random.split(keys[2 + i], 6)
        wq, bq = _linear(lk[0], HID_DIM, HID_DIM)
        wk, bk = _linear(lk[1], HID_DIM, HID_DIM)
        wv, bv = _linear(lk[2], HID_DIM, HID_DIM)
        wo, bo = _linear(lk[3], HID_DIM, HID_DIM)
        w1, b1 = _linear(lk[4], HID_DIM, PF_DIM)
        w2, b2 = _linear(lk[5], PF_DIM, HID_DIM)
        ln_g = jnp.ones((1, HID_DIM), jnp.float32)
        ln_b = jnp.zeros((1, HID_DIM), jnp.float32)
        layers.append((wq, bq, wk, bk, wv, bv, wo, bo, ln_g, ln_b, w1, b1, w2, b2))
    return tok_emb, pos_emb, layers


if __name__ == "__main__":
    key = jax.random.PRNGKey(0)
    kparam, kdata = jax.random.split(key)
    tok_emb, pos_emb, layers = init_encoder_params(kparam)

    B, S = 2, 8
    src_ids = jax.random.randint(kdata, (B, S), 0, VOCAB, dtype=jnp.int32)
    # src_mask: 1 = real token, 0 = padding (PyTorch: energy.masked_fill(mask == 0, -1e10))
    src_mask = jnp.ones((B, S), jnp.int32).at[1, 6:].set(0)

    out = encoder_forward(src_ids, src_mask, tok_emb, pos_emb, layers)
    out = jax.block_until_ready(out)
    assert out.shape == (B, S, HID_DIM) and out.dtype == jnp.float32
    assert bool(jnp.all(jnp.isfinite(out)))
    print("KERNEL_OK")
</pallas_src>

<mosaic_0001>
module attributes {stable_mosaic.version = 11 : i64} {
  func.func @_encoder_kernel(%arg0: i32, %arg1: memref<1x8x1xi32, #tpu.memory_space<vmem>>, %arg2: memref<1x1x8xf32, #tpu.memory_space<vmem>>, %arg3: memref<50x32xf32, #tpu.memory_space<vmem>>, %arg4: memref<8x32xf32, #tpu.memory_space<vmem>>, %arg5: memref<4x32x8xbf16, #tpu.memory_space<vmem>>, %arg6: memref<4x1x8xf32, #tpu.memory_space<vmem>>, %arg7: memref<4x32x8xbf16, #tpu.memory_space<vmem>>, %arg8: memref<4x1x8xf32, #tpu.memory_space<vmem>>, %arg9: memref<4x32x8xbf16, #tpu.memory_space<vmem>>, %arg10: memref<4x1x8xf32, #tpu.memory_space<vmem>>, %arg11: memref<4x8x32xbf16, #tpu.memory_space<vmem>>, %arg12: memref<1x32xf32, #tpu.memory_space<vmem>>, %arg13: memref<1x32xf32, #tpu.memory_space<vmem>>, %arg14: memref<1x32xf32, #tpu.memory_space<vmem>>, %arg15: memref<32x64xbf16, #tpu.memory_space<vmem>>, %arg16: memref<1x64xf32, #tpu.memory_space<vmem>>, %arg17: memref<64x32xbf16, #tpu.memory_space<vmem>>, %arg18: memref<1x32xf32, #tpu.memory_space<vmem>>, %arg19: memref<4x32x8xbf16, #tpu.memory_space<vmem>>, %arg20: memref<4x1x8xf32, #tpu.memory_space<vmem>>, %arg21: memref<4x32x8xbf16, #tpu.memory_space<vmem>>, %arg22: memref<4x1x8xf32, #tpu.memory_space<vmem>>, %arg23: memref<4x32x8xbf16, #tpu.memory_space<vmem>>, %arg24: memref<4x1x8xf32, #tpu.memory_space<vmem>>, %arg25: memref<4x8x32xbf16, #tpu.memory_space<vmem>>, %arg26: memref<1x32xf32, #tpu.memory_space<vmem>>, %arg27: memref<1x32xf32, #tpu.memory_space<vmem>>, %arg28: memref<1x32xf32, #tpu.memory_space<vmem>>, %arg29: memref<32x64xbf16, #tpu.memory_space<vmem>>, %arg30: memref<1x64xf32, #tpu.memory_space<vmem>>, %arg31: memref<64x32xbf16, #tpu.memory_space<vmem>>, %arg32: memref<1x32xf32, #tpu.memory_space<vmem>>, %arg33: memref<1x8x32xf32, #tpu.memory_space<vmem>>) attributes {dimension_semantics = [#tpu.dimension_semantics<parallel>], iteration_bounds = array<i64: 2>, scalar_prefetch = 0 : i64, scratch_operands = 0 : i64, tpu.core_type = #tpu.core_type<tc>, window_params = [{transform_indices = @transform_0, window_bounds = array<i64: 1, 8, 1>}, {transform_indices = @transform_1, window_bounds = array<i64: 1, 1, 8>}, {pipeline_mode = #tpu.pipeline_mode<synchronous>, transform_indices = @transform_2, window_bounds = array<i64: 50, 32>}, {pipeline_mode = #tpu.pipeline_mode<synchronous>, transform_indices = @transform_3, window_bounds = array<i64: 8, 32>}, {pipeline_mode = #tpu.pipeline_mode<synchronous>, transform_indices = @transform_4, window_bounds = array<i64: 4, 32, 8>}, {pipeline_mode = #tpu.pipeline_mode<synchronous>, transform_indices = @transform_5, window_bounds = array<i64: 4, 1, 8>}, {pipeline_mode = #tpu.pipeline_mode<synchronous>, transform_indices = @transform_6, window_bounds = array<i64: 4, 32, 8>}, {pipeline_mode = #tpu.pipeline_mode<synchronous>, transform_indices = @transform_7, window_bounds = array<i64: 4, 1, 8>}, {pipeline_mode = #tpu.pipeline_mode<synchronous>, transform_indices = @transform_8, window_bounds = array<i64: 4, 32, 8>}, {pipeline_mode = #tpu.pipeline_mode<synchronous>, transform_indices = @transform_9, window_bounds = array<i64: 4, 1, 8>}, {pipeline_mode = #tpu.pipeline_mode<synchronous>, transform_indices = @transform_10, window_bounds = array<i64: 4, 8, 32>}, {pipeline_mode = #tpu.pipeline_mode<synchronous>, transform_indices = @transform_11, window_bounds = array<i64: 1, 32>}, {pipeline_mode = #tpu.pipeline_mode<synchronous>, transform_indices = @transform_12, window_bounds = array<i64: 1, 32>}, {pipeline_mode = #tpu.pipeline_mode<synchronous>, transform_indices = @transform_13, window_bounds = array<i64: 1, 32>}, {pipeline_mode = #tpu.pipeline_mode<synchronous>, transform_indices = @transform_14, window_bounds = array<i64: 32, 64>}, {pipeline_mode = #tpu.pipeline_mode<synchronous>, transform_indices = @transform_15, window_bounds = array<i64: 1, 64>}, {pipeline_mode = #tpu.pipeline_mode<synchronous>, transform_indices = @transform_16, window_bounds = array<i64: 64, 32>}, {pipeline_mode = #tpu.pipeline_mode<synchronous>, transform_indices = @transform_17, window_bounds = array<i64: 1, 32>}, {pipeline_mode = #tpu.pipeline_mode<synchronous>, transform_indices = @transform_18, window_bounds = array<i64: 4, 32, 8>}, {pipeline_mode = #tpu.pipeline_mode<synchronous>, transform_indices = @transform_19, window_bounds = array<i64: 4, 1, 8>}, {pipeline_mode = #tpu.pipeline_mode<synchronous>, transform_indices = @transform_20, window_bounds = array<i64: 4, 32, 8>}, {pipeline_mode = #tpu.pipeline_mode<synchronous>, transform_indices = @transform_21, window_bounds = array<i64: 4, 1, 8>}, {pipeline_mode = #tpu.pipeline_mode<synchronous>, transform_indices = @transform_22, window_bounds = array<i64: 4, 32, 8>}, {pipeline_mode = #tpu.pipeline_mode<synchronous>, transform_indices = @transform_23, window_bounds = array<i64: 4, 1, 8>}, {pipeline_mode = #tpu.pipeline_mode<synchronous>, transform_indices = @transform_24, window_bounds = array<i64: 4, 8, 32>}, {pipeline_mode = #tpu.pipeline_mode<synchronous>, transform_indices = @transform_25, window_bounds = array<i64: 1, 32>}, {pipeline_mode = #tpu.pipeline_mode<synchronous>, transform_indices = @transform_26, window_bounds = array<i64: 1, 32>}, {pipeline_mode = #tpu.pipeline_mode<synchronous>, transform_indices = @transform_27, window_bounds = array<i64: 1, 32>}, {pipeline_mode = #tpu.pipeline_mode<synchronous>, transform_indices = @transform_28, window_bounds = array<i64: 32, 64>}, {pipeline_mode = #tpu.pipeline_mode<synchronous>, transform_indices = @transform_29, window_bounds = array<i64: 1, 64>}, {pipeline_mode = #tpu.pipeline_mode<synchronous>, transform_indices = @transform_30, window_bounds = array<i64: 64, 32>}, {pipeline_mode = #tpu.pipeline_mode<synchronous>, transform_indices = @transform_31, window_bounds = array<i64: 1, 32>}, {transform_indices = @transform_32, window_bounds = array<i64: 1, 8, 32>}]} {
    %c0 = arith.constant 0 : index
    %c0_0 = arith.constant 0 : index
    %c0_1 = arith.constant 0 : index
    %0 = vector.load %arg1[%c0, %c0_0, %c0_1] : memref<1x8x1xi32, #tpu.memory_space<vmem>>, vector<1x8x1xi32>
    %1 = vector.shape_cast %0 : vector<1x8x1xi32> to vector<8x1xi32>
    %2 = tpu.iota {dimensions = array<i32: 1>} : vector<8x50xi32>
    %3 = vector.broadcast %1 : vector<8x1xi32> to vector<8x50xi32>
    %4 = arith.cmpi eq, %3, %2 : vector<8x50xi32>
    %5 = arith.extui %4 : vector<8x50xi1> to vector<8x50xi32>
    %6 = arith.sitofp %5 : vector<8x50xi32> to vector<8x50xf32>
    %c0_2 = arith.constant 0 : index
    %c0_3 = arith.constant 0 : index
    %7 = vector.load %arg3[%c0_2, %c0_3] : memref<50x32xf32, #tpu.memory_space<vmem>>, vector<50x32xf32>
    %cst = arith.constant dense<0.000000e+00> : vector<8x32xf32>
    %8 = tpu.matmul %6, %7, %cst {dimension_numbers = #tpu.dot_dimension_numbers<[1], [0], [0], [1], [0, 0, 1, 1], [], []>} : vector<8x50xf32>, vector<50x32xf32>, vector<8x32xf32> -> vector<8x32xf32>
    %cst_4 = arith.constant 5.65685415 : f32
    %9 = vector.broadcast %cst_4 : f32 to vector<8x32xf32>
    %10 = arith.mulf %8, %9 : vector<8x32xf32>
    %c0_5 = arith.constant 0 : index
    %c0_6 = arith.constant 0 : index
    %11 = vector.load %arg4[%c0_5, %c0_6] : memref<8x32xf32, #tpu.memory_space<vmem>>, vector<8x32xf32>
    %12 = arith.addf %10, %11 : vector<8x32xf32>
    %c0_7 = arith.constant 0 : index
    %c0_8 = arith.constant 0 : index
    %c0_9 = arith.constant 0 : index
    %13 = vector.load %arg2[%c0_7, %c0_8, %c0_9] : memref<1x1x8xf32, #tpu.memory_space<vmem>>, vector<1x1x8xf32>
    %14 = vector.shape_cast %13 : vector<1x1x8xf32> to vector<1x8xf32>
    %cst_10 = arith.constant 0.000000e+00 : f32
    %15 = vector.broadcast %cst_10 : f32 to vector<1x8xf32>
    %16 = arith.cmpf oeq, %14, %15 : vector<1x8xf32>
    %cst_11 = arith.constant -1.000000e+10 : f32
    %cst_12 = arith.constant 0.000000e+00 : f32
    %17 = vector.broadcast %cst_11 : f32 to vector<1x8xf32>
    %18 = vector.broadcast %cst_12 : f32 to vector<1x8xf32>
    %19 = arith.select %16, %17, %18 : vector<1x8xi1>, vector<1x8xf32>
    %20 = vector.shape_cast %19 : vector<1x8xf32> to vector<1x1x8xf32>
    %c0_13 = arith.constant 0 : index
    %c0_14 = arith.constant 0 : index
    %21 = vector.load %arg13[%c0_13, %c0_14] : memref<1x32xf32, #tpu.memory_space<vmem>>, vector<1x32xf32>
    %c0_15 = arith.constant 0 : index
    %c0_16 = arith.constant 0 : index
    %22 = vector.load %arg14[%c0_15, %c0_16] : memref<1x32xf32, #tpu.memory_space<vmem>>, vector<1x32xf32>
    %23 = arith.truncf %12 : vector<8x32xf32> to vector<8x32xbf16>
    %24 = vector.shape_cast %23 : vector<8x32xbf16> to vector<1x8x32xbf16>
    %25 = vector.shape_cast %24 : vector<1x8x32xbf16> to vector<1x8x32xbf16>
    %26 = vector.broadcast %25 : vector<1x8x32xbf16> to vector<4x8x32xbf16>
    %c0_17 = arith.constant 0 : index
    %c0_18 = arith.constant 0 : index
    %c0_19 = arith.constant 0 : index
    %27 = vector.load %arg5[%c0_17, %c0_18, %c0_19] : memref<4x32x8xbf16, #tpu.memory_space<vmem>>, vector<4x32x8xbf16>
    "tpu.trace_start"() <{level = 10 : i32, message = "nsh,nhd->nsd"}> : () -> ()
    %cst_20 = arith.constant dense<0.000000e+00> : vector<4x8x8xf32>
    %28 = tpu.matmul %26, %27, %cst_20 {dimension_numbers = #tpu.dot_dimension_numbers<[2], [1], [1], [2], [0, 0, 0, 1, 1, 2], [0], [0]>} : vector<4x8x32xbf16>, vector<4x32x8xbf16>, vector<4x8x8xf32> -> vector<4x8x8xf32>
    "tpu.trace_stop"() : () -> ()
    %c0_21 = arith.constant 0 : index
    %c0_22 = arith.constant 0 : index
    %c0_23 = arith.constant 0 : index
    %29 = vector.load %arg6[%c0_21, %c0_22, %c0_23] : memref<4x1x8xf32, #tpu.memory_space<vmem>>, vector<4x1x8xf32>
    %30 = vector.broadcast %29 : vector<4x1x8xf32> to vector<4x8x8xf32>
    %31 = arith.addf %28, %30 : vector<4x8x8xf32>
    %c0_24 = arith.constant 0 : index
    %c0_25 = arith.constant 0 : index
    %c0_26 = arith.constant 0 : index
    %32 = vector.load %arg7[%c0_24, %c0_25, %c0_26] : memref<4x32x8xbf16, #tpu.memory_space<vmem>>, vector<4x32x8xbf16>
    "tpu.trace_start"() <{level = 10 : i32, message = "nsh,nhd->nsd"}> : () -> ()
    %cst_27 = arith.constant dense<0.000000e+00> : vector<4x8x8xf32>
    %33 = tpu.matmul %26, %32, %cst_27 {dimension_numbers = #tpu.dot_dimension_numbers<[2], [1], [1], [2], [0, 0, 0, 1, 1, 2], [0], [0]>} : vector<4x8x32xbf16>, vector<4x32x8xbf16>, vector<4x8x8xf32> -> vector<4x8x8xf32>
    "tpu.trace_stop"() : () -> ()
    %c0_28 = arith.constant 0 : index
    %c0_29 = arith.constant 0 : index
    %c0_30 = arith.constant 0 : index
    %34 = vector.load %arg8[%c0_28, %c0_29, %c0_30] : memref<4x1x8xf32, #tpu.memory_space<vmem>>, vector<4x1x8xf32>
    %35 = vector.broadcast %34 : vector<4x1x8xf32> to vector<4x8x8xf32>
    %36 = arith.addf %33, %35 : vector<4x8x8xf32>
    %c0_31 = arith.constant 0 : index
    %c0_32 = arith.constant 0 : index
    %c0_33 = arith.constant 0 : index
    %37 = vector.load %arg9[%c0_31, %c0_32, %c0_33] : memref<4x32x8xbf16, #tpu.memory_space<vmem>>, vector<4x32x8xbf16>
    "tpu.trace_start"() <{level = 10 : i32, message = "nsh,nhd->nsd"}> : () -> ()
    %cst_34 = arith.constant dense<0.000000e+00> : vector<4x8x8xf32>
    %38 = tpu.matmul %26, %37, %cst_34 {dimension_numbers = #tpu.dot_dimension_numbers<[2], [1], [1], [2], [0, 0, 0, 1, 1, 2], [0], [0]>} : vector<4x8x32xbf16>, vector<4x32x8xbf16>, vector<4x8x8xf32> -> vector<4x8x8xf32>
    "tpu.trace_stop"() : () -> ()
    %c0_35 = arith.constant 0 : index
    %c0_36 = arith.constant 0 : index
    %c0_37 = arith.constant 0 : index
    %39 = vector.load %arg10[%c0_35, %c0_36, %c0_37] : memref<4x1x8xf32, #tpu.memory_space<vmem>>, vector<4x1x8xf32>
    %40 = vector.broadcast %39 : vector<4x1x8xf32> to vector<4x8x8xf32>
    %41 = arith.addf %38, %40 : vector<4x8x8xf32>
    %cst_38 = arith.constant 0.353553385 : f32
    %42 = vector.broadcast %cst_38 : f32 to vector<4x8x8xf32>
    %43 = arith.mulf %31, %42 : vector<4x8x8xf32>
    %44 = arith.truncf %43 : vector<4x8x8xf32> to vector<4x8x8xbf16>
    %45 = arith.truncf %36 : vector<4x8x8xf32> to vector<4x8x8xbf16>
    "tpu.trace_start"() <{level = 10 : i32, message = "nqd,nkd->nqk"}> : () -> ()
    %cst_39 = arith.constant dense<0.000000e+00> : vector<4x8x8xf32>
    %46 = tpu.matmul %44, %45, %cst_39 {dimension_numbers = #tpu.dot_dimension_numbers<[2], [2], [1], [1], [0, 0, 0, 1, 1, 1], [0], [0]>} : vector<4x8x8xbf16>, vector<4x8x8xbf16>, vector<4x8x8xf32> -> vector<4x8x8xf32>
    "tpu.trace_stop"() : () -> ()
    %47 = vector.broadcast %20 : vector<1x1x8xf32> to vector<4x8x8xf32>
    %48 = arith.addf %46, %47 : vector<4x8x8xf32>
    %cst_40 = arith.constant dense<0xFF800000> : vector<4x8xf32>
    %49 = vector.multi_reduction <maximumf>, %48, %cst_40 [2] : vector<4x8x8xf32> to vector<4x8xf32>
    %50 = vector.shape_cast %49 : vector<4x8xf32> to vector<4x8x1xf32>
    %51 = vector.broadcast %50 : vector<4x8x1xf32> to vector<4x8x8xf32>
    %52 = arith.subf %48, %51 : vector<4x8x8xf32>
    %53 = math.exp %52 : vector<4x8x8xf32>
    %cst_41 = arith.constant dense<0.000000e+00> : vector<4x8xf32>
    %54 = vector.multi_reduction <add>, %53, %cst_41 [2] : vector<4x8x8xf32> to vector<4x8xf32>
    %55 = vector.shape_cast %54 : vector<4x8xf32> to vector<4x8x1xf32>
    %56 = tpu.reciprocal %55 {approx = true} : vector<4x8x1xf32> -> vector<4x8x1xf32>
    %57 = vector.broadcast %56 : vector<4x8x1xf32> to vector<4x8x8xf32>
    %58 = arith.mulf %53, %57 : vector<4x8x8xf32>
    %59 = arith.truncf %58 : vector<4x8x8xf32> to vector<4x8x8xbf16>
    %60 = arith.truncf %41 : vector<4x8x8xf32> to vector<4x8x8xbf16>
    "tpu.trace_start"() <{level = 10 : i32, message = "nqk,nkd->nqd"}> : () -> ()
    %cst_42 = arith.constant dense<0.000000e+00> : vector<4x8x8xf32>
    %61 = tpu.matmul %59, %60, %cst_42 {dimension_numbers = #tpu.dot_dimension_numbers<[2], [1], [1], [2], [0, 0, 0, 1, 1, 2], [0], [0]>} : vector<4x8x8xbf16>, vector<4x8x8xbf16>, vector<4x8x8xf32> -> vector<4x8x8xf32>
    "tpu.trace_stop"() : () -> ()
    %62 = arith.truncf %61 : vector<4x8x8xf32> to vector<4x8x8xbf16>
    %c0_43 = arith.constant 0 : index
    %c0_44 = arith.constant 0 : index
    %c0_45 = arith.constant 0 : index
    %63 = vector.load %arg11[%c0_43, %c0_44, %c0_45] : memref<4x8x32xbf16, #tpu.memory_space<vmem>>, vector<4x8x32xbf16>
    "tpu.trace_start"() <{level = 10 : i32, message = "nsd,ndh->nsh"}> : () -> ()
    %cst_46 = arith.constant dense<0.000000e+00> : vector<4x8x32xf32>
    %64 = tpu.matmul %62, %63, %cst_46 {dimension_numbers = #tpu.dot_dimension_numbers<[2], [1], [1], [2], [0, 0, 0, 1, 1, 2], [0], [0]>} : vector<4x8x8xbf16>, vector<4x8x32xbf16>, vector<4x8x32xf32> -> vector<4x8x32xf32>
    "tpu.trace_stop"() : () -> ()
    %cst_47 = arith.constant dense<0.000000e+00> : vector<8x32xf32>
    %65 = vector.multi_reduction <add>, %64, %cst_47 [0] : vector<4x8x32xf32> to vector<8x32xf32>
    %c0_48 = arith.constant 0 : index
    %c0_49 = arith.constant 0 : index
    %66 = vector.load %arg12[%c0_48, %c0_49] : memref<1x32xf32, #tpu.memory_space<vmem>>, vector<1x32xf32>
    %67 = vector.broadcast %66 : vector<1x32xf32> to vector<8x32xf32>
    %68 = arith.addf %65, %67 : vector<8x32xf32>
    %69 = arith.addf %12, %68 : vector<8x32xf32>
    %cst_50 = arith.constant dense<0.000000e+00> : vector<8xf32>
    %70 = vector.multi_reduction <add>, %69, %cst_50 [1] : vector<8x32xf32> to vector<8xf32>
    %71 = vector.shape_cast %70 : vector<8xf32> to vector<8x1xf32>
    %cst_51 = arith.constant 3.200000e+01 : f32
    %72 = vector.broadcast %cst_51 : f32 to vector<8x1xf32>
    %73 = arith.divf %71, %72 : vector<8x1xf32>
    %74 = vector.broadcast %73 : vector<8x1xf32> to vector<8x32xf32>
    %75 = arith.subf %69, %74 : vector<8x32xf32>
    %76 = arith.mulf %75, %75 : vector<8x32xf32>
    %cst_52 = arith.constant dense<0.000000e+00> : vector<8xf32>
    %77 = vector.multi_reduction <add>, %76, %cst_52 [1] : vector<8x32xf32> to vector<8xf32>
    %78 = vector.shape_cast %77 : vector<8xf32> to vector<8x1xf32>
    %cst_53 = arith.constant 3.200000e+01 : f32
    %79 = vector.broadcast %cst_53 : f32 to vector<8x1xf32>
    %80 = arith.divf %78, %79 : vector<8x1xf32>
    %81 = vector.broadcast %73 : vector<8x1xf32> to vector<8x32xf32>
    %82 = arith.subf %69, %81 : vector<8x32xf32>
    %cst_54 = arith.constant 9.99999974E-6 : f32
    %83 = vector.broadcast %cst_54 : f32 to vector<8x1xf32>
    %84 = arith.addf %80, %83 : vector<8x1xf32>
    %85 = math.rsqrt %84 : vector<8x1xf32>
    %86 = vector.broadcast %85 : vector<8x1xf32> to vector<8x32xf32>
    %87 = arith.mulf %82, %86 : vector<8x32xf32>
    %88 = vector.broadcast %21 : vector<1x32xf32> to vector<8x32xf32>
    %89 = arith.mulf %87, %88 : vector<8x32xf32>
    %90 = vector.broadcast %22 : vector<1x32xf32> to vector<8x32xf32>
    %91 = arith.addf %89, %90 : vector<8x32xf32>
    %92 = arith.truncf %91 : vector<8x32xf32> to vector<8x32xbf16>
    %c0_55 = arith.constant 0 : index
    %c0_56 = arith.constant 0 : index
    %93 = vector.load %arg15[%c0_55, %c0_56] : memref<32x64xbf16, #tpu.memory_space<vmem>>, vector<32x64xbf16>
    %cst_57 = arith.constant dense<0.000000e+00> : vector<8x64xf32>
    %94 = tpu.matmul %92, %93, %cst_57 {dimension_numbers = #tpu.dot_dimension_numbers<[1], [0], [0], [1], [0, 0, 1, 1], [], []>} : vector<8x32xbf16>, vector<32x64xbf16>, vector<8x64xf32> -> vector<8x64xf32>
    %c0_58 = arith.constant 0 : index
    %c0_59 = arith.constant 0 : index
    %95 = vector.load %arg16[%c0_58, %c0_59] : memref<1x64xf32, #tpu.memory_space<vmem>>, vector<1x64xf32>
    %96 = vector.broadcast %95 : vector<1x64xf32> to vector<8x64xf32>
    %97 = arith.addf %94, %96 : vector<8x64xf32>
    %cst_60 = arith.constant 0.000000e+00 : f32
    %98 = vector.broadcast %cst_60 : f32 to vector<8x64xf32>
    %99 = arith.maximumf %97, %98 : vector<8x64xf32>
    %100 = arith.truncf %99 : vector<8x64xf32> to vector<8x64xbf16>
    %c0_61 = arith.constant 0 : index
    %c0_62 = arith.constant 0 : index
    %101 = vector.load %arg17[%c0_61, %c0_62] : memref<64x32xbf16, #tpu.memory_space<vmem>>, vector<64x32xbf16>
    %cst_63 = arith.constant dense<0.000000e+00> : vector<8x32xf32>
    %102 = tpu.matmul %100, %101, %cst_63 {dimension_numbers = #tpu.dot_dimension_numbers<[1], [0], [0], [1], [0, 0, 1, 1], [], []>} : vector<8x64xbf16>, vector<64x32xbf16>, vector<8x32xf32> -> vector<8x32xf32>
    %c0_64 = arith.constant 0 : index
    %c0_65 = arith.constant 0 : index
    %103 = vector.load %arg18[%c0_64, %c0_65] : memref<1x32xf32, #tpu.memory_space<vmem>>, vector<1x32xf32>
    %104 = vector.broadcast %103 : vector<1x32xf32> to vector<8x32xf32>
    %105 = arith.addf %102, %104 : vector<8x32xf32>
    %106 = arith.addf %91, %105 : vector<8x32xf32>
    %cst_66 = arith.constant dense<0.000000e+00> : vector<8xf32>
    %107 = vector.multi_reduction <add>, %106, %cst_66 [1] : vector<8x32xf32> to vector<8xf32>
    %108 = vector.shape_cast %107 : vector<8xf32> to vector<8x1xf32>
    %cst_67 = arith.constant 3.200000e+01 : f32
    %109 = vector.broadcast %cst_67 : f32 to vector<8x1xf32>
    %110 = arith.divf %108, %109 : vector<8x1xf32>
    %111 = vector.broadcast %110 : vector<8x1xf32> to vector<8x32xf32>
    %112 = arith.subf %106, %111 : vector<8x32xf32>
    %113 = arith.mulf %112, %112 : vector<8x32xf32>
    %cst_68 = arith.constant dense<0.000000e+00> : vector<8xf32>
    %114 = vector.multi_reduction <add>, %113, %cst_68 [1] : vector<8x32xf32> to vector<8xf32>
    %115 = vector.shape_cast %114 : vector<8xf32> to vector<8x1xf32>
    %cst_69 = arith.constant 3.200000e+01 : f32
    %116 = vector.broadcast %cst_69 : f32 to vector<8x1xf32>
    %117 = arith.divf %115, %116 : vector<8x1xf32>
    %118 = vector.broadcast %110 : vector<8x1xf32> to vector<8x32xf32>
    %119 = arith.subf %106, %118 : vector<8x32xf32>
    %cst_70 = arith.constant 9.99999974E-6 : f32
    %120 = vector.broadcast %cst_70 : f32 to vector<8x1xf32>
    %121 = arith.addf %117, %120 : vector<8x1xf32>
    %122 = math.rsqrt %121 : vector<8x1xf32>
    %123 = vector.broadcast %122 : vector<8x1xf32> to vector<8x32xf32>
    %124 = arith.mulf %119, %123 : vector<8x32xf32>
    %125 = vector.broadcast %21 : vector<1x32xf32> to vector<8x32xf32>
    %126 = arith.mulf %124, %125 : vector<8x32xf32>
    %127 = vector.broadcast %22 : vector<1x32xf32> to vector<8x32xf32>
    %128 = arith.addf %126, %127 : vector<8x32xf32>
    %c0_71 = arith.constant 0 : index
    %c0_72 = arith.constant 0 : index
    %129 = vector.load %arg27[%c0_71, %c0_72] : memref<1x32xf32, #tpu.memory_space<vmem>>, vector<1x32xf32>
    %c0_73 = arith.constant 0 : index
    %c0_74 = arith.constant 0 : index
    %130 = vector.load %arg28[%c0_73, %c0_74] : memref<1x32xf32, #tpu.memory_space<vmem>>, vector<1x32xf32>
    %131 = arith.truncf %128 : vector<8x32xf32> to vector<8x32xbf16>
    %132 = vector.shape_cast %131 : vector<8x32xbf16> to vector<1x8x32xbf16>
    %133 = vector.shape_cast %132 : vector<1x8x32xbf16> to vector<1x8x32xbf16>
    %134 = vector.broadcast %133 : vector<1x8x32xbf16> to vector<4x8x32xbf16>
    %c0_75 = arith.constant 0 : index
    %c0_76 = arith.constant 0 : index
    %c0_77 = arith.constant 0 : index
    %135 = vector.load %arg19[%c0_75, %c0_76, %c0_77] : memref<4x32x8xbf16, #tpu.memory_space<vmem>>, vector<4x32x8xbf16>
    "tpu.trace_start"() <{level = 10 : i32, message = "nsh,nhd->nsd"}> : () -> ()
    %cst_78 = arith.constant dense<0.000000e+00> : vector<4x8x8xf32>
    %136 = tpu.matmul %134, %135, %cst_78 {dimension_numbers = #tpu.dot_dimension_numbers<[2], [1], [1], [2], [0, 0, 0, 1, 1, 2], [0], [0]>} : vector<4x8x32xbf16>, vector<4x32x8xbf16>, vector<4x8x8xf32> -> vector<4x8x8xf32>
    "tpu.trace_stop"() : () -> ()
    %c0_79 = arith.constant 0 : index
    %c0_80 = arith.constant 0 : index
    %c0_81 = arith.constant 0 : index
    %137 = vector.load %arg20[%c0_79, %c0_80, %c0_81] : memref<4x1x8xf32, #tpu.memory_space<vmem>>, vector<4x1x8xf32>
    %138 = vector.broadcast %137 : vector<4x1x8xf32> to vector<4x8x8xf32>
    %139 = arith.addf %136, %138 : vector<4x8x8xf32>
    %c0_82 = arith.constant 0 : index
    %c0_83 = arith.constant 0 : index
    %c0_84 = arith.constant 0 : index
    %140 = vector.load %arg21[%c0_82, %c0_83, %c0_84] : memref<4x32x8xbf16, #tpu.memory_space<vmem>>, vector<4x32x8xbf16>
    "tpu.trace_start"() <{level = 10 : i32, message = "nsh,nhd->nsd"}> : () -> ()
    %cst_85 = arith.constant dense<0.000000e+00> : vector<4x8x8xf32>
    %141 = tpu.matmul %134, %140, %cst_85 {dimension_numbers = #tpu.dot_dimension_numbers<[2], [1], [1], [2], [0, 0, 0, 1, 1, 2], [0], [0]>} : vector<4x8x32xbf16>, vector<4x32x8xbf16>, vector<4x8x8xf32> -> vector<4x8x8xf32>
    "tpu.trace_stop"() : () -> ()
    %c0_86 = arith.constant 0 : index
    %c0_87 = arith.constant 0 : index
    %c0_88 = arith.constant 0 : index
    %142 = vector.load %arg22[%c0_86, %c0_87, %c0_88] : memref<4x1x8xf32, #tpu.memory_space<vmem>>, vector<4x1x8xf32>
    %143 = vector.broadcast %142 : vector<4x1x8xf32> to vector<4x8x8xf32>
    %144 = arith.addf %141, %143 : vector<4x8x8xf32>
    %c0_89 = arith.constant 0 : index
    %c0_90 = arith.constant 0 : index
    %c0_91 = arith.constant 0 : index
    %145 = vector.load %arg23[%c0_89, %c0_90, %c0_91] : memref<4x32x8xbf16, #tpu.memory_space<vmem>>, vector<4x32x8xbf16>
    "tpu.trace_start"() <{level = 10 : i32, message = "nsh,nhd->nsd"}> : () -> ()
    %cst_92 = arith.constant dense<0.000000e+00> : vector<4x8x8xf32>
    %146 = tpu.matmul %134, %145, %cst_92 {dimension_numbers = #tpu.dot_dimension_numbers<[2], [1], [1], [2], [0, 0, 0, 1, 1, 2], [0], [0]>} : vector<4x8x32xbf16>, vector<4x32x8xbf16>, vector<4x8x8xf32> -> vector<4x8x8xf32>
    "tpu.trace_stop"() : () -> ()
    %c0_93 = arith.constant 0 : index
    %c0_94 = arith.constant 0 : index
    %c0_95 = arith.constant 0 : index
    %147 = vector.load %arg24[%c0_93, %c0_94, %c0_95] : memref<4x1x8xf32, #tpu.memory_space<vmem>>, vector<4x1x8xf32>
    %148 = vector.broadcast %147 : vector<4x1x8xf32> to vector<4x8x8xf32>
    %149 = arith.addf %146, %148 : vector<4x8x8xf32>
    %cst_96 = arith.constant 0.353553385 : f32
    %150 = vector.broadcast %cst_96 : f32 to vector<4x8x8xf32>
    %151 = arith.mulf %139, %150 : vector<4x8x8xf32>
    %152 = arith.truncf %151 : vector<4x8x8xf32> to vector<4x8x8xbf16>
    %153 = arith.truncf %144 : vector<4x8x8xf32> to vector<4x8x8xbf16>
    "tpu.trace_start"() <{level = 10 : i32, message = "nqd,nkd->nqk"}> : () -> ()
    %cst_97 = arith.constant dense<0.000000e+00> : vector<4x8x8xf32>
    %154 = tpu.matmul %152, %153, %cst_97 {dimension_numbers = #tpu.dot_dimension_numbers<[2], [2], [1], [1], [0, 0, 0, 1, 1, 1], [0], [0]>} : vector<4x8x8xbf16>, vector<4x8x8xbf16>, vector<4x8x8xf32> -> vector<4x8x8xf32>
    "tpu.trace_stop"() : () -> ()
    %155 = vector.broadcast %20 : vector<1x1x8xf32> to vector<4x8x8xf32>
    %156 = arith.addf %154, %155 : vector<4x8x8xf32>
    %cst_98 = arith.constant dense<0xFF800000> : vector<4x8xf32>
    %157 = vector.multi_reduction <maximumf>, %156, %cst_98 [2] : vector<4x8x8xf32> to vector<4x8xf32>
    %158 = vector.shape_cast %157 : vector<4x8xf32> to vector<4x8x1xf32>
    %159 = vector.broadcast %158 : vector<4x8x1xf32> to vector<4x8x8xf32>
    %160 = arith.subf %156, %159 : vector<4x8x8xf32>
    %161 = math.exp %160 : vector<4x8x8xf32>
    %cst_99 = arith.constant dense<0.000000e+00> : vector<4x8xf32>
    %162 = vector.multi_reduction <add>, %161, %cst_99 [2] : vector<4x8x8xf32> to vector<4x8xf32>
    %163 = vector.shape_cast %162 : vector<4x8xf32> to vector<4x8x1xf32>
    %164 = tpu.reciprocal %163 {approx = true} : vector<4x8x1xf32> -> vector<4x8x1xf32>
    %165 = vector.broadcast %164 : vector<4x8x1xf32> to vector<4x8x8xf32>
    %166 = arith.mulf %161, %165 : vector<4x8x8xf32>
    %167 = arith.truncf %166 : vector<4x8x8xf32> to vector<4x8x8xbf16>
    %168 = arith.truncf %149 : vector<4x8x8xf32> to vector<4x8x8xbf16>
    "tpu.trace_start"() <{level = 10 : i32, message = "nqk,nkd->nqd"}> : () -> ()
    %cst_100 = arith.constant dense<0.000000e+00> : vector<4x8x8xf32>
    %169 = tpu.matmul %167, %168, %cst_100 {dimension_numbers = #tpu.dot_dimension_numbers<[2], [1], [1], [2], [0, 0, 0, 1, 1, 2], [0], [0]>} : vector<4x8x8xbf16>, vector<4x8x8xbf16>, vector<4x8x8xf32> -> vector<4x8x8xf32>
    "tpu.trace_stop"() : () -> ()
    %170 = arith.truncf %169 : vector<4x8x8xf32> to vector<4x8x8xbf16>
    %c0_101 = arith.constant 0 : index
    %c0_102 = arith.constant 0 : index
    %c0_103 = arith.constant 0 : index
    %171 = vector.load %arg25[%c0_101, %c0_102, %c0_103] : memref<4x8x32xbf16, #tpu.memory_space<vmem>>, vector<4x8x32xbf16>
    "tpu.trace_start"() <{level = 10 : i32, message = "nsd,ndh->nsh"}> : () -> ()
    %cst_104 = arith.constant dense<0.000000e+00> : vector<4x8x32xf32>
    %172 = tpu.matmul %170, %171, %cst_104 {dimension_numbers = #tpu.dot_dimension_numbers<[2], [1], [1], [2], [0, 0, 0, 1, 1, 2], [0], [0]>} : vector<4x8x8xbf16>, vector<4x8x32xbf16>, vector<4x8x32xf32> -> vector<4x8x32xf32>
    "tpu.trace_stop"() : () -> ()
    %cst_105 = arith.constant dense<0.000000e+00> : vector<8x32xf32>
    %173 = vector.multi_reduction <add>, %172, %cst_105 [0] : vector<4x8x32xf32> to vector<8x32xf32>
    %c0_106 = arith.constant 0 : index
    %c0_107 = arith.constant 0 : index
    %174 = vector.load %arg26[%c0_106, %c0_107] : memref<1x32xf32, #tpu.memory_space<vmem>>, vector<1x32xf32>
    %175 = vector.broadcast %174 : vector<1x32xf32> to vector<8x32xf32>
    %176 = arith.addf %173, %175 : vector<8x32xf32>
    %177 = arith.addf %128, %176 : vector<8x32xf32>
    %cst_108 = arith.constant dense<0.000000e+00> : vector<8xf32>
    %178 = vector.multi_reduction <add>, %177, %cst_108 [1] : vector<8x32xf32> to vector<8xf32>
    %179 = vector.shape_cast %178 : vector<8xf32> to vector<8x1xf32>
    %cst_109 = arith.constant 3.200000e+01 : f32
    %180 = vector.broadcast %cst_109 : f32 to vector<8x1xf32>
    %181 = arith.divf %179, %180 : vector<8x1xf32>
    %182 = vector.broadcast %181 : vector<8x1xf32> to vector<8x32xf32>
    %183 = arith.subf %177, %182 : vector<8x32xf32>
    %184 = arith.mulf %183, %183 : vector<8x32xf32>
    %cst_110 = arith.constant dense<0.000000e+00> : vector<8xf32>
    %185 = vector.multi_reduction <add>, %184, %cst_110 [1] : vector<8x32xf32> to vector<8xf32>
    %186 = vector.shape_cast %185 : vector<8xf32> to vector<8x1xf32>
    %cst_111 = arith.constant 3.200000e+01 : f32
    %187 = vector.broadcast %cst_111 : f32 to vector<8x1xf32>
    %188 = arith.divf %186, %187 : vector<8x1xf32>
    %189 = vector.broadcast %181 : vector<8x1xf32> to vector<8x32xf32>
    %190 = arith.subf %177, %189 : vector<8x32xf32>
    %cst_112 = arith.constant 9.99999974E-6 : f32
    %191 = vector.broadcast %cst_112 : f32 to vector<8x1xf32>
    %192 = arith.addf %188, %191 : vector<8x1xf32>
    %193 = math.rsqrt %192 : vector<8x1xf32>
    %194 = vector.broadcast %193 : vector<8x1xf32> to vector<8x32xf32>
    %195 = arith.mulf %190, %194 : vector<8x32xf32>
    %196 = vector.broadcast %129 : vector<1x32xf32> to vector<8x32xf32>
    %197 = arith.mulf %195, %196 : vector<8x32xf32>
    %198 = vector.broadcast %130 : vector<1x32xf32> to vector<8x32xf32>
    %199 = arith.addf %197, %198 : vector<8x32xf32>
    %200 = arith.truncf %199 : vector<8x32xf32> to vector<8x32xbf16>
    %c0_113 = arith.constant 0 : index
    %c0_114 = arith.constant 0 : index
    %201 = vector.load %arg29[%c0_113, %c0_114] : memref<32x64xbf16, #tpu.memory_space<vmem>>, vector<32x64xbf16>
    %cst_115 = arith.constant dense<0.000000e+00> : vector<8x64xf32>
    %202 = tpu.matmul %200, %201, %cst_115 {dimension_numbers = #tpu.dot_dimension_numbers<[1], [0], [0], [1], [0, 0, 1, 1], [], []>} : vector<8x32xbf16>, vector<32x64xbf16>, vector<8x64xf32> -> vector<8x64xf32>
    %c0_116 = arith.constant 0 : index
    %c0_117 = arith.constant 0 : index
    %203 = vector.load %arg30[%c0_116, %c0_117] : memref<1x64xf32, #tpu.memory_space<vmem>>, vector<1x64xf32>
    %204 = vector.broadcast %203 : vector<1x64xf32> to vector<8x64xf32>
    %205 = arith.addf %202, %204 : vector<8x64xf32>
    %cst_118 = arith.constant 0.000000e+00 : f32
    %206 = vector.broadcast %cst_118 : f32 to vector<8x64xf32>
    %207 = arith.maximumf %205, %206 : vector<8x64xf32>
    %208 = arith.truncf %207 : vector<8x64xf32> to vector<8x64xbf16>
    %c0_119 = arith.constant 0 : index
    %c0_120 = arith.constant 0 : index
    %209 = vector.load %arg31[%c0_119, %c0_120] : memref<64x32xbf16, #tpu.memory_space<vmem>>, vector<64x32xbf16>
    %cst_121 = arith.constant dense<0.000000e+00> : vector<8x32xf32>
    %210 = tpu.matmul %208, %209, %cst_121 {dimension_numbers = #tpu.dot_dimension_numbers<[1], [0], [0], [1], [0, 0, 1, 1], [], []>} : vector<8x64xbf16>, vector<64x32xbf16>, vector<8x32xf32> -> vector<8x32xf32>
    %c0_122 = arith.constant 0 : index
    %c0_123 = arith.constant 0 : index
    %211 = vector.load %arg32[%c0_122, %c0_123] : memref<1x32xf32, #tpu.memory_space<vmem>>, vector<1x32xf32>
    %212 = vector.broadcast %211 : vector<1x32xf32> to vector<8x32xf32>
    %213 = arith.addf %210, %212 : vector<8x32xf32>
    %214 = arith.addf %199, %213 : vector<8x32xf32>
    %cst_124 = arith.constant dense<0.000000e+00> : vector<8xf32>
    %215 = vector.multi_reduction <add>, %214, %cst_124 [1] : vector<8x32xf32> to vector<8xf32>
    %216 = vector.shape_cast %215 : vector<8xf32> to vector<8x1xf32>
    %cst_125 = arith.constant 3.200000e+01 : f32
    %217 = vector.broadcast %cst_125 : f32 to vector<8x1xf32>
    %218 = arith.divf %216, %217 : vector<8x1xf32>
    %219 = vector.broadcast %218 : vector<8x1xf32> to vector<8x32xf32>
    %220 = arith.subf %214, %219 : vector<8x32xf32>
    %221 = arith.mulf %220, %220 : vector<8x32xf32>
    %cst_126 = arith.constant dense<0.000000e+00> : vector<8xf32>
    %222 = vector.multi_reduction <add>, %221, %cst_126 [1] : vector<8x32xf32> to vector<8xf32>
    %223 = vector.shape_cast %222 : vector<8xf32> to vector<8x1xf32>
    %cst_127 = arith.constant 3.200000e+01 : f32
    %224 = vector.broadcast %cst_127 : f32 to vector<8x1xf32>
    %225 = arith.divf %223, %224 : vector<8x1xf32>
    %226 = vector.broadcast %218 : vector<8x1xf32> to vector<8x32xf32>
    %227 = arith.subf %214, %226 : vector<8x32xf32>
    %cst_128 = arith.constant 9.99999974E-6 : f32
    %228 = vector.broadcast %cst_128 : f32 to vector<8x1xf32>
    %229 = arith.addf %225, %228 : vector<8x1xf32>
    %230 = math.rsqrt %229 : vector<8x1xf32>
    %231 = vector.broadcast %230 : vector<8x1xf32> to vector<8x32xf32>
    %232 = arith.mulf %227, %231 : vector<8x32xf32>
    %233 = vector.broadcast %129 : vector<1x32xf32> to vector<8x32xf32>
    %234 = arith.mulf %232, %233 : vector<8x32xf32>
    %235 = vector.broadcast %130 : vector<1x32xf32> to vector<8x32xf32>
    %236 = arith.addf %234, %235 : vector<8x32xf32>
    %c0_129 = arith.constant 0 : index
    %c0_130 = arith.constant 0 : index
    %c0_131 = arith.constant 0 : index
    %237 = vector.load %arg33[%c0_129, %c0_130, %c0_131] : memref<1x8x32xf32, #tpu.memory_space<vmem>>, vector<1x8x32xf32>
    %238 = vector.shape_cast %237 : vector<1x8x32xf32> to vector<8x32xf32>
    %239 = vector.shape_cast %236 : vector<8x32xf32> to vector<1x8x32xf32>
    tpu.vector_store %arg33[%c0_129, %c0_130, %c0_131], %239 {strides = array<i32>} : memref<1x8x32xf32, #tpu.memory_space<vmem>>, vector<1x8x32xf32>,
    return
  }
  func.func @transform_0(%arg0: i32) -> (i32, i32, i32) {
    %c0_i32 = arith.constant 0 : i32
    %c0_i32_0 = arith.constant 0 : i32
    %c0_i32_1 = arith.constant 0 : i32
    return %arg0, %c0_i32, %c0_i32_0 : i32, i32, i32
  }
  func.func @transform_1(%arg0: i32) -> (i32, i32, i32) {
    %c0_i32 = arith.constant 0 : i32
    %c0_i32_0 = arith.constant 0 : i32
    %c0_i32_1 = arith.constant 0 : i32
    return %arg0, %c0_i32, %c0_i32_0 : i32, i32, i32
  }
  func.func @transform_2(%arg0: i32) -> (i32, i32) {
    %c0_i32 = arith.constant 0 : i32
    %c0_i32_0 = arith.constant 0 : i32
    %c0_i32_1 = arith.constant 0 : i32
    return %c0_i32, %c0_i32_0 : i32, i32
  }
  func.func @transform_3(%arg0: i32) -> (i32, i32) {
    %c0_i32 = arith.constant 0 : i32
    %c0_i32_0 = arith.constant 0 : i32
    %c0_i32_1 = arith.constant 0 : i32
    return %c0_i32, %c0_i32_0 : i32, i32
  }
  func.func @transform_4(%arg0: i32) -> (i32, i32, i32) {
    %c0_i32 = arith.constant 0 : i32
    %c0_i32_0 = arith.constant 0 : i32
    %c0_i32_1 = arith.constant 0 : i32
    %c0_i32_2 = arith.constant 0 : i32
    return %c0_i32, %c0_i32_0, %c0_i32_1 : i32, i32, i32
  }
  func.func @transform_5(%arg0: i32) -> (i32, i32, i32) {
    %c0_i32 = arith.constant 0 : i32
    %c0_i32_0 = arith.constant 0 : i32
    %c0_i32_1 = arith.constant 0 : i32
    %c0_i32_2 = arith.constant 0 : i32
    return %c0_i32, %c0_i32_0, %c0_i32_1 : i32, i32, i32
  }
  func.func @transform_6(%arg0: i32) -> (i32, i32, i32) {
    %c0_i32 = arith.constant 0 : i32
    %c0_i32_0 = arith.constant 0 : i32
    %c0_i32_1 = arith.constant 0 : i32
    %c0_i32_2 = arith.constant 0 : i32
    return %c0_i32, %c0_i32_0, %c0_i32_1 : i32, i32, i32
  }
  func.func @transform_7(%arg0: i32) -> (i32, i32, i32) {
    %c0_i32 = arith.constant 0 : i32
    %c0_i32_0 = arith.constant 0 : i32
    %c0_i32_1 = arith.constant 0 : i32
    %c0_i32_2 = arith.constant 0 : i32
    return %c0_i32, %c0_i32_0, %c0_i32_1 : i32, i32, i32
  }
  func.func @transform_8(%arg0: i32) -> (i32, i32, i32) {
    %c0_i32 = arith.constant 0 : i32
    %c0_i32_0 = arith.constant 0 : i32
    %c0_i32_1 = arith.constant 0 : i32
    %c0_i32_2 = arith.constant 0 : i32
    return %c0_i32, %c0_i32_0, %c0_i32_1 : i32, i32, i32
  }
  func.func @transform_9(%arg0: i32) -> (i32, i32, i32) {
    %c0_i32 = arith.constant 0 : i32
    %c0_i32_0 = arith.constant 0 : i32
    %c0_i32_1 = arith.constant 0 : i32
    %c0_i32_2 = arith.constant 0 : i32
    return %c0_i32, %c0_i32_0, %c0_i32_1 : i32, i32, i32
  }
  func.func @transform_10(%arg0: i32) -> (i32, i32, i32) {
    %c0_i32 = arith.constant 0 : i32
    %c0_i32_0 = arith.constant 0 : i32
    %c0_i32_1 = arith.constant 0 : i32
    %c0_i32_2 = arith.constant 0 : i32
    return %c0_i32, %c0_i32_0, %c0_i32_1 : i32, i32, i32
  }
  func.func @transform_11(%arg0: i32) -> (i32, i32) {
    %c0_i32 = arith.constant 0 : i32
    %c0_i32_0 = arith.constant 0 : i32
    %c0_i32_1 = arith.constant 0 : i32
    return %c0_i32, %c0_i32_0 : i32, i32
  }
  func.func @transform_12(%arg0: i32) -> (i32, i32) {
    %c0_i32 = arith.constant 0 : i32
    %c0_i32_0 = arith.constant 0 : i32
    %c0_i32_1 = arith.constant 0 : i32
    return %c0_i32, %c0_i32_0 : i32, i32
  }
  func.func @transform_13(%arg0: i32) -> (i32, i32) {
    %c0_i32 = arith.constant 0 : i32
    %c0_i32_0 = arith.constant 0 : i32
    %c0_i32_1 = arith.constant 0 : i32
    return %c0_i32, %c0_i32_0 : i32, i32
  }
  func.func @transform_14(%arg0: i32) -> (i32, i32) {
    %c0_i32 = arith.constant 0 : i32
    %c0_i32_0 = arith.constant 0 : i32
    %c0_i32_1 = arith.constant 0 : i32
    return %c0_i32, %c0_i32_0 : i32, i32
  }
  func.func @transform_15(%arg0: i32) -> (i32, i32) {
    %c0_i32 = arith.constant 0 : i32
    %c0_i32_0 = arith.constant 0 : i32
    %c0_i32_1 = arith.constant 0 : i32
    return %c0_i32, %c0_i32_0 : i32, i32
  }
  func.func @transform_16(%arg0: i32) -> (i32, i32) {
    %c0_i32 = arith.constant 0 : i32
    %c0_i32_0 = arith.constant 0 : i32
    %c0_i32_1 = arith.constant 0 : i32
    return %c0_i32, %c0_i32_0 : i32, i32
  }
  func.func @transform_17(%arg0: i32) -> (i32, i32) {
    %c0_i32 = arith.constant 0 : i32
    %c0_i32_0 = arith.constant 0 : i32
    %c0_i32_1 = arith.constant 0 : i32
    return %c0_i32, %c0_i32_0 : i32, i32
  }
  func.func @transform_18(%arg0: i32) -> (i32, i32, i32) {
    %c0_i32 = arith.constant 0 : i32
    %c0_i32_0 = arith.constant 0 : i32
    %c0_i32_1 = arith.constant 0 : i32
    %c0_i32_2 = arith.constant 0 : i32
    return %c0_i32, %c0_i32_0, %c0_i32_1 : i32, i32, i32
  }
  func.func @transform_19(%arg0: i32) -> (i32, i32, i32) {
    %c0_i32 = arith.constant 0 : i32
    %c0_i32_0 = arith.constant 0 : i32
    %c0_i32_1 = arith.constant 0 : i32
    %c0_i32_2 = arith.constant 0 : i32
    return %c0_i32, %c0_i32_0, %c0_i32_1 : i32, i32, i32
  }
  func.func @transform_20(%arg0: i32) -> (i32, i32, i32) {
    %c0_i32 = arith.constant 0 : i32
    %c0_i32_0 = arith.constant 0 : i32
    %c0_i32_1 = arith.constant 0 : i32
    %c0_i32_2 = arith.constant 0 : i32
    return %c0_i32, %c0_i32_0, %c0_i32_1 : i32, i32, i32
  }
  func.func @transform_21(%arg0: i32) -> (i32, i32, i32) {
    %c0_i32 = arith.constant 0 : i32
    %c0_i32_0 = arith.constant 0 : i32
    %c0_i32_1 = arith.constant 0 : i32
    %c0_i32_2 = arith.constant 0 : i32
    return %c0_i32, %c0_i32_0, %c0_i32_1 : i32, i32, i32
  }
  func.func @transform_22(%arg0: i32) -> (i32, i32, i32) {
    %c0_i32 = arith.constant 0 : i32
    %c0_i32_0 = arith.constant 0 : i32
    %c0_i32_1 = arith.constant 0 : i32
    %c0_i32_2 = arith.constant 0 : i32
    return %c0_i32, %c0_i32_0, %c0_i32_1 : i32, i32, i32
  }
  func.func @transform_23(%arg0: i32) -> (i32, i32, i32) {
    %c0_i32 = arith.constant 0 : i32
    %c0_i32_0 = arith.constant 0 : i32
    %c0_i32_1 = arith.constant 0 : i32
    %c0_i32_2 = arith.constant 0 : i32
    return %c0_i32, %c0_i32_0, %c0_i32_1 : i32, i32, i32
  }
  func.func @transform_24(%arg0: i32) -> (i32, i32, i32) {
    %c0_i32 = arith.constant 0 : i32
    %c0_i32_0 = arith.constant 0 : i32
    %c0_i32_1 = arith.constant 0 : i32
    %c0_i32_2 = arith.constant 0 : i32
    return %c0_i32, %c0_i32_0, %c0_i32_1 : i32, i32, i32
  }
  func.func @transform_25(%arg0: i32) -> (i32, i32) {
    %c0_i32 = arith.constant 0 : i32
    %c0_i32_0 = arith.constant 0 : i32
    %c0_i32_1 = arith.constant 0 : i32
    return %c0_i32, %c0_i32_0 : i32, i32
  }
  func.func @transform_26(%arg0: i32) -> (i32, i32) {
    %c0_i32 = arith.constant 0 : i32
    %c0_i32_0 = arith.constant 0 : i32
    %c0_i32_1 = arith.constant 0 : i32
    return %c0_i32, %c0_i32_0 : i32, i32
  }
  func.func @transform_27(%arg0: i32) -> (i32, i32) {
    %c0_i32 = arith.constant 0 : i32
    %c0_i32_0 = arith.constant 0 : i32
    %c0_i32_1 = arith.constant 0 : i32
    return %c0_i32, %c0_i32_0 : i32, i32
  }
  func.func @transform_28(%arg0: i32) -> (i32, i32) {
    %c0_i32 = arith.constant 0 : i32
    %c0_i32_0 = arith.constant 0 : i32
    %c0_i32_1 = arith.constant 0 : i32
    return %c0_i32, %c0_i32_0 : i32, i32
  }
  func.func @transform_29(%arg0: i32) -> (i32, i32) {
    %c0_i32 = arith.constant 0 : i32
    %c0_i32_0 = arith.constant 0 : i32
    %c0_i32_1 = arith.constant 0 : i32
    return %c0_i32, %c0_i32_0 : i32, i32
  }
  func.func @transform_30(%arg0: i32) -> (i32, i32) {
    %c0_i32 = arith.constant 0 : i32
    %c0_i32_0 = arith.constant 0 : i32
    %c0_i32_1 = arith.constant 0 : i32
    return %c0_i32, %c0_i32_0 : i32, i32
  }
  func.func @transform_31(%arg0: i32) -> (i32, i32) {
    %c0_i32 = arith.constant 0 : i32
    %c0_i32_0 = arith.constant 0 : i32
    %c0_i32_1 = arith.constant 0 : i32
    return %c0_i32, %c0_i32_0 : i32, i32
  }
  func.func @transform_32(%arg0: i32) -> (i32, i32, i32) {
    %c0_i32 = arith.constant 0 : i32
    %c0_i32_0 = arith.constant 0 : i32
    %c0_i32_1 = arith.constant 0 : i32
    return %arg0, %c0_i32, %c0_i32_0 : i32, i32, i32
  }
}

</mosaic_0001>

<llo_original>
// kernel: tpu_custom_call.1
$region0: #{tpu_custom_call.1}
  #allocation0 [shape = 'u32[]', space=smem, size = 0x4, offset = 0x4, fixed_abs, tag = 'smem constant byte address 0x4 - core index']
  #allocation1 [shape = 'u32[144,128]{1,0:T(1,128)}', space=vmem, size = 0x12000, scoped, tag = 'internal scratch']
  %s0 = inlined_call_operand.smem [shape: u32[33], index: -1, kind: input, shape index: {}]
  %s1 = sld [smem:[%s0]]
  %s2 = scalar_lea.smem %s0, 1
  %s3 = sld [smem:[%s2]]
  %s4 = scalar_lea.smem %s0, 2
  %s5 = sld [smem:[%s4]]
  %s6 = scalar_lea.smem %s0, 3
  %s7 = sld [smem:[%s6]]
  %s8 = scalar_lea.smem %s0, 4
  %s9 = sld [smem:[%s8]]
  %s10 = scalar_lea.smem %s0, 5
  %s11 = sld [smem:[%s10]]
  %s12 = scalar_lea.smem %s0, 6
  %s13 = sld [smem:[%s12]]
  %s14 = scalar_lea.smem %s0, 7
  %s15 = sld [smem:[%s14]]
  %s16 = scalar_lea.smem %s0, 8
  %s17 = sld [smem:[%s16]]
  %s18 = scalar_lea.smem %s0, 9
  %s19 = sld [smem:[%s18]]
  %s20 = scalar_lea.smem %s0, 10
  %s21 = sld [smem:[%s20]]
  %s22 = scalar_lea.smem %s0, 11
  %s23 = sld [smem:[%s22]]
  %s24 = scalar_lea.smem %s0, 12
  %s25 = sld [smem:[%s24]]
  %s26 = scalar_lea.smem %s0, 13
  %s27 = sld [smem:[%s26]]
  %s28 = scalar_lea.smem %s0, 14
  %s29 = sld [smem:[%s28]]
  %s30 = scalar_lea.smem %s0, 15
  %s31 = sld [smem:[%s30]]
  %s32 = scalar_lea.smem %s0, 16
  %s33 = sld [smem:[%s32]]
  %s34 = scalar_lea.smem %s0, 17
  %s35 = sld [smem:[%s34]]
  %s36 = scalar_lea.smem %s0, 18
  %s37 = sld [smem:[%s36]]
  %s38 = scalar_lea.smem %s0, 19
  %s39 = sld [smem:[%s38]]
  %s40 = scalar_lea.smem %s0, 20
  %s41 = sld [smem:[%s40]]
  %s42 = scalar_lea.smem %s0, 21
  %s43 = sld [smem:[%s42]]
  %s44 = scalar_lea.smem %s0, 22
  %s45 = sld [smem:[%s44]]
  %s46 = scalar_lea.smem %s0, 23
  %s47 = sld [smem:[%s46]]
  %s48 = scalar_lea.smem %s0, 24
  %s49 = sld [smem:[%s48]]
  %s50 = scalar_lea.smem %s0, 25
  %s51 = sld [smem:[%s50]]
  %s52 = scalar_lea.smem %s0, 26
  %s53 = sld [smem:[%s52]]
  %s54 = scalar_lea.smem %s0, 27
  %s55 = sld [smem:[%s54]]
  %s56 = scalar_lea.smem %s0, 28
  %s57 = sld [smem:[%s56]]
  %s58 = scalar_lea.smem %s0, 29
  %s59 = sld [smem:[%s58]]
  %s60 = scalar_lea.smem %s0, 30
  %s61 = sld [smem:[%s60]]
  %s62 = scalar_lea.smem %s0, 31
  %s63 = sld [smem:[%s62]]
  %s64 = scalar_lea.smem %s0, 32
  %s65 = sld [smem:[%s64]]
  %s66 = sld [smem:[#allocation0]]
  $region161: #{tpu_custom_call.1} parent=0
    _
  %s68 = ssub.s32 1, %s66
  %s69 = scalar_select 0, %s68, %s66
  $region1: #{tpu_custom_call.1} parent=0
    #allocation2 [shape = 'u8[8192]{0}', space=vmem, size = 0x2000, scoped, tag = 'output window, operand 0']
    #allocation3 [shape = 's32[2]{0}', space=sflag, size = 0x8, scoped, tag = 'scoped memory for tpu_custom_call.1']
    %70 = vsyncpa [#allocation3], 0
    %s71 = scalar_lea.sflag [#allocation3], 1
    %72 = vsyncpa %s71, 0
    loop: start=0, step=1, limit=4
    $region2: #{tpu_custom_call.1} parent=1 // loop_pre_header
      _
    $region3: #{tpu_custom_call.1} parent=1 // loop_header
      %s74 = sphi 0, %s78
      %p75 = scmp.ge.s32.totalorder %s74, 4
      %s84 = sphi 0, %s86
      %s87 = sphi 0, %s84
      %s88 = sphi 0, %s87
      %s104 = sphi 0, %s88
      %s110 = sphi 0, %s112
      %s113 = sphi 0, %s110
      %s114 = sphi 0, %s113
      %s130 = sphi 0, %s114
      %s134 = sphi 0, %s134
      %s136 = sphi 0, %s134
      %s137 = sphi 0, %s136
      %s151 = sphi 0, %s137
      %s155 = sphi 0, %s155
      %s157 = sphi 0, %s155
      %s158 = sphi 0, %s157
      %s172 = sphi 0, %s158
      %s176 = sphi 0, %s176
      %s178 = sphi 0, %s176
      %s179 = sphi 0, %s178
      %s193 = sphi 0, %s179
      %s197 = sphi 0, %s197
      %s199 = sphi 0, %s197
      %s200 = sphi 0, %s199
      %s214 = sphi 0, %s200
      %s218 = sphi 0, %s218
      %s220 = sphi 0, %s218
      %s221 = sphi 0, %s220
      %s235 = sphi 0, %s221
      %s239 = sphi 0, %s239
      %s241 = sphi 0, %s239
      %s242 = sphi 0, %s241
      %s256 = sphi 0, %s242
      %s260 = sphi 0, %s260
      %s262 = sphi 0, %s260
      %s263 = sphi 0, %s262
      %s277 = sphi 0, %s263
      %s281 = sphi 0, %s281
      %s283 = sphi 0, %s281
      %s284 = sphi 0, %s283
      %s298 = sphi 0, %s284
      %s302 = sphi 0, %s302
      %s304 = sphi 0, %s302
      %s305 = sphi 0, %s304
      %s319 = sphi 0, %s305
      %s323 = sphi 0, %s323
      %s325 = sphi 0, %s323
      %s326 = sphi 0, %s325
      %s340 = sphi 0, %s326
      %s344 = sphi 0, %s344
      %s346 = sphi 0, %s344
      %s347 = sphi 0, %s346
      %s361 = sphi 0, %s347
      %s365 = sphi 0, %s365
      %s367 = sphi 0, %s365
      %s368 = sphi 0, %s367
      %s382 = sphi 0, %s368
      %s386 = sphi 0, %s386
      %s388 = sphi 0, %s386
      %s389 = sphi 0, %s388
      %s403 = sphi 0, %s389
      %s407 = sphi 0, %s407
      %s409 = sphi 0, %s407
      %s410 = sphi 0, %s409
      %s424 = sphi 0, %s410
      %s428 = sphi 0, %s428
      %s430 = sphi 0, %s428
      %s431 = sphi 0, %s430
      %s445 = sphi 0, %s431
      %s449 = sphi 0, %s449
      %s451 = sphi 0, %s449
      %s452 = sphi 0, %s451
      %s466 = sphi 0, %s452
      %s470 = sphi 0, %s470
      %s472 = sphi 0, %s470
      %s473 = sphi 0, %s472
      %s487 = sphi 0, %s473
      %s491 = sphi 0, %s491
      %s493 = sphi 0, %s491
      %s494 = sphi 0, %s493
      %s508 = sphi 0, %s494
      %s512 = sphi 0, %s512
      %s514 = sphi 0, %s512
      %s515 = sphi 0, %s514
      %s529 = sphi 0, %s515
      %s533 = sphi 0, %s533
      %s535 = sphi 0, %s533
      %s536 = sphi 0, %s535
      %s550 = sphi 0, %s536
      %s554 = sphi 0, %s554
      %s556 = sphi 0, %s554
      %s557 = sphi 0, %s556
      %s571 = sphi 0, %s557
      %s575 = sphi 0, %s575
      %s577 = sphi 0, %s575
      %s578 = sphi 0, %s577
      %s592 = sphi 0, %s578
      %s596 = sphi 0, %s596
      %s598 = sphi 0, %s596
      %s599 = sphi 0, %s598
      %s613 = sphi 0, %s599
      %s617 = sphi 0, %s617
      %s619 = sphi 0, %s617
      %s620 = sphi 0, %s619
      %s634 = sphi 0, %s620
      %s638 = sphi 0, %s638
      %s640 = sphi 0, %s638
      %s641 = sphi 0, %s640
      %s655 = sphi 0, %s641
      %s659 = sphi 0, %s659
      %s661 = sphi 0, %s659
      %s662 = sphi 0, %s661
      %s676 = sphi 0, %s662
      %s680 = sphi 0, %s680
      %s682 = sphi 0, %s680
      %s683 = sphi 0, %s682
      %s697 = sphi 0, %s683
      %s701 = sphi 0, %s701
      %s703 = sphi 0, %s701
      %s704 = sphi 0, %s703
      %s718 = sphi 0, %s704
      %s722 = sphi 0, %s722
      %s724 = sphi 0, %s722
      %s725 = sphi 0, %s724
      %s739 = sphi 0, %s725
      %s743 = sphi 0, %s743
      %s745 = sphi 0, %s743
      %s746 = sphi 0, %s745
      %s760 = sphi 0, %s746
      %s766 = sphi 0, %s768
      %s769 = sphi 0, %s766
      %s770 = sphi 0, %s769
      %s786 = sphi 0, %s770
    $region4: #{tpu_custom_call.1} parent=1 // loop_header_branch
      %77 = sbr.rel (%p75) target = $region8
    $region5: #{tpu_custom_call.1} parent=1 // loop_body
      %s79 = ssub.s32 %s74, 1
      %s80 = ssub.s32 %s74, 2
      %s81 = sadd.s32 %s74, 1
      %s82 = ssub.s32 %s74, %s81
      %p83 = scmp.eq.s32.totalorder %s82, 0
      %s85 = sadd.s32 %s84, 1
      %s86 = scalar_select %p83, %s84, %s85
      %p89 = pneg %p83
      %p90 = scmp.eq.s32.totalorder %s74, 1
      %p91 = por %p89, %p90
      %p92 = scmp.ne.s32.totalorder %s84, %s87
      %p93 = scmp.eq.s32.totalorder %s74, 0
      %p94 = por %p92, %p93
      %p95 = scmp.ne.s32.totalorder %s84, %s87
      %p96 = scmp.eq.s32.totalorder %s79, 1
      %p97 = por %p95, %p96
      %p98 = scmp.ne.s32.totalorder %s87, %s88
      %p99 = scmp.eq.s32.totalorder %s79, 0
      %p100 = por %p98, %p99
      %p101 = scmp.ne.s32.totalorder %s87, %s88
      %p102 = scmp.eq.s32.totalorder %s80, 1
      %p103 = por %p101, %p102
      %p105 = scmp.ne.s32.totalorder %s88, %s104
      %p106 = scmp.eq.s32.totalorder %s80, 0
      %p107 = por %p105, %p106
      %s108 = ssub.s32 %s74, %s81
      %p109 = scmp.eq.s32.totalorder %s108, 0
      %s111 = sadd.s32 %s110, 1
      %s112 = scalar_select %p109, %s110, %s111
      %p115 = pneg %p109
      %p116 = scmp.eq.s32.totalorder %s74, 1
      %p117 = por %p115, %p116
      %p118 = scmp.ne.s32.totalorder %s110, %s113
      %p119 = scmp.eq.s32.totalorder %s74, 0
      %p120 = por %p118, %p119
      %p121 = scmp.ne.s32.totalorder %s110, %s113
      %p122 = scmp.eq.s32.totalorder %s79, 1
      %p123 = por %p121, %p122
      %p124 = scmp.ne.s32.totalorder %s113, %s114
      %p125 = scmp.eq.s32.totalorder %s79, 0
      %p126 = por %p124, %p125
      %p127 = scmp.ne.s32.totalorder %s113, %s114
      %p128 = scmp.eq.s32.totalorder %s80, 1
      %p129 = por %p127, %p128
      %p131 = scmp.ne.s32.totalorder %s114, %s130
      %p132 = scmp.eq.s32.totalorder %s80, 0
      %p133 = por %p131, %p132
      %s135 = sadd.s32 %s134, 1
      %p138 = scmp.eq.s32.totalorder %s74, 1
      %p139 = scmp.ne.s32.totalorder %s134, %s136
      %p140 = scmp.eq.s32.totalorder %s74, 0
      %p141 = por %p139, %p140
      %p142 = scmp.ne.s32.totalorder %s134, %s136
      %p143 = scmp.eq.s32.totalorder %s79, 1
      %p144 = por %p142, %p143
      %p145 = scmp.ne.s32.totalorder %s136, %s137
      %p146 = scmp.eq.s32.totalorder %s79, 0
      %p147 = por %p145, %p146
      %p148 = scmp.ne.s32.totalorder %s136, %s137
      %p149 = scmp.eq.s32.totalorder %s80, 1
      %p150 = por %p148, %p149
      %p152 = scmp.ne.s32.totalorder %s137, %s151
      %p153 = scmp.eq.s32.totalorder %s80, 0
      %p154 = por %p152, %p153
      %s156 = sadd.s32 %s155, 1
      %p159 = scmp.eq.s32.totalorder %s74, 1
      %p160 = scmp.ne.s32.totalorder %s155, %s157
      %p161 = scmp.eq.s32.totalorder %s74, 0
      %p162 = por %p160, %p161
      %p163 = scmp.ne.s32.totalorder %s155, %s157
      %p164 = scmp.eq.s32.totalorder %s79, 1
      %p165 = por %p163, %p164
      %p166 = scmp.ne.s32.totalorder %s157, %s158
      %p167 = scmp.eq.s32.totalorder %s79, 0
      %p168 = por %p166, %p167
      %p169 = scmp.ne.s32.totalorder %s157, %s158
      %p170 = scmp.eq.s32.totalorder %s80, 1
      %p171 = por %p169, %p170
      %p173 = scmp.ne.s32.totalorder %s158, %s172
      %p174 = scmp.eq.s32.totalorder %s80, 0
      %p175 = por %p173, %p174
      %s177 = sadd.s32 %s176, 1
      %p180 = scmp.eq.s32.totalorder %s74, 1
      %p181 = scmp.ne.s32.totalorder %s176, %s178
      %p182 = scmp.eq.s32.totalorder %s74, 0
      %p183 = por %p181, %p182
      %p184 = scmp.ne.s32.totalorder %s176, %s178
      %p185 = scmp.eq.s32.totalorder %s79, 1
      %p186 = por %p184, %p185
      %p187 = scmp.ne.s32.totalorder %s178, %s179
      %p188 = scmp.eq.s32.totalorder %s79, 0
      %p189 = por %p187, %p188
      %p190 = scmp.ne.s32.totalorder %s178, %s179
      %p191 = scmp.eq.s32.totalorder %s80, 1
      %p192 = por %p190, %p191
      %p194 = scmp.ne.s32.totalorder %s179, %s193
      %p195 = scmp.eq.s32.totalorder %s80, 0
      %p196 = por %p194, %p195
      %s198 = sadd.s32 %s197, 1
      %p201 = scmp.eq.s32.totalorder %s74, 1
      %p202 = scmp.ne.s32.totalorder %s197, %s199
      %p203 = scmp.eq.s32.totalorder %s74, 0
      %p204 = por %p202, %p203
      %p205 = scmp.ne.s32.totalorder %s197, %s199
      %p206 = scmp.eq.s32.totalorder %s79, 1
      %p207 = por %p205, %p206
      %p208 = scmp.ne.s32.totalorder %s199, %s200
      %p209 = scmp.eq.s32.totalorder %s79, 0
      %p210 = por %p208, %p209
      %p211 = scmp.ne.s32.totalorder %s199, %s200
      %p212 = scmp.eq.s32.totalorder %s80, 1
      %p213 = por %p211, %p212
      %p215 = scmp.ne.s32.totalorder %s200, %s214
      %p216 = scmp.eq.s32.totalorder %s80, 0
      %p217 = por %p215, %p216
      %s219 = sadd.s32 %s218, 1
      %p222 = scmp.eq.s32.totalorder %s74, 1
      %p223 = scmp.ne.s32.totalorder %s218, %s220
      %p224 = scmp.eq.s32.totalorder %s74, 0
      %p225 = por %p223, %p224
      %p226 = scmp.ne.s32.totalorder %s218, %s220
      %p227 = scmp.eq.s32.totalorder %s79, 1
      %p228 = por %p226, %p227
      %p229 = scmp.ne.s32.totalorder %s220, %s221
      %p230 = scmp.eq.s32.totalorder %s79, 0
      %p231 = por %p229, %p230
      %p232 = scmp.ne.s32.totalorder %s220, %s221
      %p233 = scmp.eq.s32.totalorder %s80, 1
      %p234 = por %p232, %p233
      %p236 = scmp.ne.s32.totalorder %s221, %s235
      %p237 = scmp.eq.s32.totalorder %s80, 0
      %p238 = por %p236, %p237
      %s240 = sadd.s32 %s239, 1
      %p243 = scmp.eq.s32.totalorder %s74, 1
      %p244 = scmp.ne.s32.totalorder %s239, %s241
      %p245 = scmp.eq.s32.totalorder %s74, 0
      %p246 = por %p244, %p245
      %p247 = scmp.ne.s32.totalorder %s239, %s241
      %p248 = scmp.eq.s32.totalorder %s79, 1
      %p249 = por %p247, %p248
      %p250 = scmp.ne.s32.totalorder %s241, %s242
      %p251 = scmp.eq.s32.totalorder %s79, 0
      %p252 = por %p250, %p251
      %p253 = scmp.ne.s32.totalorder %s241, %s242
      %p254 = scmp.eq.s32.totalorder %s80, 1
      %p255 = por %p253, %p254
      %p257 = scmp.ne.s32.totalorder %s242, %s256
      %p258 = scmp.eq.s32.totalorder %s80, 0
      %p259 = por %p257, %p258
      %s261 = sadd.s32 %s260, 1
      %p264 = scmp.eq.s32.totalorder %s74, 1
      %p265 = scmp.ne.s32.totalorder %s260, %s262
      %p266 = scmp.eq.s32.totalorder %s74, 0
      %p267 = por %p265, %p266
      %p268 = scmp.ne.s32.totalorder %s260, %s262
      %p269 = scmp.eq.s32.totalorder %s79, 1
      %p270 = por %p268, %p269
      %p271 = scmp.ne.s32.totalorder %s262, %s263
      %p272 = scmp.eq.s32.totalorder %s79, 0
      %p273 = por %p271, %p272
      %p274 = scmp.ne.s32.totalorder %s262, %s263
      %p275 = scmp.eq.s32.totalorder %s80, 1
      %p276 = por %p274, %p275
      %p278 = scmp.ne.s32.totalorder %s263, %s277
      %p279 = scmp.eq.s32.totalorder %s80, 0
      %p280 = por %p278, %p279
      %s282 = sadd.s32 %s281, 1
      %p285 = scmp.eq.s32.totalorder %s74, 1
      %p286 = scmp.ne.s32.totalorder %s281, %s283
      %p287 = scmp.eq.s32.totalorder %s74, 0
      %p288 = por %p286, %p287
      %p289 = scmp.ne.s32.totalorder %s281, %s283
      %p290 = scmp.eq.s32.totalorder %s79, 1
      %p291 = por %p289, %p290
      %p292 = scmp.ne.s32.totalorder %s283, %s284
      %p293 = scmp.eq.s32.totalorder %s79, 0
      %p294 = por %p292, %p293
      %p295 = scmp.ne.s32.totalorder %s283, %s284
      %p296 = scmp.eq.s32.totalorder %s80, 1
      %p297 = por %p295, %p296
      %p299 = scmp.ne.s32.totalorder %s284, %s298
      %p300 = scmp.eq.s32.totalorder %s80, 0
      %p301 = por %p299, %p300
      %s303 = sadd.s32 %s302, 1
      %p306 = scmp.eq.s32.totalorder %s74, 1
      %p307 = scmp.ne.s32.totalorder %s302, %s304
      %p308 = scmp.eq.s32.totalorder %s74, 0
      %p309 = por %p307, %p308
      %p310 = scmp.ne.s32.totalorder %s302, %s304
      %p311 = scmp.eq.s32.totalorder %s79, 1
      %p312 = por %p310, %p311
      %p313 = scmp.ne.s32.totalorder %s304, %s305
      %p314 = scmp.eq.s32.totalorder %s79, 0
      %p315 = por %p313, %p314
      %p316 = scmp.ne.s32.totalorder %s304, %s305
      %p317 = scmp.eq.s32.totalorder %s80, 1
      %p318 = por %p316, %p317
      %p320 = scmp.ne.s32.totalorder %s305, %s319
      %p321 = scmp.eq.s32.totalorder %s80, 0
      %p322 = por %p320, %p321
      %s324 = sadd.s32 %s323, 1
      %p327 = scmp.eq.s32.totalorder %s74, 1
      %p328 = scmp.ne.s32.totalorder %s323, %s325
      %p329 = scmp.eq.s32.totalorder %s74, 0
      %p330 = por %p328, %p329
      %p331 = scmp.ne.s32.totalorder %s323, %s325
      %p332 = scmp.eq.s32.totalorder %s79, 1
      %p333 = por %p331, %p332
      %p334 = scmp.ne.s32.totalorder %s325, %s326
      %p335 = scmp.eq.s32.totalorder %s79, 0
      %p336 = por %p334, %p335
      %p337 = scmp.ne.s32.totalorder %s325, %s326
      %p338 = scmp.eq.s32.totalorder %s80, 1
      %p339 = por %p337, %p338
      %p341 = scmp.ne.s32.totalorder %s326, %s340
      %p342 = scmp.eq.s32.totalorder %s80, 0
      %p343 = por %p341, %p342
      %s345 = sadd.s32 %s344, 1
      %p348 = scmp.eq.s32.totalorder %s74, 1
      %p349 = scmp.ne.s32.totalorder %s344, %s346
      %p350 = scmp.eq.s32.totalorder %s74, 0
      %p351 = por %p349, %p350
      %p352 = scmp.ne.s32.totalorder %s344, %s346
      %p353 = scmp.eq.s32.totalorder %s79, 1
      %p354 = por %p352, %p353
      %p355 = scmp.ne.s32.totalorder %s346, %s347
      %p356 = scmp.eq.s32.totalorder %s79, 0
      %p357 = por %p355, %p356
      %p358 = scmp.ne.s32.totalorder %s346, %s347
      %p359 = scmp.eq.s32.totalorder %s80, 1
      %p360 = por %p358, %p359
      %p362 = scmp.ne.s32.totalorder %s347, %s361
      %p363 = scmp.eq.s32.totalorder %s80, 0
      %p364 = por %p362, %p363
      %s366 = sadd.s32 %s365, 1
      %p369 = scmp.eq.s32.totalorder %s74, 1
      %p370 = scmp.ne.s32.totalorder %s365, %s367
      %p371 = scmp.eq.s32.totalorder %s74, 0
      %p372 = por %p370, %p371
      %p373 = scmp.ne.s32.totalorder %s365, %s367
      %p374 = scmp.eq.s32.totalorder %s79, 1
      %p375 = por %p373, %p374
      %p376 = scmp.ne.s32.totalorder %s367, %s368
      %p377 = scmp.eq.s32.totalorder %s79, 0
      %p378 = por %p376, %p377
      %p379 = scmp.ne.s32.totalorder %s367, %s368
      %p380 = scmp.eq.s32.totalorder %s80, 1
      %p381 = por %p379, %p380
      %p383 = scmp.ne.s32.totalorder %s368, %s382
      %p384 = scmp.eq.s32.totalorder %s80, 0
      %p385 = por %p383, %p384
      %s387 = sadd.s32 %s386, 1
      %p390 = scmp.eq.s32.totalorder %s74, 1
      %p391 = scmp.ne.s32.totalorder %s386, %s388
      %p392 = scmp.eq.s32.totalorder %s74, 0
      %p393 = por %p391, %p392
      %p394 = scmp.ne.s32.totalorder %s386, %s388
      %p395 = scmp.eq.s32.totalorder %s79, 1
      %p396 = por %p394, %p395
      %p397 = scmp.ne.s32.totalorder %s388, %s389
      %p398 = scmp.eq.s32.totalorder %s79, 0
      %p399 = por %p397, %p398
      %p400 = scmp.ne.s32.totalorder %s388, %s389
      %p401 = scmp.eq.s32.totalorder %s80, 1
      %p402 = por %p400, %p401
      %p404 = scmp.ne.s32.totalorder %s389, %s403
      %p405 = scmp.eq.s32.totalorder %s80, 0
      %p406 = por %p404, %p405
      %s408 = sadd.s32 %s407, 1
      %p411 = scmp.eq.s32.totalorder %s74, 1
      %p412 = scmp.ne.s32.totalorder %s407, %s409
      %p413 = scmp.eq.s32.totalorder %s74, 0
      %p414 = por %p412, %p413
      %p415 = scmp.ne.s32.totalorder %s407, %s409
      %p416 = scmp.eq.s32.totalorder %s79, 1
      %p417 = por %p415, %p416
      %p418 = scmp.ne.s32.totalorder %s409, %s410
      %p419 = scmp.eq.s32.totalorder %s79, 0
      %p420 = por %p418, %p419
      %p421 = scmp.ne.s32.totalorder %s409, %s410
      %p422 = scmp.eq.s32.totalorder %s80, 1
      %p423 = por %p421, %p422
      %p425 = scmp.ne.s32.totalorder %s410, %s424
      %p426 = scmp.eq.s32.totalorder %s80, 0
      %p427 = por %p425, %p426
      %s429 = sadd.s32 %s428, 1
      %p432 = scmp.eq.s32.totalorder %s74, 1
      %p433 = scmp.ne.s32.totalorder %s428, %s430
      %p434 = scmp.eq.s32.totalorder %s74, 0
      %p435 = por %p433, %p434
      %p436 = scmp.ne.s32.totalorder %s428, %s430
      %p437 = scmp.eq.s32.totalorder %s79, 1
      %p438 = por %p436, %p437
      %p439 = scmp.ne.s32.totalorder %s430, %s431
      %p440 = scmp.eq.s32.totalorder %s79, 0
      %p441 = por %p439, %p440
      %p442 = scmp.ne.s32.totalorder %s430, %s431
      %p443 = scmp.eq.s32.totalorder %s80, 1
      %p444 = por %p442, %p443
      %p446 = scmp.ne.s32.totalorder %s431, %s445
      %p447 = scmp.eq.s32.totalorder %s80, 0
      %p448 = por %p446, %p447
      %s450 = sadd.s32 %s449, 1
      %p453 = scmp.eq.s32.totalorder %s74, 1
      %p454 = scmp.ne.s32.totalorder %s449, %s451
      %p455 = scmp.eq.s32.totalorder %s74, 0
      %p456 = por %p454, %p455
      %p457 = scmp.ne.s32.totalorder %s449, %s451
      %p458 = scmp.eq.s32.totalorder %s79, 1
      %p459 = por %p457, %p458
      %p460 = scmp.ne.s32.totalorder %s451, %s452
      %p461 = scmp.eq.s32.totalorder %s79, 0
      %p462 = por %p460, %p461
      %p463 = scmp.ne.s32.totalorder %s451, %s452
      %p464 = scmp.eq.s32.totalorder %s80, 1
      %p465 = por %p463, %p464
      %p467 = scmp.ne.s32.totalorder %s452, %s466
      %p468 = scmp.eq.s32.totalorder %s80, 0
      %p469 = por %p467, %p468
      %s471 = sadd.s32 %s470, 1
      %p474 = scmp.eq.s32.totalorder %s74, 1
      %p475 = scmp.ne.s32.totalorder %s470, %s472
      %p476 = scmp.eq.s32.totalorder %s74, 0
      %p477 = por %p475, %p476
      %p478 = scmp.ne.s32.totalorder %s470, %s472
      %p479 = scmp.eq.s32.totalorder %s79, 1
      %p480 = por %p478, %p479
      %p481 = scmp.ne.s32.totalorder %s472, %s473
      %p482 = scmp.eq.s32.totalorder %s79, 0
      %p483 = por %p481, %p482
      %p484 = scmp.ne.s32.totalorder %s472, %s473
      %p485 = scmp.eq.s32.totalorder %s80, 1
      %p486 = por %p484, %p485
      %p488 = scmp.ne.s32.totalorder %s473, %s487
      %p489 = scmp.eq.s32.totalorder %s80, 0
      %p490 = por %p488, %p489
      %s492 = sadd.s32 %s491, 1
      %p495 = scmp.eq.s32.totalorder %s74, 1
      %p496 = scmp.ne.s32.totalorder %s491, %s493
      %p497 = scmp.eq.s32.totalorder %s74, 0
      %p498 = por %p496, %p497
      %p499 = scmp.ne.s32.totalorder %s491, %s493
      %p500 = scmp.eq.s32.totalorder %s79, 1
      %p501 = por %p499, %p500
      %p502 = scmp.ne.s32.totalorder %s493, %s494
      %p503 = scmp.eq.s32.totalorder %s79, 0
      %p504 = por %p502, %p503
      %p505 = scmp.ne.s32.totalorder %s493, %s494
      %p506 = scmp.eq.s32.totalorder %s80, 1
      %p507 = por %p505, %p506
      %p509 = scmp.ne.s32.totalorder %s494, %s508
      %p510 = scmp.eq.s32.totalorder %s80, 0
      %p511 = por %p509, %p510
      %s513 = sadd.s32 %s512, 1
      %p516 = scmp.eq.s32.totalorder %s74, 1
      %p517 = scmp.ne.s32.totalorder %s512, %s514
      %p518 = scmp.eq.s32.totalorder %s74, 0
      %p519 = por %p517, %p518
      %p520 = scmp.ne.s32.totalorder %s512, %s514
      %p521 = scmp.eq.s32.totalorder %s79, 1
      %p522 = por %p520, %p521
      %p523 = scmp.ne.s32.totalorder %s514, %s515
      %p524 = scmp.eq.s32.totalorder %s79, 0
      %p525 = por %p523, %p524
      %p526 = scmp.ne.s32.totalorder %s514, %s515
      %p527 = scmp.eq.s32.totalorder %s80, 1
      %p528 = por %p526, %p527
      %p530 = scmp.ne.s32.totalorder %s515, %s529
      %p531 = scmp.eq.s32.totalorder %s80, 0
      %p532 = por %p530, %p531
      %s534 = sadd.s32 %s533, 1
      %p537 = scmp.eq.s32.totalorder %s74, 1
      %p538 = scmp.ne.s32.totalorder %s533, %s535
      %p539 = scmp.eq.s32.totalorder %s74, 0
      %p540 = por %p538, %p539
      %p541 = scmp.ne.s32.totalorder %s533, %s535
      %p542 = scmp.eq.s32.totalorder %s79, 1
      %p543 = por %p541, %p542
      %p544 = scmp.ne.s32.totalorder %s535, %s536
      %p545 = scmp.eq.s32.totalorder %s79, 0
      %p546 = por %p544, %p545
      %p547 = scmp.ne.s32.totalorder %s535, %s536
      %p548 = scmp.eq.s32.totalorder %s80, 1
      %p549 = por %p547, %p548
      %p551 = scmp.ne.s32.totalorder %s536, %s550
      %p552 = scmp.eq.s32.totalorder %s80, 0
      %p553 = por %p551, %p552
      %s555 = sadd.s32 %s554, 1
      %p558 = scmp.eq.s32.totalorder %s74, 1
      %p559 = scmp.ne.s32.totalorder %s554, %s556
      %p560 = scmp.eq.s32.totalorder %s74, 0
      %p561 = por %p559, %p560
      %p562 = scmp.ne.s32.totalorder %s554, %s556
      %p563 = scmp.eq.s32.totalorder %s79, 1
      %p564 = por %p562, %p563
      %p565 = scmp.ne.s32.totalorder %s556, %s557
      %p566 = scmp.eq.s32.totalorder %s79, 0
      %p567 = por %p565, %p566
      %p568 = scmp.ne.s32.totalorder %s556, %s557
      %p569 = scmp.eq.s32.totalorder %s80, 1
      %p570 = por %p568, %p569
      %p572 = scmp.ne.s32.totalorder %s557, %s571
      %p573 = scmp.eq.s32.totalorder %s80, 0
      %p574 = por %p572, %p573
      %s576 = sadd.s32 %s575, 1
      %p579 = scmp.eq.s32.totalorder %s74, 1
      %p580 = scmp.ne.s32.totalorder %s575, %s577
      %p581 = scmp.eq.s32.totalorder %s74, 0
      %p582 = por %p580, %p581
      %p583 = scmp.ne.s32.totalorder %s575, %s577
      %p584 = scmp.eq.s32.totalorder %s79, 1
      %p585 = por %p583, %p584
      %p586 = scmp.ne.s32.totalorder %s577, %s578
      %p587 = scmp.eq.s32.totalorder %s79, 0
      %p588 = por %p586, %p587
      %p589 = scmp.ne.s32.totalorder %s577, %s578
      %p590 = scmp.eq.s32.totalorder %s80, 1
      %p591 = por %p589, %p590
      %p593 = scmp.ne.s32.totalorder %s578, %s592
      %p594 = scmp.eq.s32.totalorder %s80, 0
      %p595 = por %p593, %p594
      %s597 = sadd.s32 %s596, 1
      %p600 = scmp.eq.s32.totalorder %s74, 1
      %p601 = scmp.ne.s32.totalorder %s596, %s598
      %p602 = scmp.eq.s32.totalorder %s74, 0
      %p603 = por %p601, %p602
      %p604 = scmp.ne.s32.totalorder %s596, %s598
      %p605 = scmp.eq.s32.totalorder %s79, 1
      %p606 = por %p604, %p605
      %p607 = scmp.ne.s32.totalorder %s598, %s599
      %p608 = scmp.eq.s32.totalorder %s79, 0
      %p609 = por %p607, %p608
      %p610 = scmp.ne.s32.totalorder %s598, %s599
      %p611 = scmp.eq.s32.totalorder %s80, 1
      %p612 = por %p610, %p611
      %p614 = scmp.ne.s32.totalorder %s599, %s613
      %p615 = scmp.eq.s32.totalorder %s80, 0
      %p616 = por %p614, %p615
      %s618 = sadd.s32 %s617, 1
      %p621 = scmp.eq.s32.totalorder %s74, 1
      %p622 = scmp.ne.s32.totalorder %s617, %s619
      %p623 = scmp.eq.s32.totalorder %s74, 0
      %p624 = por %p622, %p623
      %p625 = scmp.ne.s32.totalorder %s617, %s619
      %p626 = scmp.eq.s32.totalorder %s79, 1
      %p627 = por %p625, %p626
      %p628 = scmp.ne.s32.totalorder %s619, %s620
      %p629 = scmp.eq.s32.totalorder %s79, 0
      %p630 = por %p628, %p629
      %p631 = scmp.ne.s32.totalorder %s619, %s620
      %p632 = scmp.eq.s32.totalorder %s80, 1
      %p633 = por %p631, %p632
      %p635 = scmp.ne.s32.totalorder %s620, %s634
      %p636 = scmp.eq.s32.totalorder %s80, 0
      %p637 = por %p635, %p636
      %s639 = sadd.s32 %s638, 1
      %p642 = scmp.eq.s32.totalorder %s74, 1
      %p643 = scmp.ne.s32.totalorder %s638, %s640
      %p644 = scmp.eq.s32.totalorder %s74, 0
      %p645 = por %p643, %p644
      %p646 = scmp.ne.s32.totalorder %s638, %s640
      %p647 = scmp.eq.s32.totalorder %s79, 1
      %p648 = por %p646, %p647
      %p649 = scmp.ne.s32.totalorder %s640, %s641
      %p650 = scmp.eq.s32.totalorder %s79, 0
      %p651 = por %p649, %p650
      %p652 = scmp.ne.s32.totalorder %s640, %s641
      %p653 = scmp.eq.s32.totalorder %s80, 1
      %p654 = por %p652, %p653
      %p656 = scmp.ne.s32.totalorder %s641, %s655
      %p657 = scmp.eq.s32.totalorder %s80, 0
      %p658 = por %p656, %p657
      %s660 = sadd.s32 %s659, 1
      %p663 = scmp.eq.s32.totalorder %s74, 1
      %p664 = scmp.ne.s32.totalorder %s659, %s661
      %p665 = scmp.eq.s32.totalorder %s74, 0
      %p666 = por %p664, %p665
      %p667 = scmp.ne.s32.totalorder %s659, %s661
      %p668 = scmp.eq.s32.totalorder %s79, 1
      %p669 = por %p667, %p668
      %p670 = scmp.ne.s32.totalorder %s661, %s662
      %p671 = scmp.eq.s32.totalorder %s79, 0
      %p672 = por %p670, %p671
      %p673 = scmp.ne.s32.totalorder %s661, %s662
      %p674 = scmp.eq.s32.totalorder %s80, 1
      %p675 = por %p673, %p674
      %p677 = scmp.ne.s32.totalorder %s662, %s676
      %p678 = scmp.eq.s32.totalorder %s80, 0
      %p679 = por %p677, %p678
      %s681 = sadd.s32 %s680, 1
      %p684 = scmp.eq.s32.totalorder %s74, 1
      %p685 = scmp.ne.s32.totalorder %s680, %s682
      %p686 = scmp.eq.s32.totalorder %s74, 0
      %p687 = por %p685, %p686
      %p688 = scmp.ne.s32.totalorder %s680, %s682
      %p689 = scmp.eq.s32.totalorder %s79, 1
      %p690 = por %p688, %p689
      %p691 = scmp.ne.s32.totalorder %s682, %s683
      %p692 = scmp.eq.s32.totalorder %s79, 0
      %p693 = por %p691, %p692
      %p694 = scmp.ne.s32.totalorder %s682, %s683
      %p695 = scmp.eq.s32.totalorder %s80, 1
      %p696 = por %p694, %p695
      %p698 = scmp.ne.s32.totalorder %s683, %s697
      %p699 = scmp.eq.s32.totalorder %s80, 0
      %p700 = por %p698, %p699
      %s702 = sadd.s32 %s701, 1
      %p705 = scmp.eq.s32.totalorder %s74, 1
      %p706 = scmp.ne.s32.totalorder %s701, %s703
      %p707 = scmp.eq.s32.totalorder %s74, 0
      %p708 = por %p706, %p707
      %p709 = scmp.ne.s32.totalorder %s701, %s703
      %p710 = scmp.eq.s32.totalorder %s79, 1
      %p711 = por %p709, %p710
      %p712 = scmp.ne.s32.totalorder %s703, %s704
      %p713 = scmp.eq.s32.totalorder %s79, 0
      %p714 = por %p712, %p713
      %p715 = scmp.ne.s32.totalorder %s703, %s704
      %p716 = scmp.eq.s32.totalorder %s80, 1
      %p717 = por %p715, %p716
      %p719 = scmp.ne.s32.totalorder %s704, %s718
      %p720 = scmp.eq.s32.totalorder %s80, 0
      %p721 = por %p719, %p720
      %s723 = sadd.s32 %s722, 1
      %p726 = scmp.eq.s32.totalorder %s74, 1
      %p727 = scmp.ne.s32.totalorder %s722, %s724
      %p728 = scmp.eq.s32.totalorder %s74, 0
      %p729 = por %p727, %p728
      %p730 = scmp.ne.s32.totalorder %s722, %s724
      %p731 = scmp.eq.s32.totalorder %s79, 1
      %p732 = por %p730, %p731
      %p733 = scmp.ne.s32.totalorder %s724, %s725
      %p734 = scmp.eq.s32.totalorder %s79, 0
      %p735 = por %p733, %p734
      %p736 = scmp.ne.s32.totalorder %s724, %s725
      %p737 = scmp.eq.s32.totalorder %s80, 1
      %p738 = por %p736, %p737
      %p740 = scmp.ne.s32.totalorder %s725, %s739
      %p741 = scmp.eq.s32.totalorder %s80, 0
      %p742 = por %p740, %p741
      %s744 = sadd.s32 %s743, 1
      %p747 = scmp.eq.s32.totalorder %s74, 1
      %p748 = scmp.ne.s32.totalorder %s743, %s745
      %p749 = scmp.eq.s32.totalorder %s74, 0
      %p750 = por %p748, %p749
      %p751 = scmp.ne.s32.totalorder %s743, %s745
      %p752 = scmp.eq.s32.totalorder %s79, 1
      %p753 = por %p751, %p752
      %p754 = scmp.ne.s32.totalorder %s745, %s746
      %p755 = scmp.eq.s32.totalorder %s79, 0
      %p756 = por %p754, %p755
      %p757 = scmp.ne.s32.totalorder %s745, %s746
      %p758 = scmp.eq.s32.totalorder %s80, 1
      %p759 = por %p757, %p758
      %p761 = scmp.ne.s32.totalorder %s746, %s760
      %p762 = scmp.eq.s32.totalorder %s80, 0
      %p763 = por %p761, %p762
      %s764 = ssub.s32 %s74, %s81
      %p765 = scmp.eq.s32.totalorder %s764, 0
      %s767 = sadd.s32 %s766, 1
      %s768 = scalar_select %p765, %s766, %s767
      %p771 = pneg %p765
      %p772 = scmp.eq.s32.totalorder %s74, 1
      %p773 = por %p771, %p772
      %p774 = scmp.ne.s32.totalorder %s766, %s769
      %p775 = scmp.eq.s32.totalorder %s74, 0
      %p776 = por %p774, %p775
      %p777 = scmp.ne.s32.totalorder %s766, %s769
      %p778 = scmp.eq.s32.totalorder %s79, 1
      %p779 = por %p777, %p778
      %p780 = scmp.ne.s32.totalorder %s769, %s770
      %p781 = scmp.eq.s32.totalorder %s79, 0
      %p782 = por %p780, %p781
      %p783 = scmp.ne.s32.totalorder %s769, %s770
      %p784 = scmp.eq.s32.totalorder %s80, 1
      %p785 = por %p783, %p784
      %p787 = scmp.ne.s32.totalorder %s770, %s786
      %p788 = scmp.eq.s32.totalorder %s80, 0
      %p789 = por %p787, %p788
      %p790 = scmp.le.s32.totalorder 1, %s74
      %p791 = scmp.lt.s32.totalorder %s74, 3
      %p792 = pnand %p790, %p791
      %p793 = pneg %p792
      // Predicated region
      $region9: #{tpu_custom_call.1} parent=5 // pred_check
        _
      $region10: #{tpu_custom_call.1} parent=5 // pred_check_branch
        %795 = sbr.rel (%p792) target = $region12
      $region11: #{tpu_custom_call.1} parent=5 // pred_region
        %s796 = ssub.s32 %s74, 1
        // Predicated region
        $region13: #{tpu_custom_call.1} parent=11 // pred_check
          %p797 = pneg %p147
        $region14: #{tpu_custom_call.1} parent=11 // pred_check_branch
          %799 = sbr.rel (%p797) target = $region16
        $region15: #{tpu_custom_call.1} parent=11 // pred_region
          _
        $region16: #{tpu_custom_call.1} parent=11 // pred_fallthru
          _
        // Predicated region
        $region17: #{tpu_custom_call.1} parent=11 // pred_check
          %p800 = pneg %p168
        $region18: #{tpu_custom_call.1} parent=11 // pred_check_branch
          %802 = sbr.rel (%p800) target = $region20
        $region19: #{tpu_custom_call.1} parent=11 // pred_region
          _
        $region20: #{tpu_custom_call.1} parent=11 // pred_fallthru
          _
        // Predicated region
        $region21: #{tpu_custom_call.1} parent=11 // pred_check
          %p803 = pneg %p189
        $region22: #{tpu_custom_call.1} parent=11 // pred_check_branch
          %805 = sbr.rel (%p803) target = $region24
        $region23: #{tpu_custom_call.1} parent=11 // pred_region
          _
        $region24: #{tpu_custom_call.1} parent=11 // pred_fallthru
          _
        // Predicated region
        $region25: #{tpu_custom_call.1} parent=11 // pred_check
          %p806 = pneg %p210
        $region26: #{tpu_custom_call.1} parent=11 // pred_check_branch
          %808 = sbr.rel (%p806) target = $region28
        $region27: #{tpu_custom_call.1} parent=11 // pred_region
          _
        $region28: #{tpu_custom_call.1} parent=11 // pred_fallthru
          _
        // Predicated region
        $region29: #{tpu_custom_call.1} parent=11 // pred_check
          %p809 = pneg %p231
        $region30: #{tpu_custom_call.1} parent=11 // pred_check_branch
          %811 = sbr.rel (%p809) target = $region32
        $region31: #{tpu_custom_call.1} parent=11 // pred_region
          _
        $region32: #{tpu_custom_call.1} parent=11 // pred_fallthru
          _
        // Predicated region
        $region33: #{tpu_custom_call.1} parent=11 // pred_check
          %p812 = pneg %p252
        $region34: #{tpu_custom_call.1} parent=11 // pred_check_branch
          %814 = sbr.rel (%p812) target = $region36
        $region35: #{tpu_custom_call.1} parent=11 // pred_region
          _
        $region36: #{tpu_custom_call.1} parent=11 // pred_fallthru
          _
        // Predicated region
        $region37: #{tpu_custom_call.1} parent=11 // pred_check
          %p815 = pneg %p273
        $region38: #{tpu_custom_call.1} parent=11 // pred_check_branch
          %817 = sbr.rel (%p815) target = $region40
        $region39: #{tpu_custom_call.1} parent=11 // pred_region
          _
        $region40: #{tpu_custom_call.1} parent=11 // pred_fallthru
          _
        // Predicated region
        $region41: #{tpu_custom_call.1} parent=11 // pred_check
          %p818 = pneg %p294
        $region42: #{tpu_custom_call.1} parent=11 // pred_check_branch
          %820 = sbr.rel (%p818) target = $region44
        $region43: #{tpu_custom_call.1} parent=11 // pred_region
          _
        $region44: #{tpu_custom_call.1} parent=11 // pred_fallthru
          _
        // Predicated region
        $region45: #{tpu_custom_call.1} parent=11 // pred_check
          %p821 = pneg %p315
        $region46: #{tpu_custom_call.1} parent=11 // pred_check_branch
          %823 = sbr.rel (%p821) target = $region48
        $region47: #{tpu_custom_call.1} parent=11 // pred_region
          _
        $region48: #{tpu_custom_call.1} parent=11 // pred_fallthru
          _
        // Predicated region
        $region49: #{tpu_custom_call.1} parent=11 // pred_check
          %p824 = pneg %p336
        $region50: #{tpu_custom_call.1} parent=11 // pred_check_branch
          %826 = sbr.rel (%p824) target = $region52
        $region51: #{tpu_custom_call.1} parent=11 // pred_region
          _
        $region52: #{tpu_custom_call.1} parent=11 // pred_fallthru
          _
        // Predicated region
        $region53: #{tpu_custom_call.1} parent=11 // pred_check
          %p827 = pneg %p357
        $region54: #{tpu_custom_call.1} parent=11 // pred_check_branch
          %829 = sbr.rel (%p827) target = $region56
        $region55: #{tpu_custom_call.1} parent=11 // pred_region
          _
        $region56: #{tpu_custom_call.1} parent=11 // pred_fallthru
          _
        // Predicated region
        $region57: #{tpu_custom_call.1} parent=11 // pred_check
          %p830 = pneg %p378
        $region58: #{tpu_custom_call.1} parent=11 // pred_check_branch
          %832 = sbr.rel (%p830) target = $region60
        $region59: #{tpu_custom_call.1} parent=11 // pred_region
          _
        $region60: #{tpu_custom_call.1} parent=11 // pred_fallthru
          _
        // Predicated region
        $region61: #{tpu_custom_call.1} parent=11 // pred_check
          %p833 = pneg %p399
        $region62: #{tpu_custom_call.1} parent=11 // pred_check_branch
          %835 = sbr.rel (%p833) target = $region64
        $region63: #{tpu_custom_call.1} parent=11 // pred_region
          _
        $region64: #{tpu_custom_call.1} parent=11 // pred_fallthru
          _
        // Predicated region
        $region65: #{tpu_custom_call.1} parent=11 // pred_check
          %p836 = pneg %p420
        $region66: #{tpu_custom_call.1} parent=11 // pred_check_branch
          %838 = sbr.rel (%p836) target = $region68
        $region67: #{tpu_custom_call.1} parent=11 // pred_region
          _
        $region68: #{tpu_custom_call.1} parent=11 // pred_fallthru
          _
        // Predicated region
        $region69: #{tpu_custom_call.1} parent=11 // pred_check
          %p839 = pneg %p441
        $region70: #{tpu_custom_call.1} parent=11 // pred_check_branch
          %841 = sbr.rel (%p839) target = $region72
        $region71: #{tpu_custom_call.1} parent=11 // pred_region
          _
        $region72: #{tpu_custom_call.1} parent=11 // pred_fallthru
          _
        // Predicated region
        $region73: #{tpu_custom_call.1} parent=11 // pred_check
          %p842 = pneg %p462
        $region74: #{tpu_custom_call.1} parent=11 // pred_check_branch
          %844 = sbr.rel (%p842) target = $region76
        $region75: #{tpu_custom_call.1} parent=11 // pred_region
          _
        $region76: #{tpu_custom_call.1} parent=11 // pred_fallthru
          _
        // Predicated region
        $region77: #{tpu_custom_call.1} parent=11 // pred_check
          %p845 = pneg %p483
        $region78: #{tpu_custom_call.1} parent=11 // pred_check_branch
          %847 = sbr.rel (%p845) target = $region80
        $region79: #{tpu_custom_call.1} parent=11 // pred_region
          _
        $region80: #{tpu_custom_call.1} parent=11 // pred_fallthru
          _
        // Predicated region
        $region81: #{tpu_custom_call.1} parent=11 // pred_check
          %p848 = pneg %p504
        $region82: #{tpu_custom_call.1} parent=11 // pred_check_branch
          %850 = sbr.rel (%p848) target = $region84
        $region83: #{tpu_custom_call.1} parent=11 // pred_region
          _
        $region84: #{tpu_custom_call.1} parent=11 // pred_fallthru
          _
        // Predicated region
        $region85: #{tpu_custom_call.1} parent=11 // pred_check
          %p851 = pneg %p525
        $region86: #{tpu_custom_call.1} parent=11 // pred_check_branch
          %853 = sbr.rel (%p851) target = $region88
        $region87: #{tpu_custom_call.1} parent=11 // pred_region
          _
        $region88: #{tpu_custom_call.1} parent=11 // pred_fallthru
          _
        // Predicated region
        $region89: #{tpu_custom_call.1} parent=11 // pred_check
          %p854 = pneg %p546
        $region90: #{tpu_custom_call.1} parent=11 // pred_check_branch
          %856 = sbr.rel (%p854) target = $region92
        $region91: #{tpu_custom_call.1} parent=11 // pred_region
          _
        $region92: #{tpu_custom_call.1} parent=11 // pred_fallthru
          _
        // Predicated region
        $region93: #{tpu_custom_call.1} parent=11 // pred_check
          %p857 = pneg %p567
        $region94: #{tpu_custom_call.1} parent=11 // pred_check_branch
          %859 = sbr.rel (%p857) target = $region96
        $region95: #{tpu_custom_call.1} parent=11 // pred_region
          _
        $region96: #{tpu_custom_call.1} parent=11 // pred_fallthru
          _
        // Predicated region
        $region97: #{tpu_custom_call.1} parent=11 // pred_check
          %p860 = pneg %p588
        $region98: #{tpu_custom_call.1} parent=11 // pred_check_branch
          %862 = sbr.rel (%p860) target = $region100
        $region99: #{tpu_custom_call.1} parent=11 // pred_region
          _
        $region100: #{tpu_custom_call.1} parent=11 // pred_fallthru
          _
        // Predicated region
        $region101: #{tpu_custom_call.1} parent=11 // pred_check
          %p863 = pneg %p609
        $region102: #{tpu_custom_call.1} parent=11 // pred_check_branch
          %865 = sbr.rel (%p863) target = $region104
        $region103: #{tpu_custom_call.1} parent=11 // pred_region
          _
        $region104: #{tpu_custom_call.1} parent=11 // pred_fallthru
          _
        // Predicated region
        $region105: #{tpu_custom_call.1} parent=11 // pred_check
          %p866 = pneg %p630
        $region106: #{tpu_custom_call.1} parent=11 // pred_check_branch
          %868 = sbr.rel (%p866) target = $region108
        $region107: #{tpu_custom_call.1} parent=11 // pred_region
          _
        $region108: #{tpu_custom_call.1} parent=11 // pred_fallthru
          _
        // Predicated region
        $region109: #{tpu_custom_call.1} parent=11 // pred_check
          %p869 = pneg %p651
        $region110: #{tpu_custom_call.1} parent=11 // pred_check_branch
          %871 = sbr.rel (%p869) target = $region112
        $region111: #{tpu_custom_call.1} parent=11 // pred_region
          _
        $region112: #{tpu_custom_call.1} parent=11 // pred_fallthru
          _
        // Predicated region
        $region113: #{tpu_custom_call.1} parent=11 // pred_check
          %p872 = pneg %p672
        $region114: #{tpu_custom_call.1} parent=11 // pred_check_branch
          %874 = sbr.rel (%p872) target = $region116
        $region115: #{tpu_custom_call.1} parent=11 // pred_region
          _
        $region116: #{tpu_custom_call.1} parent=11 // pred_fallthru
          _
        // Predicated region
        $region117: #{tpu_custom_call.1} parent=11 // pred_check
          %p875 = pneg %p693
        $region118: #{tpu_custom_call.1} parent=11 // pred_check_branch
          %877 = sbr.rel (%p875) target = $region120
        $region119: #{tpu_custom_call.1} parent=11 // pred_region
          _
        $region120: #{tpu_custom_call.1} parent=11 // pred_fallthru
          _
        // Predicated region
        $region121: #{tpu_custom_call.1} parent=11 // pred_check
          %p878 = pneg %p714
        $region122: #{tpu_custom_call.1} parent=11 // pred_check_branch
          %880 = sbr.rel (%p878) target = $region124
        $region123: #{tpu_custom_call.1} parent=11 // pred_region
          _
        $region124: #{tpu_custom_call.1} parent=11 // pred_fallthru
          _
        // Predicated region
        $region125: #{tpu_custom_call.1} parent=11 // pred_check
          %p881 = pneg %p735
        $region126: #{tpu_custom_call.1} parent=11 // pred_check_branch
          %883 = sbr.rel (%p881) target = $region128
        $region127: #{tpu_custom_call.1} parent=11 // pred_region
          _
        $region128: #{tpu_custom_call.1} parent=11 // pred_fallthru
          _
        // Predicated region
        $region129: #{tpu_custom_call.1} parent=11 // pred_check
          %p884 = pneg %p756
        $region130: #{tpu_custom_call.1} parent=11 // pred_check_branch
          %886 = sbr.rel (%p884) target = $region132
        $region131: #{tpu_custom_call.1} parent=11 // pred_region
          _
        $region132: #{tpu_custom_call.1} parent=11 // pred_fallthru
          _
      $region12: #{tpu_custom_call.1} parent=5 // pred_fallthru
        _
      %p887 = scmp.lt.s32.totalorder %s74, 2
      // Predicated region
      $region133: #{tpu_custom_call.1} parent=5 // pred_check
        %p888 = pneg %p887
      $region134: #{tpu_custom_call.1} parent=5 // pred_check_branch
        %890 = sbr.rel (%p888) target = $region136
      $region135: #{tpu_custom_call.1} parent=5 // pred_region
        // Predicated region
        $region137: #{tpu_custom_call.1} parent=135 // pred_check
          %p891 = pneg %p94
        $region138: #{tpu_custom_call.1} parent=135 // pred_check_branch
          %893 = sbr.rel (%p891) target = $region140
        $region139: #{tpu_custom_call.1} parent=135 // pred_region
          %p894 = scmp.lt.s32.totalorder %s74, 1
          %s895 = scalar_select %p894, %s74, 1
          %s896 = smul.addr %s895, 8
          %s897 = scalar_lea.vmem %s1, %s896
        $region140: #{tpu_custom_call.1} parent=135 // pred_fallthru
          _
        // Predicated region
        $region141: #{tpu_custom_call.1} parent=135 // pred_check
          %p898 = pneg %p120
        $region142: #{tpu_custom_call.1} parent=135 // pred_check_branch
          %900 = sbr.rel (%p898) target = $region144
        $region143: #{tpu_custom_call.1} parent=135 // pred_region
          %p901 = scmp.lt.s32.totalorder %s74, 1
          %s902 = scalar_select %p901, %s74, 1
          %s903 = scalar_lea.vmem %s3, %s902
        $region144: #{tpu_custom_call.1} parent=135 // pred_fallthru
          _
      $region136: #{tpu_custom_call.1} parent=5 // pred_fallthru
        _
      %p904 = scmp.le.s32.totalorder 1, %s74
      %p905 = scmp.lt.s32.totalorder %s74, 3
      %p906 = pnand %p904, %p905
      %p907 = pneg %p906
      // Predicated region
      $region145: #{tpu_custom_call.1} parent=5 // pred_check
        _
      $region146: #{tpu_custom_call.1} parent=5 // pred_check_branch
        %909 = sbr.rel (%p906) target = $region148
      $region147: #{tpu_custom_call.1} parent=5 // pred_region
        %s910 = ssub.s32 %s74, 1
        %p911 = scmp.lt.s32.totalorder %s79, 1
        %s912 = scalar_select %p911, %s79, 1
        %s913 = smul.addr %s912, 8
        %s914 = scalar_lea.vmem %s1, %s913
        %p915 = pneg %p100
        %p916 = pneg %p97
        %p917 = scmp.lt.s32.totalorder %s79, 1
        %s918 = scalar_select %p917, %s79, 1
        %s919 = scalar_lea.vmem %s3, %s918
        %p920 = pneg %p126
        %p921 = pneg %p123
        %p922 = pneg %p147
        %p923 = pneg %p144
        %p924 = pneg %p168
        %p925 = pneg %p165
        %p926 = pneg %p189
        %p927 = pneg %p186
        %p928 = pneg %p210
        %p929 = pneg %p207
        %p930 = pneg %p231
        %p931 = pneg %p228
        %p932 = pneg %p252
        %p933 = pneg %p249
        %p934 = pneg %p273
        %p935 = pneg %p270
        %p936 = pneg %p294
        %p937 = pneg %p291
        %p938 = pneg %p315
        %p939 = pneg %p312
        %p940 = pneg %p336
        %p941 = pneg %p333
        %p942 = pneg %p357
        %p943 = pneg %p354
        %p944 = pneg %p378
        %p945 = pneg %p375
        %p946 = pneg %p399
        %p947 = pneg %p396
        %p948 = pneg %p420
        %p949 = pneg %p417
        %p950 = pneg %p441
        %p951 = pneg %p438
        %p952 = pneg %p462
        %p953 = pneg %p459
        %p954 = pneg %p483
        %p955 = pneg %p480
        %p956 = pneg %p504
        %p957 = pneg %p501
        %p958 = pneg %p525
        %p959 = pneg %p522
        %p960 = pneg %p546
        %p961 = pneg %p543
        %p962 = pneg %p567
        %p963 = pneg %p564
        %p964 = pneg %p588
        %p965 = pneg %p585
        %p966 = pneg %p609
        %p967 = pneg %p606
        %p968 = pneg %p630
        %p969 = pneg %p627
        %p970 = pneg %p651
        %p971 = pneg %p648
        %p972 = pneg %p672
        %p973 = pneg %p669
        %p974 = pneg %p693
        %p975 = pneg %p690
        %p976 = pneg %p714
        %p977 = pneg %p711
        %p978 = pneg %p735
        %p979 = pneg %p732
        %p980 = pneg %p756
        %p981 = pneg %p753
        %p982 = pneg %p782
        %p983 = pneg %p779
        %s984 = sand.u32 %s769, 1
        %s985 = scalar_lea.sflag [#allocation3], %s984
        %s986 = sand.u32 %s769, 1
        %s987 = smul.addr %s986, 8
        %s988 = scalar_lea.vmem [#allocation2], %s987
        %p989 = scmp.lt.s32.totalorder %s79, 1
        %s990 = scalar_select %p989, %s79, 1
        %s991 = smul.addr %s990, 8
        %s992 = scalar_lea.vmem %s1, %s991
        %p993 = scmp.lt.s32.totalorder %s79, 1
        %s994 = scalar_select %p993, %s79, 1
        %s995 = scalar_lea.vmem %s3, %s994
        %v997 = vld [vmem:[%s992] sm:$0xff]
        %v998 = vlaneseq
        %v999 = vand.u32 %v998, 127
        %1000 = vset.pattern.permute.xlu0 0
        %1001 = vperm.xlu0 %1000, %v997
        %v1002 = vpop.permute.xlu0 %1001
        %vm1003 = vcmp.eq.s32.totalorder %v1002, %v999
        %v1004 = vsel %vm1003, 1, 0
        %v1005 = vcvt.s32.f32 %v1004
        %v1006 = vld [vmem:[%s5] sm:$0xff]
        %v1007 = vld [vmem:[%s5 + $0x8] sm:$0xff]
        %v1008 = vld [vmem:[%s5 + $0x10] sm:$0xff]
        %v1009 = vld [vmem:[%s5 + $0x18] sm:$0xff]
        %v1010 = vld [vmem:[%s5 + $0x20] sm:$0xff]
        %v1011 = vld [vmem:[%s5 + $0x28] sm:$0xff]
        %v1012 = vld [vmem:[%s5 + $0x30] sm:$0x3]
        %vm1013 = vcmask 408576
        %v1015 = vsel %vm1013, %v1005, 0
        %vm1017 = vcmask 1041408
        %v1019 = vsel %vm1017, %v1012, 0
        %1021 = vmatprep.subr.mxu0 0.0
        %1022 = vmatpush1.msra.mxu0 %v1006
        %1023 = vmatprep.subr.mxu0 0.0
        %1024 = vmatpush1.msra.mxu0 %v1007
        %1025 = vmatprep.subr.mxu0 0.0
        %1026 = vmatpush1.msra.mxu0 %v1008
        %1027 = vmatprep.subr.mxu0 0.0
        %1028 = vmatpush1.msra.mxu0 %v1009
        %1029 = vmatprep.subr.mxu0 0.0
        %1030 = vmatpush1.msra.mxu0 %v1010
        %1031 = vmatprep.subr.mxu0 0.0
        %1032 = vmatpush1.msra.mxu0 %v1011
        %1033 = vmatprep.subr.mxu0 0.0
        %1034 = vmatpush1.msra.mxu0 %v1019
        %1035 = vmatprep.subr.mxu0 0.0
        %1036 = vmatpush1.msra.mxu0 0.0
        %1037 = vmatprep.subr.mxu0 0.0
        %1038 = vmatpush1.msra.mxu0 0.0
        %1039 = vmatprep.subr.mxu0 0.0
        %1040 = vmatpush1.msra.mxu0 0.0
        %1041 = vmatprep.subr.mxu0 0.0
        %1042 = vmatpush1.msra.mxu0 0.0
        %1043 = vmatprep.subr.mxu0 0.0
        %1044 = vmatpush1.msra.mxu0 0.0
        %1045 = vmatprep.subr.mxu0 0.0
        %1046 = vmatpush1.msra.mxu0 0.0
        %1047 = vmatprep.subr.mxu0 0.0
        %1048 = vmatpush1.msra.mxu0 0.0
        %1049 = vmatprep.subr.mxu0 0.0
        %1050 = vmatpush1.msra.mxu0 0.0
        %1051 = vmatprep.subr.mxu0 0.0
        %1052 = vmatpush1.msra.mxu0 0.0
        %1053 = vmatprep.subr.mxu0 0.0
        %1054 = vmatpush1.msra.mxu0 0.0
        %1055 = vmatprep.subr.mxu0 0.0
        %1056 = vmatpush1.msra.mxu0 0.0
        %1057 = vmatprep.subr.mxu0 0.0
        %1058 = vmatpush1.msra.mxu0 0.0
        %1059 = vmatprep.subr.mxu0 0.0
        %1060 = vmatpush1.msra.mxu0 0.0
        %1061 = vmatprep.subr.mxu0 0.0
        %1062 = vmatpush1.msra.mxu0 0.0
        %1063 = vmatprep.subr.mxu0 0.0
        %1064 = vmatpush1.msra.mxu0 0.0
        %1065 = vmatprep.subr.mxu0 0.0
        %1066 = vmatpush1.msra.mxu0 0.0
        %1067 = vmatprep.subr.mxu0 0.0
        %1068 = vmatpush1.msra.mxu0 0.0
        %1069 = vmatprep.subr.mxu0 0.0
        %1070 = vmatpush1.msra.mxu0 0.0
        %1071 = vmatprep.subr.mxu0 0.0
        %1072 = vmatpush1.msra.mxu0 0.0
        %1073 = vmatprep.subr.mxu0 0.0
        %1074 = vmatpush1.msra.mxu0 0.0
        %1075 = vmatprep.subr.mxu0 0.0
        %1076 = vmatpush1.msra.mxu0 0.0
        %1077 = vmatprep.subr.mxu0 0.0
        %1078 = vmatpush1.msra.mxu0 0.0
        %1079 = vmatprep.subr.mxu0 0.0
        %1080 = vmatpush1.msra.mxu0 0.0
        %1081 = vmatprep.subr.mxu0 0.0
        %1082 = vmatpush1.msra.mxu0 0.0
        %1083 = vmatprep.subr.mxu0 0.0
        %1084 = vmatpush1.msra.mxu0 0.0
        %1085 = vmatprep.mubr.f32.mxu0 0.0
        %1086 = vmatmul.mubr.f32.gmra.mrb[0].mxu0 %v1015
        %v1087 = vpop.f32.mrb[0].mxu0
        %v1088 = vadd.f32 0.0, %v1087
        %v1089 = vpop.f32.mrb[0].mxu0
        %1090 = vdwg.mxu0
        %v1091 = vmul.f32 %v1088, 5.656854
        %v1092 = vld [vmem:[%s7] sm:$0xff]
        %v1093 = vadd.f32 %v1091, %v1092
        %v1094 = vld [vmem:[%s995] sm:$0x1]
        %vm1095 = vcmp.eq.f32.partialorder %v1094, 0.0
        %v1096 = vsel %vm1095, -1e+10, 0.0
        %v1097 = vld [vmem:[%s25] sm:$0x1]
        %v1098 = vld [vmem:[%s27] sm:$0x1]
        %v1099 = vpack.c.bf16 %v1093, %v1093
        %v1100 = vld [vmem:[%s9] sm:$0xf]
        %v1101 = vld [vmem:[%s9 + $0x4] sm:$0xf]
        %v1102 = vld [vmem:[%s9 + $0x8] sm:$0xf]
        %v1103 = vld [vmem:[%s9 + $0xc] sm:$0xf]
        %v1104 = vld [vmem:[%s9 + $0x10] sm:$0xf]
        %v1105 = vld [vmem:[%s9 + $0x14] sm:$0xf]
        %v1106 = vld [vmem:[%s9 + $0x18] sm:$0xf]
        %v1107 = vld [vmem:[%s9 + $0x1c] sm:$0xf]
        %v1108 = vld [vmem:[%s9 + $0x20] sm:$0xf]
        %v1109 = vld [vmem:[%s9 + $0x24] sm:$0xf]
        %v1110 = vld [vmem:[%s9 + $0x28] sm:$0xf]
        %v1111 = vld [vmem:[%s9 + $0x2c] sm:$0xf]
        %v1112 = vld [vmem:[%s9 + $0x30] sm:$0xf]
        %v1113 = vld [vmem:[%s9 + $0x34] sm:$0xf]
        %v1114 = vld [vmem:[%s9 + $0x38] sm:$0xf]
        %v1115 = vld [vmem:[%s9 + $0x3c] sm:$0xf]
        %v1116 = vld [vmem:[%s11] sm:$0x1]
        %v1117 = vld [vmem:[%s11 + $0x1] sm:$0x1]
        %v1118 = vld [vmem:[%s11 + $0x2] sm:$0x1]
        %v1119 = vld [vmem:[%s11 + $0x3] sm:$0x1]
        %v1124 = vlaneseq
        %v1125 = vshrl.u32 %v1124, 7
        %v1126 = vsub.s32 0, %v1125
        %v1127 = vrot.slane %v1116, %v1126
        %v1128 = vlaneseq
        %v1129 = vshrl.u32 %v1128, 7
        %v1130 = vsub.s32 0, %v1129
        %v1131 = vrot.slane %v1117, %v1130
        %v1132 = vlaneseq
        %v1133 = vshrl.u32 %v1132, 7
        %v1134 = vsub.s32 0, %v1133
        %v1135 = vrot.slane %v1118, %v1134
        %v1136 = vlaneseq
        %v1137 = vshrl.u32 %v1136, 7
        %v1138 = vsub.s32 0, %v1137
        %v1139 = vrot.slane %v1119, %v1138
        %v1148 = vunpack.c.l.b16 %v1100
        %v1149 = vunpack.c.l.b16 %v1101
        %v1150 = vunpack.c.l.b16 %v1102
        %v1151 = vunpack.c.l.b16 %v1103
        %v1152 = vpack.c.b16 %v1149, %v1148
        %v1153 = vpack.c.b16 %v1151, %v1150
        %vm1156 = vcmask 261120
        %v1158 = vsel %vm1156, %v1099, 0
        %1160 = vmatprep.subr.bf16.mxu0 0
        %1161 = vmatpush1.bf16.msra.mxu0 %v1152
        %1162 = vmatprep.subr.bf16.mxu0 0
        %1163 = vmatpush1.bf16.msra.mxu0 %v1153
        %1164 = vmatprep.subr.bf16.mxu0 0
        %1165 = vmatpush1.bf16.msra.mxu0 0
        %1166 = vmatprep.subr.bf16.mxu0 0
        %1167 = vmatpush1.bf16.msra.mxu0 0
        %1168 = vmatprep.subr.bf16.mxu0 0
        %1169 = vmatpush1.bf16.msra.mxu0 0
        %1170 = vmatprep.subr.bf16.mxu0 0
        %1171 = vmatpush1.bf16.msra.mxu0 0
        %1172 = vmatprep.subr.bf16.mxu0 0
        %1173 = vmatpush1.bf16.msra.mxu0 0
        %1174 = vmatprep.subr.bf16.mxu0 0
        %1175 = vmatpush1.bf16.msra.mxu0 0
        %1176 = vmatprep.subr.bf16.mxu0 0
        %1177 = vmatpush1.bf16.msra.mxu0 0
        %1178 = vmatprep.subr.bf16.mxu0 0
        %1179 = vmatpush1.bf16.msra.mxu0 0
        %1180 = vmatprep.subr.bf16.mxu0 0
        %1181 = vmatpush1.bf16.msra.mxu0 0
        %1182 = vmatprep.subr.bf16.mxu0 0
        %1183 = vmatpush1.bf16.msra.mxu0 0
        %1184 = vmatprep.subr.bf16.mxu0 0
        %1185 = vmatpush1.bf16.msra.mxu0 0
        %1186 = vmatprep.subr.bf16.mxu0 0
        %1187 = vmatpush1.bf16.msra.mxu0 0
        %1188 = vmatprep.subr.bf16.mxu0 0
        %1189 = vmatpush1.bf16.msra.mxu0 0
        %1190 = vmatprep.subr.bf16.mxu0 0
        %1191 = vmatpush1.bf16.msra.mxu0 0
        %1192 = vmatprep.mubr.bf16.mxu0 0
        %1193 = vmatmul.mubr.bf16.gmra.mrb[0].mxu0 %v1158
        %v1194 = vpop.f32.mrb[0].mxu0
        %v1195 = vadd.f32 %v1127, %v1194
        %v1196 = vpop.f32.mrb[0].mxu0
        %v1197 = vpop.f32.mrb[0].mxu0
        %v1198 = vpop.f32.mrb[0].mxu0
        %1199 = vdwg.mxu0
        %v1204 = vunpack.c.l.b16 %v1104
        %v1205 = vunpack.c.l.b16 %v1105
        %v1206 = vunpack.c.l.b16 %v1106
        %v1207 = vunpack.c.l.b16 %v1107
        %v1208 = vpack.c.b16 %v1205, %v1204
        %v1209 = vpack.c.b16 %v1207, %v1206
        %1212 = vmatprep.subr.bf16.mxu0 0
        %1213 = vmatpush1.bf16.msra.mxu0 %v1208
        %1214 = vmatprep.subr.bf16.mxu0 0
        %1215 = vmatpush1.bf16.msra.mxu0 %v1209
        %1216 = vmatprep.subr.bf16.mxu0 0
        %1217 = vmatpush1.bf16.msra.mxu0 0
        %1218 = vmatprep.subr.bf16.mxu0 0
        %1219 = vmatpush1.bf16.msra.mxu0 0
        %1220 = vmatprep.subr.bf16.mxu0 0
        %1221 = vmatpush1.bf16.msra.mxu0 0
        %1222 = vmatprep.subr.bf16.mxu0 0
        %1223 = vmatpush1.bf16.msra.mxu0 0
        %1224 = vmatprep.subr.bf16.mxu0 0
        %1225 = vmatpush1.bf16.msra.mxu0 0
        %1226 = vmatprep.subr.bf16.mxu0 0
        %1227 = vmatpush1.bf16.msra.mxu0 0
        %1228 = vmatprep.subr.bf16.mxu0 0
        %1229 = vmatpush1.bf16.msra.mxu0 0
        %1230 = vmatprep.subr.bf16.mxu0 0
        %1231 = vmatpush1.bf16.msra.mxu0 0
        %1232 = vmatprep.subr.bf16.mxu0 0
        %1233 = vmatpush1.bf16.msra.mxu0 0
        %1234 = vmatprep.subr.bf16.mxu0 0
        %1235 = vmatpush1.bf16.msra.mxu0 0
        %1236 = vmatprep.subr.bf16.mxu0 0
        %1237 = vmatpush1.bf16.msra.mxu0 0
        %1238 = vmatprep.subr.bf16.mxu0 0
        %1239 = vmatpush1.bf16.msra.mxu0 0
        %1240 = vmatprep.subr.bf16.mxu0 0
        %1241 = vmatpush1.bf16.msra.mxu0 0
        %1242 = vmatprep.subr.bf16.mxu0 0
        %1243 = vmatpush1.bf16.msra.mxu0 0
        %1244 = vmatprep.mubr.bf16.mxu0 0
        %1245 = vmatmul.mubr.bf16.gmra.mrb[0].mxu0 %v1158
        %v1246 = vpop.f32.mrb[0].mxu0
        %v1247 = vadd.f32 %v1131, %v1246
        %v1248 = vpop.f32.mrb[0].mxu0
        %v1249 = vpop.f32.mrb[0].mxu0
        %v1250 = vpop.f32.mrb[0].mxu0
        %1251 = vdwg.mxu0
        %v1256 = vunpack.c.l.b16 %v1108
        %v1257 = vunpack.c.l.b16 %v1109
        %v1258 = vunpack.c.l.b16 %v1110
        %v1259 = vunpack.c.l.b16 %v1111
        %v1260 = vpack.c.b16 %v1257, %v1256
        %v1261 = vpack.c.b16 %v1259, %v1258
        %1264 = vmatprep.subr.bf16.mxu0 0
        %1265 = vmatpush1.bf16.msra.mxu0 %v1260
        %1266 = vmatprep.subr.bf16.mxu0 0
        %1267 = vmatpush1.bf16.msra.mxu0 %v1261
        %1268 = vmatprep.subr.bf16.mxu0 0
        %1269 = vmatpush1.bf16.msra.mxu0 0
        %1270 = vmatprep.subr.bf16.mxu0 0
        %1271 = vmatpush1.bf16.msra.mxu0 0
        %1272 = vmatprep.subr.bf16.mxu0 0
        %1273 = vmatpush1.bf16.msra.mxu0 0
        %1274 = vmatprep.subr.bf16.mxu0 0
        %1275 = vmatpush1.bf16.msra.mxu0 0
        %1276 = vmatprep.subr.bf16.mxu0 0
        %1277 = vmatpush1.bf16.msra.mxu0 0
        %1278 = vmatprep.subr.bf16.mxu0 0
        %1279 = vmatpush1.bf16.msra.mxu0 0
        %1280 = vmatprep.subr.bf16.mxu0 0
        %1281 = vmatpush1.bf16.msra.mxu0 0
        %1282 = vmatprep.subr.bf16.mxu0 0
        %1283 = vmatpush1.bf16.msra.mxu0 0
        %1284 = vmatprep.subr.bf16.mxu0 0
        %1285 = vmatpush1.bf16.msra.mxu0 0
        %1286 = vmatprep.subr.bf16.mxu0 0
        %1287 = vmatpush1.bf16.msra.mxu0 0
        %1288 = vmatprep.subr.bf16.mxu0 0
        %1289 = vmatpush1.bf16.msra.mxu0 0
        %1290 = vmatprep.subr.bf16.mxu0 0
        %1291 = vmatpush1.bf16.msra.mxu0 0
        %1292 = vmatprep.subr.bf16.mxu0 0
        %1293 = vmatpush1.bf16.msra.mxu0 0
        %1294 = vmatprep.subr.bf16.mxu0 0
        %1295 = vmatpush1.bf16.msra.mxu0 0
        %1296 = vmatprep.mubr.bf16.mxu0 0
        %1297 = vmatmul.mubr.bf16.gmra.mrb[0].mxu0 %v1158
        %v1298 = vpop.f32.mrb[0].mxu0
        %v1299 = vadd.f32 %v1135, %v1298
        %v1300 = vpop.f32.mrb[0].mxu0
        %v1301 = vpop.f32.mrb[0].mxu0
        %v1302 = vpop.f32.mrb[0].mxu0
        %1303 = vdwg.mxu0
        %v1308 = vunpack.c.l.b16 %v1112
        %v1309 = vunpack.c.l.b16 %v1113
        %v1310 = vunpack.c.l.b16 %v1114
        %v1311 = vunpack.c.l.b16 %v1115
        %v1312 = vpack.c.b16 %v1309, %v1308
        %v1313 = vpack.c.b16 %v1311, %v1310
        %1316 = vmatprep.subr.bf16.mxu0 0
        %1317 = vmatpush1.bf16.msra.mxu0 %v1312
        %1318 = vmatprep.subr.bf16.mxu0 0
        %1319 = vmatpush1.bf16.msra.mxu0 %v1313
        %1320 = vmatprep.subr.bf16.mxu0 0
        %1321 = vmatpush1.bf16.msra.mxu0 0
        %1322 = vmatprep.subr.bf16.mxu0 0
        %1323 = vmatpush1.bf16.msra.mxu0 0
        %1324 = vmatprep.subr.bf16.mxu0 0
        %1325 = vmatpush1.bf16.msra.mxu0 0
        %1326 = vmatprep.subr.bf16.mxu0 0
        %1327 = vmatpush1.bf16.msra.mxu0 0
        %1328 = vmatprep.subr.bf16.mxu0 0
        %1329 = vmatpush1.bf16.msra.mxu0 0
        %1330 = vmatprep.subr.bf16.mxu0 0
        %1331 = vmatpush1.bf16.msra.mxu0 0
        %1332 = vmatprep.subr.bf16.mxu0 0
        %1333 = vmatpush1.bf16.msra.mxu0 0
        %1334 = vmatprep.subr.bf16.mxu0 0
        %1335 = vmatpush1.bf16.msra.mxu0 0
        %1336 = vmatprep.subr.bf16.mxu0 0
        %1337 = vmatpush1.bf16.msra.mxu0 0
        %1338 = vmatprep.subr.bf16.mxu0 0
        %1339 = vmatpush1.bf16.msra.mxu0 0
        %1340 = vmatprep.subr.bf16.mxu0 0
        %1341 = vmatpush1.bf16.msra.mxu0 0
        %1342 = vmatprep.subr.bf16.mxu0 0
        %1343 = vmatpush1.bf16.msra.mxu0 0
        %1344 = vmatprep.subr.bf16.mxu0 0
        %1345 = vmatpush1.bf16.msra.mxu0 0
        %1346 = vmatprep.subr.bf16.mxu0 0
        %1347 = vmatpush1.bf16.msra.mxu0 0
        %1348 = vmatprep.mubr.bf16.mxu0 0
        %1349 = vmatmul.mubr.bf16.gmra.mrb[0].mxu0 %v1158
        %v1350 = vpop.f32.mrb[0].mxu0
        %v1351 = vadd.f32 %v1139, %v1350
        %v1352 = vpop.f32.mrb[0].mxu0
        %v1353 = vpop.f32.mrb[0].mxu0
        %v1354 = vpop.f32.mrb[0].mxu0
        %1355 = vdwg.mxu0
        %v1356 = vld [vmem:[%s13] sm:$0xf]
        %v1357 = vld [vmem:[%s13 + $0x4] sm:$0xf]
        %v1358 = vld [vmem:[%s13 + $0x8] sm:$0xf]
        %v1359 = vld [vmem:[%s13 + $0xc] sm:$0xf]
        %v1360 = vld [vmem:[%s13 + $0x10] sm:$0xf]
        %v1361 = vld [vmem:[%s13 + $0x14] sm:$0xf]
        %v1362 = vld [vmem:[%s13 + $0x18] sm:$0xf]
        %v1363 = vld [vmem:[%s13 + $0x1c] sm:$0xf]
        %v1364 = vld [vmem:[%s13 + $0x20] sm:$0xf]
        %v1365 = vld [vmem:[%s13 + $0x24] sm:$0xf]
        %v1366 = vld [vmem:[%s13 + $0x28] sm:$0xf]
        %v1367 = vld [vmem:[%s13 + $0x2c] sm:$0xf]
        %v1368 = vld [vmem:[%s13 + $0x30] sm:$0xf]
        %v1369 = vld [vmem:[%s13 + $0x34] sm:$0xf]
        %v1370 = vld [vmem:[%s13 + $0x38] sm:$0xf]
        %v1371 = vld [vmem:[%s13 + $0x3c] sm:$0xf]
        %v1372 = vld [vmem:[%s15] sm:$0x1]
        %v1373 = vld [vmem:[%s15 + $0x1] sm:$0x1]
        %v1374 = vld [vmem:[%s15 + $0x2] sm:$0x1]
        %v1375 = vld [vmem:[%s15 + $0x3] sm:$0x1]
        %v1380 = vlaneseq
        %v1381 = vshrl.u32 %v1380, 7
        %v1382 = vsub.s32 0, %v1381
        %v1383 = vrot.slane %v1372, %v1382
        %v1384 = vlaneseq
        %v1385 = vshrl.u32 %v1384, 7
        %v1386 = vsub.s32 0, %v1385
        %v1387 = vrot.slane %v1373, %v1386
        %v1388 = vlaneseq
        %v1389 = vshrl.u32 %v1388, 7
        %v1390 = vsub.s32 0, %v1389
        %v1391 = vrot.slane %v1374, %v1390
        %v1392 = vlaneseq
        %v1393 = vshrl.u32 %v1392, 7
        %v1394 = vsub.s32 0, %v1393
        %v1395 = vrot.slane %v1375, %v1394
        %v1404 = vunpack.c.l.b16 %v1356
        %v1405 = vunpack.c.l.b16 %v1357
        %v1406 = vunpack.c.l.b16 %v1358
        %v1407 = vunpack.c.l.b16 %v1359
        %v1408 = vpack.c.b16 %v1405, %v1404
        %v1409 = vpack.c.b16 %v1407, %v1406
        %1412 = vmatprep.subr.bf16.mxu0 0
        %1413 = vmatpush1.bf16.msra.mxu0 %v1408
        %1414 = vmatprep.subr.bf16.mxu0 0
        %1415 = vmatpush1.bf16.msra.mxu0 %v1409
        %1416 = vmatprep.subr.bf16.mxu0 0
        %1417 = vmatpush1.bf16.msra.mxu0 0
        %1418 = vmatprep.subr.bf16.mxu0 0
        %1419 = vmatpush1.bf16.msra.mxu0 0
        %1420 = vmatprep.subr.bf16.mxu0 0
        %1421 = vmatpush1.bf16.msra.mxu0 0
        %1422 = vmatprep.subr.bf16.mxu0 0
        %1423 = vmatpush1.bf16.msra.mxu0 0
        %1424 = vmatprep.subr.bf16.mxu0 0
        %1425 = vmatpush1.bf16.msra.mxu0 0
        %1426 = vmatprep.subr.bf16.mxu0 0
        %1427 = vmatpush1.bf16.msra.mxu0 0
        %1428 = vmatprep.subr.bf16.mxu0 0
        %1429 = vmatpush1.bf16.msra.mxu0 0
        %1430 = vmatprep.subr.bf16.mxu0 0
        %1431 = vmatpush1.bf16.msra.mxu0 0
        %1432 = vmatprep.subr.bf16.mxu0 0
        %1433 = vmatpush1.bf16.msra.mxu0 0
        %1434 = vmatprep.subr.bf16.mxu0 0
        %1435 = vmatpush1.bf16.msra.mxu0 0
        %1436 = vmatprep.subr.bf16.mxu0 0
        %1437 = vmatpush1.bf16.msra.mxu0 0
        %1438 = vmatprep.subr.bf16.mxu0 0
        %1439 = vmatpush1.bf16.msra.mxu0 0
        %1440 = vmatprep.subr.bf16.mxu0 0
        %1441 = vmatpush1.bf16.msra.mxu0 0
        %1442 = vmatprep.subr.bf16.mxu0 0
        %1443 = vmatpush1.bf16.msra.mxu0 0
        %1444 = vmatprep.mubr.bf16.mxu0 0
        %1445 = vmatmul.mubr.bf16.gmra.mrb[0].mxu0 %v1158
        %v1446 = vpop.f32.mrb[0].mxu0
        %v1447 = vadd.f32 %v1383, %v1446
        %v1448 = vpop.f32.mrb[0].mxu0
        %v1449 = vpop.f32.mrb[0].mxu0
        %v1450 = vpop.f32.mrb[0].mxu0
        %1451 = vdwg.mxu0
        %v1456 = vunpack.c.l.b16 %v1360
        %v1457 = vunpack.c.l.b16 %v1361
        %v1458 = vunpack.c.l.b16 %v1362
        %v1459 = vunpack.c.l.b16 %v1363
        %v1460 = vpack.c.b16 %v1457, %v1456
        %v1461 = vpack.c.b16 %v1459, %v1458
        %1464 = vmatprep.subr.bf16.mxu0 0
        %1465 = vmatpush1.bf16.msra.mxu0 %v1460
        %1466 = vmatprep.subr.bf16.mxu0 0
        %1467 = vmatpush1.bf16.msra.mxu0 %v1461
        %1468 = vmatprep.subr.bf16.mxu0 0
        %1469 = vmatpush1.bf16.msra.mxu0 0
        %1470 = vmatprep.subr.bf16.mxu0 0
        %1471 = vmatpush1.bf16.msra.mxu0 0
        %1472 = vmatprep.subr.bf16.mxu0 0
        %1473 = vmatpush1.bf16.msra.mxu0 0
        %1474 = vmatprep.subr.bf16.mxu0 0
        %1475 = vmatpush1.bf16.msra.mxu0 0
        %1476 = vmatprep.subr.bf16.mxu0 0
        %1477 = vmatpush1.bf16.msra.mxu0 0
        %1478 = vmatprep.subr.bf16.mxu0 0
        %1479 = vmatpush1.bf16.msra.mxu0 0
        %1480 = vmatprep.subr.bf16.mxu0 0
        %1481 = vmatpush1.bf16.msra.mxu0 0
        %1482 = vmatprep.subr.bf16.mxu0 0
        %1483 = vmatpush1.bf16.msra.mxu0 0
        %1484 = vmatprep.subr.bf16.mxu0 0
        %1485 = vmatpush1.bf16.msra.mxu0 0
        %1486 = vmatprep.subr.bf16.mxu0 0
        %1487 = vmatpush1.bf16.msra.mxu0 0
        %1488 = vmatprep.subr.bf16.mxu0 0
        %1489 = vmatpush1.bf16.msra.mxu0 0
        %1490 = vmatprep.subr.bf16.mxu0 0
        %1491 = vmatpush1.bf16.msra.mxu0 0
        %1492 = vmatprep.subr.bf16.mxu0 0
        %1493 = vmatpush1.bf16.msra.mxu0 0
        %1494 = vmatprep.subr.bf16.mxu0 0
        %1495 = vmatpush1.bf16.msra.mxu0 0
        %1496 = vmatprep.mubr.bf16.mxu0 0
        %1497 = vmatmul.mubr.bf16.gmra.mrb[0].mxu0 %v1158
        %v1498 = vpop.f32.mrb[0].mxu0
        %v1499 = vadd.f32 %v1387, %v1498
        %v1500 = vpop.f32.mrb[0].mxu0
        %v1501 = vpop.f32.mrb[0].mxu0
        %v1502 = vpop.f32.mrb[0].mxu0
        %1503 = vdwg.mxu0
        %v1508 = vunpack.c.l.b16 %v1364
        %v1509 = vunpack.c.l.b16 %v1365
        %v1510 = vunpack.c.l.b16 %v1366
        %v1511 = vunpack.c.l.b16 %v1367
        %v1512 = vpack.c.b16 %v1509, %v1508
        %v1513 = vpack.c.b16 %v1511, %v1510
        %1516 = vmatprep.subr.bf16.mxu0 0
        %1517 = vmatpush1.bf16.msra.mxu0 %v1512
        %1518 = vmatprep.subr.bf16.mxu0 0
        %1519 = vmatpush1.bf16.msra.mxu0 %v1513
        %1520 = vmatprep.subr.bf16.mxu0 0
        %1521 = vmatpush1.bf16.msra.mxu0 0
        %1522 = vmatprep.subr.bf16.mxu0 0
        %1523 = vmatpush1.bf16.msra.mxu0 0
        %1524 = vmatprep.subr.bf16.mxu0 0
        %1525 = vmatpush1.bf16.msra.mxu0 0
        %1526 = vmatprep.subr.bf16.mxu0 0
        %1527 = vmatpush1.bf16.msra.mxu0 0
        %1528 = vmatprep.subr.bf16.mxu0 0
        %1529 = vmatpush1.bf16.msra.mxu0 0
        %1530 = vmatprep.subr.bf16.mxu0 0
        %1531 = vmatpush1.bf16.msra.mxu0 0
        %1532 = vmatprep.subr.bf16.mxu0 0
        %1533 = vmatpush1.bf16.msra.mxu0 0
        %1534 = vmatprep.subr.bf16.mxu0 0
        %1535 = vmatpush1.bf16.msra.mxu0 0
        %1536 = vmatprep.subr.bf16.mxu0 0
        %1537 = vmatpush1.bf16.msra.mxu0 0
        %1538 = vmatprep.subr.bf16.mxu0 0
        %1539 = vmatpush1.bf16.msra.mxu0 0
        %1540 = vmatprep.subr.bf16.mxu0 0
        %1541 = vmatpush1.bf16.msra.mxu0 0
        %1542 = vmatprep.subr.bf16.mxu0 0
        %1543 = vmatpush1.bf16.msra.mxu0 0
        %1544 = vmatprep.subr.bf16.mxu0 0
        %1545 = vmatpush1.bf16.msra.mxu0 0
        %1546 = vmatprep.subr.bf16.mxu0 0
        %1547 = vmatpush1.bf16.msra.mxu0 0
        %1548 = vmatprep.mubr.bf16.mxu0 0
        %1549 = vmatmul.mubr.bf16.gmra.mrb[0].mxu0 %v1158
        %v1550 = vpop.f32.mrb[0].mxu0
        %v1551 = vadd.f32 %v1391, %v1550
        %v1552 = vpop.f32.mrb[0].mxu0
        %v1553 = vpop.f32.mrb[0].mxu0
        %v1554 = vpop.f32.mrb[0].mxu0
        %1555 = vdwg.mxu0
        %v1560 = vunpack.c.l.b16 %v1368
        %v1561 = vunpack.c.l.b16 %v1369
        %v1562 = vunpack.c.l.b16 %v1370
        %v1563 = vunpack.c.l.b16 %v1371
        %v1564 = vpack.c.b16 %v1561, %v1560
        %v1565 = vpack.c.b16 %v1563, %v1562
        %1568 = vmatprep.subr.bf16.mxu0 0
        %1569 = vmatpush1.bf16.msra.mxu0 %v1564
        %1570 = vmatprep.subr.bf16.mxu0 0
        %1571 = vmatpush1.bf16.msra.mxu0 %v1565
        %1572 = vmatprep.subr.bf16.mxu0 0
        %1573 = vmatpush1.bf16.msra.mxu0 0
        %1574 = vmatprep.subr.bf16.mxu0 0
        %1575 = vmatpush1.bf16.msra.mxu0 0
        %1576 = vmatprep.subr.bf16.mxu0 0
        %1577 = vmatpush1.bf16.msra.mxu0 0
        %1578 = vmatprep.subr.bf16.mxu0 0
        %1579 = vmatpush1.bf16.msra.mxu0 0
        %1580 = vmatprep.subr.bf16.mxu0 0
        %1581 = vmatpush1.bf16.msra.mxu0 0
        %1582 = vmatprep.subr.bf16.mxu0 0
        %1583 = vmatpush1.bf16.msra.mxu0 0
        %1584 = vmatprep.subr.bf16.mxu0 0
        %1585 = vmatpush1.bf16.msra.mxu0 0
        %1586 = vmatprep.subr.bf16.mxu0 0
        %1587 = vmatpush1.bf16.msra.mxu0 0
        %1588 = vmatprep.subr.bf16.mxu0 0
        %1589 = vmatpush1.bf16.msra.mxu0 0
        %1590 = vmatprep.subr.bf16.mxu0 0
        %1591 = vmatpush1.bf16.msra.mxu0 0
        %1592 = vmatprep.subr.bf16.mxu0 0
        %1593 = vmatpush1.bf16.msra.mxu0 0
        %1594 = vmatprep.subr.bf16.mxu0 0
        %1595 = vmatpush1.bf16.msra.mxu0 0
        %1596 = vmatprep.subr.bf16.mxu0 0
        %1597 = vmatpush1.bf16.msra.mxu0 0
        %1598 = vmatprep.subr.bf16.mxu0 0
        %1599 = vmatpush1.bf16.msra.mxu0 0
        %1600 = vmatprep.mubr.bf16.mxu0 0
        %1601 = vmatmul.mubr.bf16.gmra.mrb[0].mxu0 %v1158
        %v1602 = vpop.f32.mrb[0].mxu0
        %v1603 = vadd.f32 %v1395, %v1602
        %v1604 = vpop.f32.mrb[0].mxu0
        %v1605 = vpop.f32.mrb[0].mxu0
        %v1606 = vpop.f32.mrb[0].mxu0
        %1607 = vdwg.mxu0
        %v1608 = vld [vmem:[%s17] sm:$0xf]
        %v1609 = vld [vmem:[%s17 + $0x4] sm:$0xf]
        %v1610 = vld [vmem:[%s17 + $0x8] sm:$0xf]
        %v1611 = vld [vmem:[%s17 + $0xc] sm:$0xf]
        %v1612 = vld [vmem:[%s17 + $0x10] sm:$0xf]
        %v1613 = vld [vmem:[%s17 + $0x14] sm:$0xf]
        %v1614 = vld [vmem:[%s17 + $0x18] sm:$0xf]
        %v1615 = vld [vmem:[%s17 + $0x1c] sm:$0xf]
        %v1616 = vld [vmem:[%s17 + $0x20] sm:$0xf]
        %v1617 = vld [vmem:[%s17 + $0x24] sm:$0xf]
        %v1618 = vld [vmem:[%s17 + $0x28] sm:$0xf]
        %v1619 = vld [vmem:[%s17 + $0x2c] sm:$0xf]
        %v1620 = vld [vmem:[%s17 + $0x30] sm:$0xf]
        %v1621 = vld [vmem:[%s17 + $0x34] sm:$0xf]
        %v1622 = vld [vmem:[%s17 + $0x38] sm:$0xf]
        %v1623 = vld [vmem:[%s17 + $0x3c] sm:$0xf]
        %v1624 = vld [vmem:[%s19] sm:$0x1]
        %v1625 = vld [vmem:[%s19 + $0x1] sm:$0x1]
        %v1626 = vld [vmem:[%s19 + $0x2] sm:$0x1]
        %v1627 = vld [vmem:[%s19 + $0x3] sm:$0x1]
        %v1632 = vlaneseq
        %v1633 = vshrl.u32 %v1632, 7
        %v1634 = vsub.s32 0, %v1633
        %v1635 = vrot.slane %v1624, %v1634
        %v1636 = vlaneseq
        %v1637 = vshrl.u32 %v1636, 7
        %v1638 = vsub.s32 0, %v1637
        %v1639 = vrot.slane %v1625, %v1638
        %v1640 = vlaneseq
        %v1641 = vshrl.u32 %v1640, 7
        %v1642 = vsub.s32 0, %v1641
        %v1643 = vrot.slane %v1626, %v1642
        %v1644 = vlaneseq
        %v1645 = vshrl.u32 %v1644, 7
        %v1646 = vsub.s32 0, %v1645
        %v1647 = vrot.slane %v1627, %v1646
        %v1656 = vunpack.c.l.b16 %v1608
        %v1657 = vunpack.c.l.b16 %v1609
        %v1658 = vunpack.c.l.b16 %v1610
        %v1659 = vunpack.c.l.b16 %v1611
        %v1660 = vpack.c.b16 %v1657, %v1656
        %v1661 = vpack.c.b16 %v1659, %v1658
        %1664 = vmatprep.subr.bf16.mxu0 0
        %1665 = vmatpush1.bf16.msra.mxu0 %v1660
        %1666 = vmatprep.subr.bf16.mxu0 0
        %1667 = vmatpush1.bf16.msra.mxu0 %v1661
        %1668 = vmatprep.subr.bf16.mxu0 0
        %1669 = vmatpush1.bf16.msra.mxu0 0
        %1670 = vmatprep.subr.bf16.mxu0 0
        %1671 = vmatpush1.bf16.msra.mxu0 0
        %1672 = vmatprep.subr.bf16.mxu0 0
        %1673 = vmatpush1.bf16.msra.mxu0 0
        %1674 = vmatprep.subr.bf16.mxu0 0
        %1675 = vmatpush1.bf16.msra.mxu0 0
        %1676 = vmatprep.subr.bf16.mxu0 0
        %1677 = vmatpush1.bf16.msra.mxu0 0
        %1678 = vmatprep.subr.bf16.mxu0 0
        %1679 = vmatpush1.bf16.msra.mxu0 0
        %1680 = vmatprep.subr.bf16.mxu0 0
        %1681 = vmatpush1.bf16.msra.mxu0 0
        %1682 = vmatprep.subr.bf16.mxu0 0
        %1683 = vmatpush1.bf16.msra.mxu0 0
        %1684 = vmatprep.subr.bf16.mxu0 0
        %1685 = vmatpush1.bf16.msra.mxu0 0
        %1686 = vmatprep.subr.bf16.mxu0 0
        %1687 = vmatpush1.bf16.msra.mxu0 0
        %1688 = vmatprep.subr.bf16.mxu0 0
        %1689 = vmatpush1.bf16.msra.mxu0 0
        %1690 = vmatprep.subr.bf16.mxu0 0
        %1691 = vmatpush1.bf16.msra.mxu0 0
        %1692 = vmatprep.subr.bf16.mxu0 0
        %1693 = vmatpush1.bf16.msra.mxu0 0
        %1694 = vmatprep.subr.bf16.mxu0 0
        %1695 = vmatpush1.bf16.msra.mxu0 0
        %1696 = vmatprep.mubr.bf16.mxu0 0
        %1697 = vmatmul.mubr.bf16.gmra.mrb[0].mxu0 %v1158
        %v1698 = vpop.f32.mrb[0].mxu0
        %v1699 = vadd.f32 %v1635, %v1698
        %v1700 = vpop.f32.mrb[0].mxu0
        %v1701 = vpop.f32.mrb[0].mxu0
        %v1702 = vpop.f32.mrb[0].mxu0
        %1703 = vdwg.mxu0
        %v1708 = vunpack.c.l.b16 %v1612
        %v1709 = vunpack.c.l.b16 %v1613
        %v1710 = vunpack.c.l.b16 %v1614
        %v1711 = vunpack.c.l.b16 %v1615
        %v1712 = vpack.c.b16 %v1709, %v1708
        %v1713 = vpack.c.b16 %v1711, %v1710
        %1716 = vmatprep.subr.bf16.mxu0 0
        %1717 = vmatpush1.bf16.msra.mxu0 %v1712
        %1718 = vmatprep.subr.bf16.mxu0 0
        %1719 = vmatpush1.bf16.msra.mxu0 %v1713
        %1720 = vmatprep.subr.bf16.mxu0 0
        %1721 = vmatpush1.bf16.msra.mxu0 0
        %1722 = vmatprep.subr.bf16.mxu0 0
        %1723 = vmatpush1.bf16.msra.mxu0 0
        %1724 = vmatprep.subr.bf16.mxu0 0
        %1725 = vmatpush1.bf16.msra.mxu0 0
        %1726 = vmatprep.subr.bf16.mxu0 0
        %1727 = vmatpush1.bf16.msra.mxu0 0
        %1728 = vmatprep.subr.bf16.mxu0 0
        %1729 = vmatpush1.bf16.msra.mxu0 0
        %1730 = vmatprep.subr.bf16.mxu0 0
        %1731 = vmatpush1.bf16.msra.mxu0 0
        %1732 = vmatprep.subr.bf16.mxu0 0
        %1733 = vmatpush1.bf16.msra.mxu0 0
        %1734 = vmatprep.subr.bf16.mxu0 0
        %1735 = vmatpush1.bf16.msra.mxu0 0
        %1736 = vmatprep.subr.bf16.mxu0 0
        %1737 = vmatpush1.bf16.msra.mxu0 0
        %1738 = vmatprep.subr.bf16.mxu0 0
        %1739 = vmatpush1.bf16.msra.mxu0 0
        %1740 = vmatprep.subr.bf16.mxu0 0
        %1741 = vmatpush1.bf16.msra.mxu0 0
        %1742 = vmatprep.subr.bf16.mxu0 0
        %1743 = vmatpush1.bf16.msra.mxu0 0
        %1744 = vmatprep.subr.bf16.mxu0 0
        %1745 = vmatpush1.bf16.msra.mxu0 0
        %1746 = vmatprep.subr.bf16.mxu0 0
        %1747 = vmatpush1.bf16.msra.mxu0 0
        %1748 = vmatprep.mubr.bf16.mxu0 0
        %1749 = vmatmul.mubr.bf16.gmra.mrb[0].mxu0 %v1158
        %v1750 = vpop.f32.mrb[0].mxu0
        %v1751 = vadd.f32 %v1639, %v1750
        %v1752 = vpop.f32.mrb[0].mxu0
        %v1753 = vpop.f32.mrb[0].mxu0
        %v1754 = vpop.f32.mrb[0].mxu0
        %1755 = vdwg.mxu0
        %v1760 = vunpack.c.l.b16 %v1616
        %v1761 = vunpack.c.l.b16 %v1617
        %v1762 = vunpack.c.l.b16 %v1618
        %v1763 = vunpack.c.l.b16 %v1619
        %v1764 = vpack.c.b16 %v1761, %v1760
        %v1765 = vpack.c.b16 %v1763, %v1762
        %1768 = vmatprep.subr.bf16.mxu0 0
        %1769 = vmatpush1.bf16.msra.mxu0 %v1764
        %1770 = vmatprep.subr.bf16.mxu0 0
        %1771 = vmatpush1.bf16.msra.mxu0 %v1765
        %1772 = vmatprep.subr.bf16.mxu0 0
        %1773 = vmatpush1.bf16.msra.mxu0 0
        %1774 = vmatprep.subr.bf16.mxu0 0
        %1775 = vmatpush1.bf16.msra.mxu0 0
        %1776 = vmatprep.subr.bf16.mxu0 0
        %1777 = vmatpush1.bf16.msra.mxu0 0
        %1778 = vmatprep.subr.bf16.mxu0 0
        %1779 = vmatpush1.bf16.msra.mxu0 0
        %1780 = vmatprep.subr.bf16.mxu0 0
        %1781 = vmatpush1.bf16.msra.mxu0 0
        %1782 = vmatprep.subr.bf16.mxu0 0
        %1783 = vmatpush1.bf16.msra.mxu0 0
        %1784 = vmatprep.subr.bf16.mxu0 0
        %1785 = vmatpush1.bf16.msra.mxu0 0
        %1786 = vmatprep.subr.bf16.mxu0 0
        %1787 = vmatpush1.bf16.msra.mxu0 0
        %1788 = vmatprep.subr.bf16.mxu0 0
        %1789 = vmatpush1.bf16.msra.mxu0 0
        %1790 = vmatprep.subr.bf16.mxu0 0
        %1791 = vmatpush1.bf16.msra.mxu0 0
        %1792 = vmatprep.subr.bf16.mxu0 0
        %1793 = vmatpush1.bf16.msra.mxu0 0
        %1794 = vmatprep.subr.bf16.mxu0 0
        %1795 = vmatpush1.bf16.msra.mxu0 0
        %1796 = vmatprep.subr.bf16.mxu0 0
        %1797 = vmatpush1.bf16.msra.mxu0 0
        %1798 = vmatprep.subr.bf16.mxu0 0
        %1799 = vmatpush1.bf16.msra.mxu0 0
        %1800 = vmatprep.mubr.bf16.mxu0 0
        %1801 = vmatmul.mubr.bf16.gmra.mrb[0].mxu0 %v1158
        %v1802 = vpop.f32.mrb[0].mxu0
        %v1803 = vadd.f32 %v1643, %v1802
        %v1804 = vpop.f32.mrb[0].mxu0
        %v1805 = vpop.f32.mrb[0].mxu0
        %v1806 = vpop.f32.mrb[0].mxu0
        %1807 = vdwg.mxu0
        %v1812 = vunpack.c.l.b16 %v1620
        %v1813 = vunpack.c.l.b16 %v1621
        %v1814 = vunpack.c.l.b16 %v1622
        %v1815 = vunpack.c.l.b16 %v1623
        %v1816 = vpack.c.b16 %v1813, %v1812
        %v1817 = vpack.c.b16 %v1815, %v1814
        %1820 = vmatprep.subr.bf16.mxu0 0
        %1821 = vmatpush1.bf16.msra.mxu0 %v1816
        %1822 = vmatprep.subr.bf16.mxu0 0
        %1823 = vmatpush1.bf16.msra.mxu0 %v1817
        %1824 = vmatprep.subr.bf16.mxu0 0
        %1825 = vmatpush1.bf16.msra.mxu0 0
        %1826 = vmatprep.subr.bf16.mxu0 0
        %1827 = vmatpush1.bf16.msra.mxu0 0
        %1828 = vmatprep.subr.bf16.mxu0 0
        %1829 = vmatpush1.bf16.msra.mxu0 0
        %1830 = vmatprep.subr.bf16.mxu0 0
        %1831 = vmatpush1.bf16.msra.mxu0 0
        %1832 = vmatprep.subr.bf16.mxu0 0
        %1833 = vmatpush1.bf16.msra.mxu0 0
        %1834 = vmatprep.subr.bf16.mxu0 0
        %1835 = vmatpush1.bf16.msra.mxu0 0
        %1836 = vmatprep.subr.bf16.mxu0 0
        %1837 = vmatpush1.bf16.msra.mxu0 0
        %1838 = vmatprep.subr.bf16.mxu0 0
        %1839 = vmatpush1.bf16.msra.mxu0 0
        %1840 = vmatprep.subr.bf16.mxu0 0
        %1841 = vmatpush1.bf16.msra.mxu0 0
        %1842 = vmatprep.subr.bf16.mxu0 0
        %1843 = vmatpush1.bf16.msra.mxu0 0
        %1844 = vmatprep.subr.bf16.mxu0 0
        %1845 = vmatpush1.bf16.msra.mxu0 0
        %1846 = vmatprep.subr.bf16.mxu0 0
        %1847 = vmatpush1.bf16.msra.mxu0 0
        %1848 = vmatprep.subr.bf16.mxu0 0
        %1849 = vmatpush1.bf16.msra.mxu0 0
        %1850 = vmatprep.subr.bf16.mxu0 0
        %1851 = vmatpush1.bf16.msra.mxu0 0
        %1852 = vmatprep.mubr.bf16.mxu0 0
        %1853 = vmatmul.mubr.bf16.gmra.mrb[0].mxu0 %v1158
        %v1854 = vpop.f32.mrb[0].mxu0
        %v1855 = vadd.f32 %v1647, %v1854
        %v1856 = vpop.f32.mrb[0].mxu0
        %v1857 = vpop.f32.mrb[0].mxu0
        %v1858 = vpop.f32.mrb[0].mxu0
        %1859 = vdwg.mxu0
        %v1860 = vmul.f32 %v1195, 0.35355338
        %v1861 = vmul.f32 %v1247, 0.35355338
        %v1862 = vmul.f32 %v1299, 0.35355338
        %v1863 = vmul.f32 %v1351, 0.35355338
        %v1864 = vpack.c.bf16 %v1860, %v1860
        %v1865 = vpack.c.bf16 %v1861, %v1861
        %v1866 = vpack.c.bf16 %v1862, %v1862
        %v1867 = vpack.c.bf16 %v1863, %v1863
        %v1868 = vpack.c.bf16 %v1447, %v1447
        %v1869 = vpack.c.bf16 %v1499, %v1499
        %v1870 = vpack.c.bf16 %v1551, %v1551
        %v1871 = vpack.c.bf16 %v1603, %v1603
        %v1873 = vlaneseq
        %v1874 = vshrl.u32 %v1873, 7
        %v1875 = vsub.s32 0, %v1874
        %v1876 = vrot.slane %v1096, %v1875
        %vm1878 = vcmask 64512
        %v1880 = vsel %vm1878, %v1864, 0
        %v1883 = vsel %vm1878, %v1868, 0
        %1885 = vmatprep.subr.bf16.mxu0 0
        %1886 = vmatpush1.bf16.xpose.msra.mxu0 %v1883
        %1887 = vmatprep.subr.bf16.mxu0 0
        %1888 = vmatpush1.bf16.xpose.msra.mxu0 0
        %1889 = vmatprep.subr.bf16.mxu0 0
        %1890 = vmatpush1.bf16.xpose.msra.mxu0 0
        %1891 = vmatprep.subr.bf16.mxu0 0
        %1892 = vmatpush1.bf16.xpose.msra.mxu0 0
        %1893 = vmatprep.subr.bf16.mxu0 0
        %1894 = vmatpush1.bf16.xpose.msra.mxu0 0
        %1895 = vmatprep.subr.bf16.mxu0 0
        %1896 = vmatpush1.bf16.xpose.msra.mxu0 0
        %1897 = vmatprep.subr.bf16.mxu0 0
        %1898 = vmatpush1.bf16.xpose.msra.mxu0 0
        %1899 = vmatprep.subr.bf16.mxu0 0
        %1900 = vmatpush1.bf16.xpose.msra.mxu0 0
        %1901 = vmatprep.subr.bf16.mxu0 0
        %1902 = vmatpush1.bf16.xpose.msra.mxu0 0
        %1903 = vmatprep.subr.bf16.mxu0 0
        %1904 = vmatpush1.bf16.xpose.msra.mxu0 0
        %1905 = vmatprep.subr.bf16.mxu0 0
        %1906 = vmatpush1.bf16.xpose.msra.mxu0 0
        %1907 = vmatprep.subr.bf16.mxu0 0
        %1908 = vmatpush1.bf16.xpose.msra.mxu0 0
        %1909 = vmatprep.subr.bf16.mxu0 0
        %1910 = vmatpush1.bf16.xpose.msra.mxu0 0
        %1911 = vmatprep.subr.bf16.mxu0 0
        %1912 = vmatpush1.bf16.xpose.msra.mxu0 0
        %1913 = vmatprep.subr.bf16.mxu0 0
        %1914 = vmatpush1.bf16.xpose.msra.mxu0 0
        %1915 = vmatprep.subr.bf16.mxu0 0
        %1916 = vmatpush1.bf16.xpose.msra.mxu0 0
        %1917 = vmatprep.mubr.bf16.mxu0 0
        %1918 = vmatmul.mubr.bf16.gmra.mrb[0].mxu0 %v1880
        %v1919 = vpop.f32.mrb[0].mxu0
        %v1920 = vadd.f32 %v1876, %v1919
        %v1921 = vpop.f32.mrb[0].mxu0
        %v1922 = vpop.f32.mrb[0].mxu0
        %v1923 = vpop.f32.mrb[0].mxu0
        %1924 = vdwg.mxu0
        %v1926 = vsel %vm1878, %v1865, 0
        %v1929 = vsel %vm1878, %v1869, 0
        %1931 = vmatprep.subr.bf16.mxu0 0
        %1932 = vmatpush1.bf16.xpose.msra.mxu0 %v1929
        %1933 = vmatprep.subr.bf16.mxu0 0
        %1934 = vmatpush1.bf16.xpose.msra.mxu0 0
        %1935 = vmatprep.subr.bf16.mxu0 0
        %1936 = vmatpush1.bf16.xpose.msra.mxu0 0
        %1937 = vmatprep.subr.bf16.mxu0 0
        %1938 = vmatpush1.bf16.xpose.msra.mxu0 0
        %1939 = vmatprep.subr.bf16.mxu0 0
        %1940 = vmatpush1.bf16.xpose.msra.mxu0 0
        %1941 = vmatprep.subr.bf16.mxu0 0
        %1942 = vmatpush1.bf16.xpose.msra.mxu0 0
        %1943 = vmatprep.subr.bf16.mxu0 0
        %1944 = vmatpush1.bf16.xpose.msra.mxu0 0
        %1945 = vmatprep.subr.bf16.mxu0 0
        %1946 = vmatpush1.bf16.xpose.msra.mxu0 0
        %1947 = vmatprep.subr.bf16.mxu0 0
        %1948 = vmatpush1.bf16.xpose.msra.mxu0 0
        %1949 = vmatprep.subr.bf16.mxu0 0
        %1950 = vmatpush1.bf16.xpose.msra.mxu0 0
        %1951 = vmatprep.subr.bf16.mxu0 0
        %1952 = vmatpush1.bf16.xpose.msra.mxu0 0
        %1953 = vmatprep.subr.bf16.mxu0 0
        %1954 = vmatpush1.bf16.xpose.msra.mxu0 0
        %1955 = vmatprep.subr.bf16.mxu0 0
        %1956 = vmatpush1.bf16.xpose.msra.mxu0 0
        %1957 = vmatprep.subr.bf16.mxu0 0
        %1958 = vmatpush1.bf16.xpose.msra.mxu0 0
        %1959 = vmatprep.subr.bf16.mxu0 0
        %1960 = vmatpush1.bf16.xpose.msra.mxu0 0
        %1961 = vmatprep.subr.bf16.mxu0 0
        %1962 = vmatpush1.bf16.xpose.msra.mxu0 0
        %1963 = vmatprep.mubr.bf16.mxu0 0
        %1964 = vmatmul.mubr.bf16.gmra.mrb[0].mxu0 %v1926
        %v1965 = vpop.f32.mrb[0].mxu0
        %v1966 = vadd.f32 %v1876, %v1965
        %v1967 = vpop.f32.mrb[0].mxu0
        %v1968 = vpop.f32.mrb[0].mxu0
        %v1969 = vpop.f32.mrb[0].mxu0
        %1970 = vdwg.mxu0
        %v1972 = vsel %vm1878, %v1866, 0
        %v1975 = vsel %vm1878, %v1870, 0
        %1977 = vmatprep.subr.bf16.mxu0 0
        %1978 = vmatpush1.bf16.xpose.msra.mxu0 %v1975
        %1979 = vmatprep.subr.bf16.mxu0 0
        %1980 = vmatpush1.bf16.xpose.msra.mxu0 0
        %1981 = vmatprep.subr.bf16.mxu0 0
        %1982 = vmatpush1.bf16.xpose.msra.mxu0 0
        %1983 = vmatprep.subr.bf16.mxu0 0
        %1984 = vmatpush1.bf16.xpose.msra.mxu0 0
        %1985 = vmatprep.subr.bf16.mxu0 0
        %1986 = vmatpush1.bf16.xpose.msra.mxu0 0
        %1987 = vmatprep.subr.bf16.mxu0 0
        %1988 = vmatpush1.bf16.xpose.msra.mxu0 0
        %1989 = vmatprep.subr.bf16.mxu0 0
        %1990 = vmatpush1.bf16.xpose.msra.mxu0 0
        %1991 = vmatprep.subr.bf16.mxu0 0
        %1992 = vmatpush1.bf16.xpose.msra.mxu0 0
        %1993 = vmatprep.subr.bf16.mxu0 0
        %1994 = vmatpush1.bf16.xpose.msra.mxu0 0
        %1995 = vmatprep.subr.bf16.mxu0 0
        %1996 = vmatpush1.bf16.xpose.msra.mxu0 0
        %1997 = vmatprep.subr.bf16.mxu0 0
        %1998 = vmatpush1.bf16.xpose.msra.mxu0 0
        %1999 = vmatprep.subr.bf16.mxu0 0
        %2000 = vmatpush1.bf16.xpose.msra.mxu0 0
        %2001 = vmatprep.subr.bf16.mxu0 0
        %2002 = vmatpush1.bf16.xpose.msra.mxu0 0
        %2003 = vmatprep.subr.bf16.mxu0 0
        %2004 = vmatpush1.bf16.xpose.msra.mxu0 0
        %2005 = vmatprep.subr.bf16.mxu0 0
        %2006 = vmatpush1.bf16.xpose.msra.mxu0 0
        %2007 = vmatprep.subr.bf16.mxu0 0
        %2008 = vmatpush1.bf16.xpose.msra.mxu0 0
        %2009 = vmatprep.mubr.bf16.mxu0 0
        %2010 = vmatmul.mubr.bf16.gmra.mrb[0].mxu0 %v1972
        %v2011 = vpop.f32.mrb[0].mxu0
        %v2012 = vadd.f32 %v1876, %v2011
        %v2013 = vpop.f32.mrb[0].mxu0
        %v2014 = vpop.f32.mrb[0].mxu0
        %v2015 = vpop.f32.mrb[0].mxu0
        %2016 = vdwg.mxu0
        %v2018 = vsel %vm1878, %v1867, 0
        %v2021 = vsel %vm1878, %v1871, 0
        %2023 = vmatprep.subr.bf16.mxu0 0
        %2024 = vmatpush1.bf16.xpose.msra.mxu0 %v2021
        %2025 = vmatprep.subr.bf16.mxu0 0
        %2026 = vmatpush1.bf16.xpose.msra.mxu0 0
        %2027 = vmatprep.subr.bf16.mxu0 0
        %2028 = vmatpush1.bf16.xpose.msra.mxu0 0
        %2029 = vmatprep.subr.bf16.mxu0 0
        %2030 = vmatpush1.bf16.xpose.msra.mxu0 0
        %2031 = vmatprep.subr.bf16.mxu0 0
        %2032 = vmatpush1.bf16.xpose.msra.mxu0 0
        %2033 = vmatprep.subr.bf16.mxu0 0
        %2034 = vmatpush1.bf16.xpose.msra.mxu0 0
        %2035 = vmatprep.subr.bf16.mxu0 0
        %2036 = vmatpush1.bf16.xpose.msra.mxu0 0
        %2037 = vmatprep.subr.bf16.mxu0 0
        %2038 = vmatpush1.bf16.xpose.msra.mxu0 0
        %2039 = vmatprep.subr.bf16.mxu0 0
        %2040 = vmatpush1.bf16.xpose.msra.mxu0 0
        %2041 = vmatprep.subr.bf16.mxu0 0
        %2042 = vmatpush1.bf16.xpose.msra.mxu0 0
        %2043 = vmatprep.subr.bf16.mxu0 0
        %2044 = vmatpush1.bf16.xpose.msra.mxu0 0
        %2045 = vmatprep.subr.bf16.mxu0 0
        %2046 = vmatpush1.bf16.xpose.msra.mxu0 0
        %2047 = vmatprep.subr.bf16.mxu0 0
        %2048 = vmatpush1.bf16.xpose.msra.mxu0 0
        %2049 = vmatprep.subr.bf16.mxu0 0
        %2050 = vmatpush1.bf16.xpose.msra.mxu0 0
        %2051 = vmatprep.subr.bf16.mxu0 0
        %2052 = vmatpush1.bf16.xpose.msra.mxu0 0
        %2053 = vmatprep.subr.bf16.mxu0 0
        %2054 = vmatpush1.bf16.xpose.msra.mxu0 0
        %2055 = vmatprep.mubr.bf16.mxu0 0
        %2056 = vmatmul.mubr.bf16.gmra.mrb[0].mxu0 %v2018
        %v2057 = vpop.f32.mrb[0].mxu0
        %v2058 = vadd.f32 %v1876, %v2057
        %v2059 = vpop.f32.mrb[0].mxu0
        %v2060 = vpop.f32.mrb[0].mxu0
        %v2061 = vpop.f32.mrb[0].mxu0
        %2062 = vdwg.mxu0
        %v2063 = vsel %vm1878, %v1920, -inf
        %2064 = vmax.xlane.f32.xlu0 %v2063
        %v2065 = vpop.xlane.xlu0 %2064
        %v2066 = vsel %vm1878, %v1966, -inf
        %2067 = vmax.xlane.f32.xlu0 %v2066
        %v2068 = vpop.xlane.xlu0 %2067
        %v2069 = vsel %vm1878, %v2012, -inf
        %2070 = vmax.xlane.f32.xlu0 %v2069
        %v2071 = vpop.xlane.xlu0 %2070
        %v2072 = vsel %vm1878, %v2058, -inf
        %2073 = vmax.xlane.f32.xlu0 %v2072
        %v2074 = vpop.xlane.xlu0 %2073
        %v2075 = vsub.f32 %v1920, %v2065
        %v2076 = vsub.f32 %v1966, %v2068
        %v2077 = vsub.f32 %v2012, %v2071
        %v2078 = vsub.f32 %v2058, %v2074
        %v2079 = vmul.f32 %v2075, 1.442695
        %v2080 = vpow.pop %v2079
        %v2081 = vmul.f32 %v2076, 1.442695
        %v2082 = vpow.pop %v2081
        %v2083 = vmul.f32 %v2077, 1.442695
        %v2084 = vpow.pop %v2083
        %v2085 = vmul.f32 %v2078, 1.442695
        %v2086 = vpow.pop %v2085
        %v2087 = vsel %vm1878, %v2080, 0.0
        %2088 = vadd.xlane.f32.xlu0 %v2087
        %v2089 = vpop.xlane.xlu0 %2088
        %v2090 = vsel %vm1878, %v2082, 0.0
        %2091 = vadd.xlane.f32.xlu0 %v2090
        %v2092 = vpop.xlane.xlu0 %2091
        %v2093 = vsel %vm1878, %v2084, 0.0
        %2094 = vadd.xlane.f32.xlu0 %v2093
        %v2095 = vpop.xlane.xlu0 %2094
        %v2096 = vsel %vm1878, %v2086, 0.0
        %2097 = vadd.xlane.f32.xlu0 %v2096
        %v2098 = vpop.xlane.xlu0 %2097
        %v2099 = vrcp.pop %v2089
        %v2100 = vrcp.pop %v2092
        %v2101 = vrcp.pop %v2095
        %v2102 = vrcp.pop %v2098
        %v2103 = vmul.f32 %v2080, %v2099
        %v2104 = vmul.f32 %v2082, %v2100
        %v2105 = vmul.f32 %v2084, %v2101
        %v2106 = vmul.f32 %v2086, %v2102
        %v2107 = vpack.c.bf16 %v2103, %v2103
        %v2108 = vpack.c.bf16 %v2104, %v2104
        %v2109 = vpack.c.bf16 %v2105, %v2105
        %v2110 = vpack.c.bf16 %v2106, %v2106
        %v2111 = vpack.c.bf16 %v1699, %v1699
        %v2112 = vpack.c.bf16 %v1751, %v1751
        %v2113 = vpack.c.bf16 %v1803, %v1803
        %v2114 = vpack.c.bf16 %v1855, %v1855
        %v2116 = vsel %vm1878, %v2107, 0
        %vm2118 = vcmask 1043456
        %v2120 = vsel %vm2118, %v2111, 0
        %2122 = vmatprep.subr.bf16.mxu0 0
        %2123 = vmatpush1.bf16.msra.mxu0 %v2120
        %2124 = vmatprep.subr.bf16.mxu0 0
        %2125 = vmatpush1.bf16.msra.mxu0 0
        %2126 = vmatprep.subr.bf16.mxu0 0
        %2127 = vmatpush1.bf16.msra.mxu0 0
        %2128 = vmatprep.subr.bf16.mxu0 0
        %2129 = vmatpush1.bf16.msra.mxu0 0
        %2130 = vmatprep.subr.bf16.mxu0 0
        %2131 = vmatpush1.bf16.msra.mxu0 0
        %2132 = vmatprep.subr.bf16.mxu0 0
        %2133 = vmatpush1.bf16.msra.mxu0 0
        %2134 = vmatprep.subr.bf16.mxu0 0
        %2135 = vmatpush1.bf16.msra.mxu0 0
        %2136 = vmatprep.subr.bf16.mxu0 0
        %2137 = vmatpush1.bf16.msra.mxu0 0
        %2138 = vmatprep.subr.bf16.mxu0 0
        %2139 = vmatpush1.bf16.msra.mxu0 0
        %2140 = vmatprep.subr.bf16.mxu0 0
        %2141 = vmatpush1.bf16.msra.mxu0 0
        %2142 = vmatprep.subr.bf16.mxu0 0
        %2143 = vmatpush1.bf16.msra.mxu0 0
        %2144 = vmatprep.subr.bf16.mxu0 0
        %2145 = vmatpush1.bf16.msra.mxu0 0
        %2146 = vmatprep.subr.bf16.mxu0 0
        %2147 = vmatpush1.bf16.msra.mxu0 0
        %2148 = vmatprep.subr.bf16.mxu0 0
        %2149 = vmatpush1.bf16.msra.mxu0 0
        %2150 = vmatprep.subr.bf16.mxu0 0
        %2151 = vmatpush1.bf16.msra.mxu0 0
        %2152 = vmatprep.subr.bf16.mxu0 0
        %2153 = vmatpush1.bf16.msra.mxu0 0
        %2154 = vmatprep.mubr.bf16.mxu0 0
        %2155 = vmatmul.mubr.bf16.gmra.mrb[0].mxu0 %v2116
        %v2156 = vpop.f32.mrb[0].mxu0
        %v2157 = vadd.f32 0.0, %v2156
        %v2158 = vpop.f32.mrb[0].mxu0
        %v2159 = vpop.f32.mrb[0].mxu0
        %v2160 = vpop.f32.mrb[0].mxu0
        %2161 = vdwg.mxu0
        %v2163 = vsel %vm1878, %v2108, 0
        %v2166 = vsel %vm2118, %v2112, 0
        %2168 = vmatprep.subr.bf16.mxu0 0
        %2169 = vmatpush1.bf16.msra.mxu0 %v2166
        %2170 = vmatprep.subr.bf16.mxu0 0
        %2171 = vmatpush1.bf16.msra.mxu0 0
        %2172 = vmatprep.subr.bf16.mxu0 0
        %2173 = vmatpush1.bf16.msra.mxu0 0
        %2174 = vmatprep.subr.bf16.mxu0 0
        %2175 = vmatpush1.bf16.msra.mxu0 0
        %2176 = vmatprep.subr.bf16.mxu0 0
        %2177 = vmatpush1.bf16.msra.mxu0 0
        %2178 = vmatprep.subr.bf16.mxu0 0
        %2179 = vmatpush1.bf16.msra.mxu0 0
        %2180 = vmatprep.subr.bf16.mxu0 0
        %2181 = vmatpush1.bf16.msra.mxu0 0
        %2182 = vmatprep.subr.bf16.mxu0 0
        %2183 = vmatpush1.bf16.msra.mxu0 0
        %2184 = vmatprep.subr.bf16.mxu0 0
        %2185 = vmatpush1.bf16.msra.mxu0 0
        %2186 = vmatprep.subr.bf16.mxu0 0
        %2187 = vmatpush1.bf16.msra.mxu0 0
        %2188 = vmatprep.subr.bf16.mxu0 0
        %2189 = vmatpush1.bf16.msra.mxu0 0
        %2190 = vmatprep.subr.bf16.mxu0 0
        %2191 = vmatpush1.bf16.msra.mxu0 0
        %2192 = vmatprep.subr.bf16.mxu0 0
        %2193 = vmatpush1.bf16.msra.mxu0 0
        %2194 = vmatprep.subr.bf16.mxu0 0
        %2195 = vmatpush1.bf16.msra.mxu0 0
        %2196 = vmatprep.subr.bf16.mxu0 0
        %2197 = vmatpush1.bf16.msra.mxu0 0
        %2198 = vmatprep.subr.bf16.mxu0 0
        %2199 = vmatpush1.bf16.msra.mxu0 0
        %2200 = vmatprep.mubr.bf16.mxu0 0
        %2201 = vmatmul.mubr.bf16.gmra.mrb[0].mxu0 %v2163
        %v2202 = vpop.f32.mrb[0].mxu0
        %v2203 = vadd.f32 0.0, %v2202
        %v2204 = vpop.f32.mrb[0].mxu0
        %v2205 = vpop.f32.mrb[0].mxu0
        %v2206 = vpop.f32.mrb[0].mxu0
        %2207 = vdwg.mxu0
        %v2209 = vsel %vm1878, %v2109, 0
        %v2212 = vsel %vm2118, %v2113, 0
        %2214 = vmatprep.subr.bf16.mxu0 0
        %2215 = vmatpush1.bf16.msra.mxu0 %v2212
        %2216 = vmatprep.subr.bf16.mxu0 0
        %2217 = vmatpush1.bf16.msra.mxu0 0
        %2218 = vmatprep.subr.bf16.mxu0 0
        %2219 = vmatpush1.bf16.msra.mxu0 0
        %2220 = vmatprep.subr.bf16.mxu0 0
        %2221 = vmatpush1.bf16.msra.mxu0 0
        %2222 = vmatprep.subr.bf16.mxu0 0
        %2223 = vmatpush1.bf16.msra.mxu0 0
        %2224 = vmatprep.subr.bf16.mxu0 0
        %2225 = vmatpush1.bf16.msra.mxu0 0
        %2226 = vmatprep.subr.bf16.mxu0 0
        %2227 = vmatpush1.bf16.msra.mxu0 0
        %2228 = vmatprep.subr.bf16.mxu0 0
        %2229 = vmatpush1.bf16.msra.mxu0 0
        %2230 = vmatprep.subr.bf16.mxu0 0
        %2231 = vmatpush1.bf16.msra.mxu0 0
        %2232 = vmatprep.subr.bf16.mxu0 0
        %2233 = vmatpush1.bf16.msra.mxu0 0
        %2234 = vmatprep.subr.bf16.mxu0 0
        %2235 = vmatpush1.bf16.msra.mxu0 0
        %2236 = vmatprep.subr.bf16.mxu0 0
        %2237 = vmatpush1.bf16.msra.mxu0 0
        %2238 = vmatprep.subr.bf16.mxu0 0
        %2239 = vmatpush1.bf16.msra.mxu0 0
        %2240 = vmatprep.subr.bf16.mxu0 0
        %2241 = vmatpush1.bf16.msra.mxu0 0
        %2242 = vmatprep.subr.bf16.mxu0 0
        %2243 = vmatpush1.bf16.msra.mxu0 0
        %2244 = vmatprep.subr.bf16.mxu0 0
        %2245 = vmatpush1.bf16.msra.mxu0 0
        %2246 = vmatprep.mubr.bf16.mxu0 0
        %2247 = vmatmul.mubr.bf16.gmra.mrb[0].mxu0 %v2209
        %v2248 = vpop.f32.mrb[0].mxu0
        %v2249 = vadd.f32 0.0, %v2248
        %v2250 = vpop.f32.mrb[0].mxu0
        %v2251 = vpop.f32.mrb[0].mxu0
        %v2252 = vpop.f32.mrb[0].mxu0
        %2253 = vdwg.mxu0
        %v2255 = vsel %vm1878, %v2110, 0
        %v2258 = vsel %vm2118, %v2114, 0
        %2260 = vmatprep.subr.bf16.mxu0 0
        %2261 = vmatpush1.bf16.msra.mxu0 %v2258
        %2262 = vmatprep.subr.bf16.mxu0 0
        %2263 = vmatpush1.bf16.msra.mxu0 0
        %2264 = vmatprep.subr.bf16.mxu0 0
        %2265 = vmatpush1.bf16.msra.mxu0 0
        %2266 = vmatprep.subr.bf16.mxu0 0
        %2267 = vmatpush1.bf16.msra.mxu0 0
        %2268 = vmatprep.subr.bf16.mxu0 0
        %2269 = vmatpush1.bf16.msra.mxu0 0
        %2270 = vmatprep.subr.bf16.mxu0 0
        %2271 = vmatpush1.bf16.msra.mxu0 0
        %2272 = vmatprep.subr.bf16.mxu0 0
        %2273 = vmatpush1.bf16.msra.mxu0 0
        %2274 = vmatprep.subr.bf16.mxu0 0
        %2275 = vmatpush1.bf16.msra.mxu0 0
        %2276 = vmatprep.subr.bf16.mxu0 0
        %2277 = vmatpush1.bf16.msra.mxu0 0
        %2278 = vmatprep.subr.bf16.mxu0 0
        %2279 = vmatpush1.bf16.msra.mxu0 0
        %2280 = vmatprep.subr.bf16.mxu0 0
        %2281 = vmatpush1.bf16.msra.mxu0 0
        %2282 = vmatprep.subr.bf16.mxu0 0
        %2283 = vmatpush1.bf16.msra.mxu0 0
        %2284 = vmatprep.subr.bf16.mxu0 0
        %2285 = vmatpush1.bf16.msra.mxu0 0
        %2286 = vmatprep.subr.bf16.mxu0 0
        %2287 = vmatpush1.bf16.msra.mxu0 0
        %2288 = vmatprep.subr.bf16.mxu0 0
        %2289 = vmatpush1.bf16.msra.mxu0 0
        %2290 = vmatprep.subr.bf16.mxu0 0
        %2291 = vmatpush1.bf16.msra.mxu0 0
        %2292 = vmatprep.mubr.bf16.mxu0 0
        %2293 = vmatmul.mubr.bf16.gmra.mrb[0].mxu0 %v2255
        %v2294 = vpop.f32.mrb[0].mxu0
        %v2295 = vadd.f32 0.0, %v2294
        %v2296 = vpop.f32.mrb[0].mxu0
        %v2297 = vpop.f32.mrb[0].mxu0
        %v2298 = vpop.f32.mrb[0].mxu0
        %2299 = vdwg.mxu0
        %v2300 = vpack.c.bf16 %v2157, %v2157
        %v2301 = vpack.c.bf16 %v2203, %v2203
        %v2302 = vpack.c.bf16 %v2249, %v2249
        %v2303 = vpack.c.bf16 %v2295, %v2295
        %v2304 = vld [vmem:[%s21] sm:$0xf]
        %v2305 = vld [vmem:[%s21 + $0x4] sm:$0xf]
        %v2306 = vld [vmem:[%s21 + $0x8] sm:$0xf]
        %v2307 = vld [vmem:[%s21 + $0xc] sm:$0xf]
        %v2309 = vsel %vm1878, %v2300, 0
        %v2312 = vsel %vm2118, %v2304, 0
        %2314 = vmatprep.subr.bf16.mxu0 0
        %2315 = vmatpush1.bf16.msra.mxu0 %v2312
        %2316 = vmatprep.subr.bf16.mxu0 0
        %2317 = vmatpush1.bf16.msra.mxu0 0
        %2318 = vmatprep.subr.bf16.mxu0 0
        %2319 = vmatpush1.bf16.msra.mxu0 0
        %2320 = vmatprep.subr.bf16.mxu0 0
        %2321 = vmatpush1.bf16.msra.mxu0 0
        %2322 = vmatprep.subr.bf16.mxu0 0
        %2323 = vmatpush1.bf16.msra.mxu0 0
        %2324 = vmatprep.subr.bf16.mxu0 0
        %2325 = vmatpush1.bf16.msra.mxu0 0
        %2326 = vmatprep.subr.bf16.mxu0 0
        %2327 = vmatpush1.bf16.msra.mxu0 0
        %2328 = vmatprep.subr.bf16.mxu0 0
        %2329 = vmatpush1.bf16.msra.mxu0 0
        %2330 = vmatprep.subr.bf16.mxu0 0
        %2331 = vmatpush1.bf16.msra.mxu0 0
        %2332 = vmatprep.subr.bf16.mxu0 0
        %2333 = vmatpush1.bf16.msra.mxu0 0
        %2334 = vmatprep.subr.bf16.mxu0 0
        %2335 = vmatpush1.bf16.msra.mxu0 0
        %2336 = vmatprep.subr.bf16.mxu0 0
        %2337 = vmatpush1.bf16.msra.mxu0 0
        %2338 = vmatprep.subr.bf16.mxu0 0
        %2339 = vmatpush1.bf16.msra.mxu0 0
        %2340 = vmatprep.subr.bf16.mxu0 0
        %2341 = vmatpush1.bf16.msra.mxu0 0
        %2342 = vmatprep.subr.bf16.mxu0 0
        %2343 = vmatpush1.bf16.msra.mxu0 0
        %2344 = vmatprep.subr.bf16.mxu0 0
        %2345 = vmatpush1.bf16.msra.mxu0 0
        %2346 = vmatprep.mubr.bf16.mxu0 0
        %2347 = vmatmul.mubr.bf16.gmra.mrb[0].mxu0 %v2309
        %v2348 = vpop.f32.mrb[0].mxu0
        %v2349 = vadd.f32 0.0, %v2348
        %v2350 = vpop.f32.mrb[0].mxu0
        %v2351 = vpop.f32.mrb[0].mxu0
        %v2352 = vpop.f32.mrb[0].mxu0
        %2353 = vdwg.mxu0
        %v2355 = vsel %vm1878, %v2301, 0
        %v2358 = vsel %vm2118, %v2305, 0
        %2360 = vmatprep.subr.bf16.mxu0 0
        %2361 = vmatpush1.bf16.msra.mxu0 %v2358
        %2362 = vmatprep.subr.bf16.mxu0 0
        %2363 = vmatpush1.bf16.msra.mxu0 0
        %2364 = vmatprep.subr.bf16.mxu0 0
        %2365 = vmatpush1.bf16.msra.mxu0 0
        %2366 = vmatprep.subr.bf16.mxu0 0
        %2367 = vmatpush1.bf16.msra.mxu0 0
        %2368 = vmatprep.subr.bf16.mxu0 0
        %2369 = vmatpush1.bf16.msra.mxu0 0
        %2370 = vmatprep.subr.bf16.mxu0 0
        %2371 = vmatpush1.bf16.msra.mxu0 0
        %2372 = vmatprep.subr.bf16.mxu0 0
        %2373 = vmatpush1.bf16.msra.mxu0 0
        %2374 = vmatprep.subr.bf16.mxu0 0
        %2375 = vmatpush1.bf16.msra.mxu0 0
        %2376 = vmatprep.subr.bf16.mxu0 0
        %2377 = vmatpush1.bf16.msra.mxu0 0
        %2378 = vmatprep.subr.bf16.mxu0 0
        %2379 = vmatpush1.bf16.msra.mxu0 0
        %2380 = vmatprep.subr.bf16.mxu0 0
        %2381 = vmatpush1.bf16.msra.mxu0 0
        %2382 = vmatprep.subr.bf16.mxu0 0
        %2383 = vmatpush1.bf16.msra.mxu0 0
        %2384 = vmatprep.subr.bf16.mxu0 0
        %2385 = vmatpush1.bf16.msra.mxu0 0
        %2386 = vmatprep.subr.bf16.mxu0 0
        %2387 = vmatpush1.bf16.msra.mxu0 0
        %2388 = vmatprep.subr.bf16.mxu0 0
        %2389 = vmatpush1.bf16.msra.mxu0 0
        %2390 = vmatprep.subr.bf16.mxu0 0
        %2391 = vmatpush1.bf16.msra.mxu0 0
        %2392 = vmatprep.mubr.bf16.mxu0 0
        %2393 = vmatmul.mubr.bf16.gmra.mrb[0].mxu0 %v2355
        %v2394 = vpop.f32.mrb[0].mxu0
        %v2395 = vadd.f32 0.0, %v2394
        %v2396 = vpop.f32.mrb[0].mxu0
        %v2397 = vpop.f32.mrb[0].mxu0
        %v2398 = vpop.f32.mrb[0].mxu0
        %2399 = vdwg.mxu0
        %v2401 = vsel %vm1878, %v2302, 0
        %v2404 = vsel %vm2118, %v2306, 0
        %2406 = vmatprep.subr.bf16.mxu0 0
        %2407 = vmatpush1.bf16.msra.mxu0 %v2404
        %2408 = vmatprep.subr.bf16.mxu0 0
        %2409 = vmatpush1.bf16.msra.mxu0 0
        %2410 = vmatprep.subr.bf16.mxu0 0
        %2411 = vmatpush1.bf16.msra.mxu0 0
        %2412 = vmatprep.subr.bf16.mxu0 0
        %2413 = vmatpush1.bf16.msra.mxu0 0
        %2414 = vmatprep.subr.bf16.mxu0 0
        %2415 = vmatpush1.bf16.msra.mxu0 0
        %2416 = vmatprep.subr.bf16.mxu0 0
        %2417 = vmatpush1.bf16.msra.mxu0 0
        %2418 = vmatprep.subr.bf16.mxu0 0
        %2419 = vmatpush1.bf16.msra.mxu0 0
        %2420 = vmatprep.subr.bf16.mxu0 0
        %2421 = vmatpush1.bf16.msra.mxu0 0
        %2422 = vmatprep.subr.bf16.mxu0 0
        %2423 = vmatpush1.bf16.msra.mxu0 0
        %2424 = vmatprep.subr.bf16.mxu0 0
        %2425 = vmatpush1.bf16.msra.mxu0 0
        %2426 = vmatprep.subr.bf16.mxu0 0
        %2427 = vmatpush1.bf16.msra.mxu0 0
        %2428 = vmatprep.subr.bf16.mxu0 0
        %2429 = vmatpush1.bf16.msra.mxu0 0
        %2430 = vmatprep.subr.bf16.mxu0 0
        %2431 = vmatpush1.bf16.msra.mxu0 0
        %2432 = vmatprep.subr.bf16.mxu0 0
        %2433 = vmatpush1.bf16.msra.mxu0 0
        %2434 = vmatprep.subr.bf16.mxu0 0
        %2435 = vmatpush1.bf16.msra.mxu0 0
        %2436 = vmatprep.subr.bf16.mxu0 0
        %2437 = vmatpush1.bf16.msra.mxu0 0
        %2438 = vmatprep.mubr.bf16.mxu0 0
        %2439 = vmatmul.mubr.bf16.gmra.mrb[0].mxu0 %v2401
        %v2440 = vpop.f32.mrb[0].mxu0
        %v2441 = vadd.f32 0.0, %v2440
        %v2442 = vpop.f32.mrb[0].mxu0
        %v2443 = vpop.f32.mrb[0].mxu0
        %v2444 = vpop.f32.mrb[0].mxu0
        %2445 = vdwg.mxu0
        %v2447 = vsel %vm1878, %v2303, 0
        %v2450 = vsel %vm2118, %v2307, 0
        %2452 = vmatprep.subr.bf16.mxu0 0
        %2453 = vmatpush1.bf16.msra.mxu0 %v2450
        %2454 = vmatprep.subr.bf16.mxu0 0
        %2455 = vmatpush1.bf16.msra.mxu0 0
        %2456 = vmatprep.subr.bf16.mxu0 0
        %2457 = vmatpush1.bf16.msra.mxu0 0
        %2458 = vmatprep.subr.bf16.mxu0 0
        %2459 = vmatpush1.bf16.msra.mxu0 0
        %2460 = vmatprep.subr.bf16.mxu0 0
        %2461 = vmatpush1.bf16.msra.mxu0 0
        %2462 = vmatprep.subr.bf16.mxu0 0
        %2463 = vmatpush1.bf16.msra.mxu0 0
        %2464 = vmatprep.subr.bf16.mxu0 0
        %2465 = vmatpush1.bf16.msra.mxu0 0
        %2466 = vmatprep.subr.bf16.mxu0 0
        %2467 = vmatpush1.bf16.msra.mxu0 0
        %2468 = vmatprep.subr.bf16.mxu0 0
        %2469 = vmatpush1.bf16.msra.mxu0 0
        %2470 = vmatprep.subr.bf16.mxu0 0
        %2471 = vmatpush1.bf16.msra.mxu0 0
        %2472 = vmatprep.subr.bf16.mxu0 0
        %2473 = vmatpush1.bf16.msra.mxu0 0
        %2474 = vmatprep.subr.bf16.mxu0 0
        %2475 = vmatpush1.bf16.msra.mxu0 0
        %2476 = vmatprep.subr.bf16.mxu0 0
        %2477 = vmatpush1.bf16.msra.mxu0 0
        %2478 = vmatprep.subr.bf16.mxu0 0
        %2479 = vmatpush1.bf16.msra.mxu0 0
        %2480 = vmatprep.subr.bf16.mxu0 0
        %2481 = vmatpush1.bf16.msra.mxu0 0
        %2482 = vmatprep.subr.bf16.mxu0 0
        %2483 = vmatpush1.bf16.msra.mxu0 0
        %2484 = vmatprep.mubr.bf16.mxu0 0
        %2485 = vmatmul.mubr.bf16.gmra.mrb[0].mxu0 %v2447
        %v2486 = vpop.f32.mrb[0].mxu0
        %v2487 = vadd.f32 0.0, %v2486
        %v2488 = vpop.f32.mrb[0].mxu0
        %v2489 = vpop.f32.mrb[0].mxu0
        %v2490 = vpop.f32.mrb[0].mxu0
        %2491 = vdwg.mxu0
        %v2492 = vsel %vm1156, %v2349, 0.0
        %v2493 = vsel %vm1156, %v2395, 0.0
        %v2494 = vadd.f32 %v2492, %v2493
        %v2495 = vsel %vm1156, %v2441, 0.0
        %v2496 = vadd.f32 %v2494, %v2495
        %v2497 = vsel %vm1156, %v2487, 0.0
        %v2498 = vadd.f32 %v2496, %v2497
        %v2499 = vld [vmem:[%s23] sm:$0x1]
        %v2501 = vlaneseq
        %v2502 = vshrl.u32 %v2501, 7
        %v2503 = vsub.s32 0, %v2502
        %v2504 = vrot.slane %v2499, %v2503
        %v2506 = vadd.f32 %v2498, %v2504
        %v2507 = vadd.f32 %v1093, %v2506
        %v2508 = vsel %vm1156, %v2507, 0.0
        %2509 = vadd.xlane.f32.xlu0 %v2508
        %v2510 = vpop.xlane.xlu0 %2509
        %v2511 = vrcp.pop 32.0
        %v2512 = vmul.f32 %v2510, %v2511
        %v2513 = vsub.f32 %v2507, %v2512
        %v2514 = vmul.f32 %v2513, %v2513
        %v2515 = vsel %vm1156, %v2514, 0.0
        %2516 = vadd.xlane.f32.xlu0 %v2515
        %v2517 = vpop.xlane.xlu0 %2516
        %v2518 = vmul.f32 %v2517, %v2511
        %v2519 = vadd.f32 %v2518, 1e-05
        %v2520 = vrsqrt.pop %v2519
        %v2521 = vmul.f32 %v2513, %v2520
        %v2523 = vlaneseq
        %v2524 = vshrl.u32 %v2523, 7
        %v2525 = vsub.s32 0, %v2524
        %v2526 = vrot.slane %v1097, %v2525
        %v2528 = vmul.f32 %v2521, %v2526
        %v2530 = vlaneseq
        %v2531 = vshrl.u32 %v2530, 7
        %v2532 = vsub.s32 0, %v2531
        %v2533 = vrot.slane %v1098, %v2532
        %v2535 = vadd.f32 %v2528, %v2533
        %v2536 = vpack.c.bf16 %v2535, %v2535
        %v2537 = vld [vmem:[%s29] sm:$0xf]
        %v2538 = vld [vmem:[%s29 + $0x4] sm:$0xf]
        %v2539 = vld [vmem:[%s29 + $0x8] sm:$0xf]
        %v2540 = vld [vmem:[%s29 + $0xc] sm:$0xf]
        %v2541 = vld [vmem:[%s31] sm:$0x1]
        %v2543 = vlaneseq
        %v2544 = vshrl.u32 %v2543, 7
        %v2545 = vsub.s32 0, %v2544
        %v2546 = vrot.slane %v2541, %v2545
        %v2552 = vunpack.c.l.b16 %v2537
        %v2553 = vunpack.c.l.b16 %v2538
        %v2554 = vunpack.c.l.b16 %v2539
        %v2555 = vunpack.c.l.b16 %v2540
        %v2556 = vpack.c.b16 %v2553, %v2552
        %v2557 = vpack.c.b16 %v2555, %v2554
        %v2561 = vsel %vm1156, %v2536, 0
        %2563 = vmatprep.subr.bf16.mxu0 0
        %2564 = vmatpush1.bf16.msra.mxu0 %v2556
        %2565 = vmatprep.subr.bf16.mxu0 0
        %2566 = vmatpush1.bf16.msra.mxu0 %v2557
        %2567 = vmatprep.subr.bf16.mxu0 0
        %2568 = vmatpush1.bf16.msra.mxu0 0
        %2569 = vmatprep.subr.bf16.mxu0 0
        %2570 = vmatpush1.bf16.msra.mxu0 0
        %2571 = vmatprep.subr.bf16.mxu0 0
        %2572 = vmatpush1.bf16.msra.mxu0 0
        %2573 = vmatprep.subr.bf16.mxu0 0
        %2574 = vmatpush1.bf16.msra.mxu0 0
        %2575 = vmatprep.subr.bf16.mxu0 0
        %2576 = vmatpush1.bf16.msra.mxu0 0
        %2577 = vmatprep.subr.bf16.mxu0 0
        %2578 = vmatpush1.bf16.msra.mxu0 0
        %2579 = vmatprep.subr.bf16.mxu0 0
        %2580 = vmatpush1.bf16.msra.mxu0 0
        %2581 = vmatprep.subr.bf16.mxu0 0
        %2582 = vmatpush1.bf16.msra.mxu0 0
        %2583 = vmatprep.subr.bf16.mxu0 0
        %2584 = vmatpush1.bf16.msra.mxu0 0
        %2585 = vmatprep.subr.bf16.mxu0 0
        %2586 = vmatpush1.bf16.msra.mxu0 0
        %2587 = vmatprep.subr.bf16.mxu0 0
        %2588 = vmatpush1.bf16.msra.mxu0 0
        %2589 = vmatprep.subr.bf16.mxu0 0
        %2590 = vmatpush1.bf16.msra.mxu0 0
        %2591 = vmatprep.subr.bf16.mxu0 0
        %2592 = vmatpush1.bf16.msra.mxu0 0
        %2593 = vmatprep.subr.bf16.mxu0 0
        %2594 = vmatpush1.bf16.msra.mxu0 0
        %2595 = vmatprep.mubr.bf16.mxu0 0
        %2596 = vmatmul.mubr.bf16.gmra.mrb[0].mxu0 %v2561
        %v2597 = vpop.f32.mrb[0].mxu0
        %v2598 = vadd.f32 %v2546, %v2597
        %v2599 = vpop.f32.mrb[0].mxu0
        %v2600 = vpop.f32.mrb[0].mxu0
        %v2601 = vpop.f32.mrb[0].mxu0
        %2602 = vdwg.mxu0
        %v2603 = vmax.f32 %v2598, 0.0
        %v2604 = vpack.c.bf16 %v2603, %v2603
        %v2605 = vld [vmem:[%s33] sm:$0xf]
        %v2606 = vld [vmem:[%s33 + $0x4] sm:$0xf]
        %v2607 = vld [vmem:[%s33 + $0x8] sm:$0xf]
        %v2608 = vld [vmem:[%s33 + $0xc] sm:$0xf]
        %v2609 = vld [vmem:[%s33 + $0x10] sm:$0xf]
        %v2610 = vld [vmem:[%s33 + $0x14] sm:$0xf]
        %v2611 = vld [vmem:[%s33 + $0x18] sm:$0xf]
        %v2612 = vld [vmem:[%s33 + $0x1c] sm:$0xf]
        %v2613 = vld [vmem:[%s35] sm:$0x1]
        %v2615 = vlaneseq
        %v2616 = vshrl.u32 %v2615, 7
        %v2617 = vsub.s32 0, %v2616
        %v2618 = vrot.slane %v2613, %v2617
        %v2628 = vunpack.c.l.b16 %v2605
        %v2629 = vunpack.c.l.b16 %v2606
        %v2630 = vunpack.c.l.b16 %v2607
        %v2631 = vunpack.c.l.b16 %v2608
        %v2632 = vunpack.c.l.b16 %v2609
        %v2633 = vunpack.c.l.b16 %v2610
        %v2634 = vunpack.c.l.b16 %v2611
        %v2635 = vunpack.c.l.b16 %v2612
        %v2636 = vpack.c.b16 %v2629, %v2628
        %v2637 = vpack.c.b16 %v2631, %v2630
        %v2638 = vpack.c.b16 %v2633, %v2632
        %v2639 = vpack.c.b16 %v2635, %v2634
        %vm2644 = vcmask 523264
        %v2646 = vsel %vm2644, %v2604, 0
        %2648 = vmatprep.subr.bf16.mxu0 0
        %2649 = vmatpush1.bf16.msra.mxu0 %v2636
        %2650 = vmatprep.subr.bf16.mxu0 0
        %2651 = vmatpush1.bf16.msra.mxu0 %v2637
        %2652 = vmatprep.subr.bf16.mxu0 0
        %2653 = vmatpush1.bf16.msra.mxu0 %v2638
        %2654 = vmatprep.subr.bf16.mxu0 0
        %2655 = vmatpush1.bf16.msra.mxu0 %v2639
        %2656 = vmatprep.subr.bf16.mxu0 0
        %2657 = vmatpush1.bf16.msra.mxu0 0
        %2658 = vmatprep.subr.bf16.mxu0 0
        %2659 = vmatpush1.bf16.msra.mxu0 0
        %2660 = vmatprep.subr.bf16.mxu0 0
        %2661 = vmatpush1.bf16.msra.mxu0 0
        %2662 = vmatprep.subr.bf16.mxu0 0
        %2663 = vmatpush1.bf16.msra.mxu0 0
        %2664 = vmatprep.subr.bf16.mxu0 0
        %2665 = vmatpush1.bf16.msra.mxu0 0
        %2666 = vmatprep.subr.bf16.mxu0 0
        %2667 = vmatpush1.bf16.msra.mxu0 0
        %2668 = vmatprep.subr.bf16.mxu0 0
        %2669 = vmatpush1.bf16.msra.mxu0 0
        %2670 = vmatprep.subr.bf16.mxu0 0
        %2671 = vmatpush1.bf16.msra.mxu0 0
        %2672 = vmatprep.subr.bf16.mxu0 0
        %2673 = vmatpush1.bf16.msra.mxu0 0
        %2674 = vmatprep.subr.bf16.mxu0 0
        %2675 = vmatpush1.bf16.msra.mxu0 0
        %2676 = vmatprep.subr.bf16.mxu0 0
        %2677 = vmatpush1.bf16.msra.mxu0 0
        %2678 = vmatprep.subr.bf16.mxu0 0
        %2679 = vmatpush1.bf16.msra.mxu0 0
        %2680 = vmatprep.mubr.bf16.mxu0 0
        %2681 = vmatmul.mubr.bf16.gmra.mrb[0].mxu0 %v2646
        %v2682 = vpop.f32.mrb[0].mxu0
        %v2683 = vadd.f32 %v2618, %v2682
        %v2684 = vpop.f32.mrb[0].mxu0
        %v2685 = vpop.f32.mrb[0].mxu0
        %v2686 = vpop.f32.mrb[0].mxu0
        %2687 = vdwg.mxu0
        %v2688 = vadd.f32 %v2535, %v2683
        %v2689 = vsel %vm1156, %v2688, 0.0
        %2690 = vadd.xlane.f32.xlu0 %v2689
        %v2691 = vpop.xlane.xlu0 %2690
        %v2692 = vmul.f32 %v2691, %v2511
        %v2693 = vsub.f32 %v2688, %v2692
        %v2694 = vmul.f32 %v2693, %v2693
        %v2695 = vsel %vm1156, %v2694, 0.0
        %2696 = vadd.xlane.f32.xlu0 %v2695
        %v2697 = vpop.xlane.xlu0 %2696
        %v2698 = vmul.f32 %v2697, %v2511
        %v2699 = vadd.f32 %v2698, 1e-05
        %v2700 = vrsqrt.pop %v2699
        %v2701 = vmul.f32 %v2693, %v2700
        %v2702 = vmul.f32 %v2701, %v2526
        %v2703 = vadd.f32 %v2702, %v2533
        %v2704 = vld [vmem:[%s53] sm:$0x1]
        %v2705 = vld [vmem:[%s55] sm:$0x1]
        %v2706 = vpack.c.bf16 %v2703, %v2703
        %v2707 = vld [vmem:[%s37] sm:$0xf]
        %v2708 = vld [vmem:[%s37 + $0x4] sm:$0xf]
        %v2709 = vld [vmem:[%s37 + $0x8] sm:$0xf]
        %v2710 = vld [vmem:[%s37 + $0xc] sm:$0xf]
        %v2711 = vld [vmem:[%s37 + $0x10] sm:$0xf]
        %v2712 = vld [vmem:[%s37 + $0x14] sm:$0xf]
        %v2713 = vld [vmem:[%s37 + $0x18] sm:$0xf]
        %v2714 = vld [vmem:[%s37 + $0x1c] sm:$0xf]
        %v2715 = vld [vmem:[%s37 + $0x20] sm:$0xf]
        %v2716 = vld [vmem:[%s37 + $0x24] sm:$0xf]
        %v2717 = vld [vmem:[%s37 + $0x28] sm:$0xf]
        %v2718 = vld [vmem:[%s37 + $0x2c] sm:$0xf]
        %v2719 = vld [vmem:[%s37 + $0x30] sm:$0xf]
        %v2720 = vld [vmem:[%s37 + $0x34] sm:$0xf]
        %v2721 = vld [vmem:[%s37 + $0x38] sm:$0xf]
        %v2722 = vld [vmem:[%s37 + $0x3c] sm:$0xf]
        %v2723 = vld [vmem:[%s39] sm:$0x1]
        %v2724 = vld [vmem:[%s39 + $0x1] sm:$0x1]
        %v2725 = vld [vmem:[%s39 + $0x2] sm:$0x1]
        %v2726 = vld [vmem:[%s39 + $0x3] sm:$0x1]
        %v2731 = vlaneseq
        %v2732 = vshrl.u32 %v2731, 7
        %v2733 = vsub.s32 0, %v2732
        %v2734 = vrot.slane %v2723, %v2733
        %v2735 = vlaneseq
        %v2736 = vshrl.u32 %v2735, 7
        %v2737 = vsub.s32 0, %v2736
        %v2738 = vrot.slane %v2724, %v2737
        %v2739 = vlaneseq
        %v2740 = vshrl.u32 %v2739, 7
        %v2741 = vsub.s32 0, %v2740
        %v2742 = vrot.slane %v2725, %v2741
        %v2743 = vlaneseq
        %v2744 = vshrl.u32 %v2743, 7
        %v2745 = vsub.s32 0, %v2744
        %v2746 = vrot.slane %v2726, %v2745
        %v2755 = vunpack.c.l.b16 %v2707
        %v2756 = vunpack.c.l.b16 %v2708
        %v2757 = vunpack.c.l.b16 %v2709
        %v2758 = vunpack.c.l.b16 %v2710
        %v2759 = vpack.c.b16 %v2756, %v2755
        %v2760 = vpack.c.b16 %v2758, %v2757
        %v2764 = vsel %vm1156, %v2706, 0
        %2766 = vmatprep.subr.bf16.mxu0 0
        %2767 = vmatpush1.bf16.msra.mxu0 %v2759
        %2768 = vmatprep.subr.bf16.mxu0 0
        %2769 = vmatpush1.bf16.msra.mxu0 %v2760
        %2770 = vmatprep.subr.bf16.mxu0 0
        %2771 = vmatpush1.bf16.msra.mxu0 0
        %2772 = vmatprep.subr.bf16.mxu0 0
        %2773 = vmatpush1.bf16.msra.mxu0 0
        %2774 = vmatprep.subr.bf16.mxu0 0
        %2775 = vmatpush1.bf16.msra.mxu0 0
        %2776 = vmatprep.subr.bf16.mxu0 0
        %2777 = vmatpush1.bf16.msra.mxu0 0
        %2778 = vmatprep.subr.bf16.mxu0 0
        %2779 = vmatpush1.bf16.msra.mxu0 0
        %2780 = vmatprep.subr.bf16.mxu0 0
        %2781 = vmatpush1.bf16.msra.mxu0 0
        %2782 = vmatprep.subr.bf16.mxu0 0
        %2783 = vmatpush1.bf16.msra.mxu0 0
        %2784 = vmatprep.subr.bf16.mxu0 0
        %2785 = vmatpush1.bf16.msra.mxu0 0
        %2786 = vmatprep.subr.bf16.mxu0 0
        %2787 = vmatpush1.bf16.msra.mxu0 0
        %2788 = vmatprep.subr.bf16.mxu0 0
        %2789 = vmatpush1.bf16.msra.mxu0 0
        %2790 = vmatprep.subr.bf16.mxu0 0
        %2791 = vmatpush1.bf16.msra.mxu0 0
        %2792 = vmatprep.subr.bf16.mxu0 0
        %2793 = vmatpush1.bf16.msra.mxu0 0
        %2794 = vmatprep.subr.bf16.mxu0 0
        %2795 = vmatpush1.bf16.msra.mxu0 0
        %2796 = vmatprep.subr.bf16.mxu0 0
        %2797 = vmatpush1.bf16.msra.mxu0 0
        %2798 = vmatprep.mubr.bf16.mxu0 0
        %2799 = vmatmul.mubr.bf16.gmra.mrb[0].mxu0 %v2764
        %v2800 = vpop.f32.mrb[0].mxu0
        %v2801 = vadd.f32 %v2734, %v2800
        %v2802 = vpop.f32.mrb[0].mxu0
        %v2803 = vpop.f32.mrb[0].mxu0
        %v2804 = vpop.f32.mrb[0].mxu0
        %2805 = vdwg.mxu0
        %v2810 = vunpack.c.l.b16 %v2711
        %v2811 = vunpack.c.l.b16 %v2712
        %v2812 = vunpack.c.l.b16 %v2713
        %v2813 = vunpack.c.l.b16 %v2714
        %v2814 = vpack.c.b16 %v2811, %v2810
        %v2815 = vpack.c.b16 %v2813, %v2812
        %2818 = vmatprep.subr.bf16.mxu0 0
        %2819 = vmatpush1.bf16.msra.mxu0 %v2814
        %2820 = vmatprep.subr.bf16.mxu0 0
        %2821 = vmatpush1.bf16.msra.mxu0 %v2815
        %2822 = vmatprep.subr.bf16.mxu0 0
        %2823 = vmatpush1.bf16.msra.mxu0 0
        %2824 = vmatprep.subr.bf16.mxu0 0
        %2825 = vmatpush1.bf16.msra.mxu0 0
        %2826 = vmatprep.subr.bf16.mxu0 0
        %2827 = vmatpush1.bf16.msra.mxu0 0
        %2828 = vmatprep.subr.bf16.mxu0 0
        %2829 = vmatpush1.bf16.msra.mxu0 0
        %2830 = vmatprep.subr.bf16.mxu0 0
        %2831 = vmatpush1.bf16.msra.mxu0 0
        %2832 = vmatprep.subr.bf16.mxu0 0
        %2833 = vmatpush1.bf16.msra.mxu0 0
        %2834 = vmatprep.subr.bf16.mxu0 0
        %2835 = vmatpush1.bf16.msra.mxu0 0
        %2836 = vmatprep.subr.bf16.mxu0 0
        %2837 = vmatpush1.bf16.msra.mxu0 0
        %2838 = vmatprep.subr.bf16.mxu0 0
        %2839 = vmatpush1.bf16.msra.mxu0 0
        %2840 = vmatprep.subr.bf16.mxu0 0
        %2841 = vmatpush1.bf16.msra.mxu0 0
        %2842 = vmatprep.subr.bf16.mxu0 0
        %2843 = vmatpush1.bf16.msra.mxu0 0
        %2844 = vmatprep.subr.bf16.mxu0 0
        %2845 = vmatpush1.bf16.msra.mxu0 0
        %2846 = vmatprep.subr.bf16.mxu0 0
        %2847 = vmatpush1.bf16.msra.mxu0 0
        %2848 = vmatprep.subr.bf16.mxu0 0
        %2849 = vmatpush1.bf16.msra.mxu0 0
        %2850 = vmatprep.mubr.bf16.mxu0 0
        %2851 = vmatmul.mubr.bf16.gmra.mrb[0].mxu0 %v2764
        %v2852 = vpop.f32.mrb[0].mxu0
        %v2853 = vadd.f32 %v2738, %v2852
        %v2854 = vpop.f32.mrb[0].mxu0
        %v2855 = vpop.f32.mrb[0].mxu0
        %v2856 = vpop.f32.mrb[0].mxu0
        %2857 = vdwg.mxu0
        %v2862 = vunpack.c.l.b16 %v2715
        %v2863 = vunpack.c.l.b16 %v2716
        %v2864 = vunpack.c.l.b16 %v2717
        %v2865 = vunpack.c.l.b16 %v2718
        %v2866 = vpack.c.b16 %v2863, %v2862
        %v2867 = vpack.c.b16 %v2865, %v2864
        %2870 = vmatprep.subr.bf16.mxu0 0
        %2871 = vmatpush1.bf16.msra.mxu0 %v2866
        %2872 = vmatprep.subr.bf16.mxu0 0
        %2873 = vmatpush1.bf16.msra.mxu0 %v2867
        %2874 = vmatprep.subr.bf16.mxu0 0
        %2875 = vmatpush1.bf16.msra.mxu0 0
        %2876 = vmatprep.subr.bf16.mxu0 0
        %2877 = vmatpush1.bf16.msra.mxu0 0
        %2878 = vmatprep.subr.bf16.mxu0 0
        %2879 = vmatpush1.bf16.msra.mxu0 0
        %2880 = vmatprep.subr.bf16.mxu0 0
        %2881 = vmatpush1.bf16.msra.mxu0 0
        %2882 = vmatprep.subr.bf16.mxu0 0
        %2883 = vmatpush1.bf16.msra.mxu0 0
        %2884 = vmatprep.subr.bf16.mxu0 0
        %2885 = vmatpush1.bf16.msra.mxu0 0
        %2886 = vmatprep.subr.bf16.mxu0 0
        %2887 = vmatpush1.bf16.msra.mxu0 0
        %2888 = vmatprep.subr.bf16.mxu0 0
        %2889 = vmatpush1.bf16.msra.mxu0 0
        %2890 = vmatprep.subr.bf16.mxu0 0
        %2891 = vmatpush1.bf16.msra.mxu0 0
        %2892 = vmatprep.subr.bf16.mxu0 0
        %2893 = vmatpush1.bf16.msra.mxu0 0
        %2894 = vmatprep.subr.bf16.mxu0 0
        %2895 = vmatpush1.bf16.msra.mxu0 0
        %2896 = vmatprep.subr.bf16.mxu0 0
        %2897 = vmatpush1.bf16.msra.mxu0 0
        %2898 = vmatprep.subr.bf16.mxu0 0
        %2899 = vmatpush1.bf16.msra.mxu0 0
        %2900 = vmatprep.subr.bf16.mxu0 0
        %2901 = vmatpush1.bf16.msra.mxu0 0
        %2902 = vmatprep.mubr.bf16.mxu0 0
        %2903 = vmatmul.mubr.bf16.gmra.mrb[0].mxu0 %v2764
        %v2904 = vpop.f32.mrb[0].mxu0
        %v2905 = vadd.f32 %v2742, %v2904
        %v2906 = vpop.f32.mrb[0].mxu0
        %v2907 = vpop.f32.mrb[0].mxu0
        %v2908 = vpop.f32.mrb[0].mxu0
        %2909 = vdwg.mxu0
        %v2914 = vunpack.c.l.b16 %v2719
        %v2915 = vunpack.c.l.b16 %v2720
        %v2916 = vunpack.c.l.b16 %v2721
        %v2917 = vunpack.c.l.b16 %v2722
        %v2918 = vpack.c.b16 %v2915, %v2914
        %v2919 = vpack.c.b16 %v2917, %v2916
        %2922 = vmatprep.subr.bf16.mxu0 0
        %2923 = vmatpush1.bf16.msra.mxu0 %v2918
        %2924 = vmatprep.subr.bf16.mxu0 0
        %2925 = vmatpush1.bf16.msra.mxu0 %v2919
        %2926 = vmatprep.subr.bf16.mxu0 0
        %2927 = vmatpush1.bf16.msra.mxu0 0
        %2928 = vmatprep.subr.bf16.mxu0 0
        %2929 = vmatpush1.bf16.msra.mxu0 0
        %2930 = vmatprep.subr.bf16.mxu0 0
        %2931 = vmatpush1.bf16.msra.mxu0 0
        %2932 = vmatprep.subr.bf16.mxu0 0
        %2933 = vmatpush1.bf16.msra.mxu0 0
        %2934 = vmatprep.subr.bf16.mxu0 0
        %2935 = vmatpush1.bf16.msra.mxu0 0
        %2936 = vmatprep.subr.bf16.mxu0 0
        %2937 = vmatpush1.bf16.msra.mxu0 0
        %2938 = vmatprep.subr.bf16.mxu0 0
        %2939 = vmatpush1.bf16.msra.mxu0 0
        %2940 = vmatprep.subr.bf16.mxu0 0
        %2941 = vmatpush1.bf16.msra.mxu0 0
        %2942 = vmatprep.subr.bf16.mxu0 0
        %2943 = vmatpush1.bf16.msra.mxu0 0
        %2944 = vmatprep.subr.bf16.mxu0 0
        %2945 = vmatpush1.bf16.msra.mxu0 0
        %2946 = vmatprep.subr.bf16.mxu0 0
        %2947 = vmatpush1.bf16.msra.mxu0 0
        %2948 = vmatprep.subr.bf16.mxu0 0
        %2949 = vmatpush1.bf16.msra.mxu0 0
        %2950 = vmatprep.subr.bf16.mxu0 0
        %2951 = vmatpush1.bf16.msra.mxu0 0
        %2952 = vmatprep.subr.bf16.mxu0 0
        %2953 = vmatpush1.bf16.msra.mxu0 0
        %2954 = vmatprep.mubr.bf16.mxu0 0
        %2955 = vmatmul.mubr.bf16.gmra.mrb[0].mxu0 %v2764
        %v2956 = vpop.f32.mrb[0].mxu0
        %v2957 = vadd.f32 %v2746, %v2956
        %v2958 = vpop.f32.mrb[0].mxu0
        %v2959 = vpop.f32.mrb[0].mxu0
        %v2960 = vpop.f32.mrb[0].mxu0
        %2961 = vdwg.mxu0
        %v2962 = vld [vmem:[%s41] sm:$0xf]
        %v2963 = vld [vmem:[%s41 + $0x4] sm:$0xf]
        %v2964 = vld [vmem:[%s41 + $0x8] sm:$0xf]
        %v2965 = vld [vmem:[%s41 + $0xc] sm:$0xf]
        %v2966 = vld [vmem:[%s41 + $0x10] sm:$0xf]
        %v2967 = vld [vmem:[%s41 + $0x14] sm:$0xf]
        %v2968 = vld [vmem:[%s41 + $0x18] sm:$0xf]
        %v2969 = vld [vmem:[%s41 + $0x1c] sm:$0xf]
        %v2970 = vld [vmem:[%s41 + $0x20] sm:$0xf]
        %v2971 = vld [vmem:[%s41 + $0x24] sm:$0xf]
        %v2972 = vld [vmem:[%s41 + $0x28] sm:$0xf]
        %v2973 = vld [vmem:[%s41 + $0x2c] sm:$0xf]
        %v2974 = vld [vmem:[%s41 + $0x30] sm:$0xf]
        %v2975 = vld [vmem:[%s41 + $0x34] sm:$0xf]
        %v2976 = vld [vmem:[%s41 + $0x38] sm:$0xf]
        %v2977 = vld [vmem:[%s41 + $0x3c] sm:$0xf]
        %v2978 = vld [vmem:[%s43] sm:$0x1]
        %v2979 = vld [vmem:[%s43 + $0x1] sm:$0x1]
        %v2980 = vld [vmem:[%s43 + $0x2] sm:$0x1]
        %v2981 = vld [vmem:[%s43 + $0x3] sm:$0x1]
        %v2986 = vlaneseq
        %v2987 = vshrl.u32 %v2986, 7
        %v2988 = vsub.s32 0, %v2987
        %v2989 = vrot.slane %v2978, %v2988
        %v2990 = vlaneseq
        %v2991 = vshrl.u32 %v2990, 7
        %v2992 = vsub.s32 0, %v2991
        %v2993 = vrot.slane %v2979, %v2992
        %v2994 = vlaneseq
        %v2995 = vshrl.u32 %v2994, 7
        %v2996 = vsub.s32 0, %v2995
        %v2997 = vrot.slane %v2980, %v2996
        %v2998 = vlaneseq
        %v2999 = vshrl.u32 %v2998, 7
        %v3000 = vsub.s32 0, %v2999
        %v3001 = vrot.slane %v2981, %v3000
        %v3010 = vunpack.c.l.b16 %v2962
        %v3011 = vunpack.c.l.b16 %v2963
        %v3012 = vunpack.c.l.b16 %v2964
        %v3013 = vunpack.c.l.b16 %v2965
        %v3014 = vpack.c.b16 %v3011, %v3010
        %v3015 = vpack.c.b16 %v3013, %v3012
        %3018 = vmatprep.subr.bf16.mxu0 0
        %3019 = vmatpush1.bf16.msra.mxu0 %v3014
        %3020 = vmatprep.subr.bf16.mxu0 0
        %3021 = vmatpush1.bf16.msra.mxu0 %v3015
        %3022 = vmatprep.subr.bf16.mxu0 0
        %3023 = vmatpush1.bf16.msra.mxu0 0
        %3024 = vmatprep.subr.bf16.mxu0 0
        %3025 = vmatpush1.bf16.msra.mxu0 0
        %3026 = vmatprep.subr.bf16.mxu0 0
        %3027 = vmatpush1.bf16.msra.mxu0 0
        %3028 = vmatprep.subr.bf16.mxu0 0
        %3029 = vmatpush1.bf16.msra.mxu0 0
        %3030 = vmatprep.subr.bf16.mxu0 0
        %3031 = vmatpush1.bf16.msra.mxu0 0
        %3032 = vmatprep.subr.bf16.mxu0 0
        %3033 = vmatpush1.bf16.msra.mxu0 0
        %3034 = vmatprep.subr.bf16.mxu0 0
        %3035 = vmatpush1.bf16.msra.mxu0 0
        %3036 = vmatprep.subr.bf16.mxu0 0
        %3037 = vmatpush1.bf16.msra.mxu0 0
        %3038 = vmatprep.subr.bf16.mxu0 0
        %3039 = vmatpush1.bf16.msra.mxu0 0
        %3040 = vmatprep.subr.bf16.mxu0 0
        %3041 = vmatpush1.bf16.msra.mxu0 0
        %3042 = vmatprep.subr.bf16.mxu0 0
        %3043 = vmatpush1.bf16.msra.mxu0 0
        %3044 = vmatprep.subr.bf16.mxu0 0
        %3045 = vmatpush1.bf16.msra.mxu0 0
        %3046 = vmatprep.subr.bf16.mxu0 0
        %3047 = vmatpush1.bf16.msra.mxu0 0
        %3048 = vmatprep.subr.bf16.mxu0 0
        %3049 = vmatpush1.bf16.msra.mxu0 0
        %3050 = vmatprep.mubr.bf16.mxu0 0
        %3051 = vmatmul.mubr.bf16.gmra.mrb[0].mxu0 %v2764
        %v3052 = vpop.f32.mrb[0].mxu0
        %v3053 = vadd.f32 %v2989, %v3052
        %v3054 = vpop.f32.mrb[0].mxu0
        %v3055 = vpop.f32.mrb[0].mxu0
        %v3056 = vpop.f32.mrb[0].mxu0
        %3057 = vdwg.mxu0
        %v3062 = vunpack.c.l.b16 %v2966
        %v3063 = vunpack.c.l.b16 %v2967
        %v3064 = vunpack.c.l.b16 %v2968
        %v3065 = vunpack.c.l.b16 %v2969
        %v3066 = vpack.c.b16 %v3063, %v3062
        %v3067 = vpack.c.b16 %v3065, %v3064
        %3070 = vmatprep.subr.bf16.mxu0 0
        %3071 = vmatpush1.bf16.msra.mxu0 %v3066
        %3072 = vmatprep.subr.bf16.mxu0 0
        %3073 = vmatpush1.bf16.msra.mxu0 %v3067
        %3074 = vmatprep.subr.bf16.mxu0 0
        %3075 = vmatpush1.bf16.msra.mxu0 0
        %3076 = vmatprep.subr.bf16.mxu0 0
        %3077 = vmatpush1.bf16.msra.mxu0 0
        %3078 = vmatprep.subr.bf16.mxu0 0
        %3079 = vmatpush1.bf16.msra.mxu0 0
        %3080 = vmatprep.subr.bf16.mxu0 0
        %3081 = vmatpush1.bf16.msra.mxu0 0
        %3082 = vmatprep.subr.bf16.mxu0 0
        %3083 = vmatpush1.bf16.msra.mxu0 0
        %3084 = vmatprep.subr.bf16.mxu0 0
        %3085 = vmatpush1.bf16.msra.mxu0 0
        %3086 = vmatprep.subr.bf16.mxu0 0
        %3087 = vmatpush1.bf16.msra.mxu0 0
        %3088 = vmatprep.subr.bf16.mxu0 0
        %3089 = vmatpush1.bf16.msra.mxu0 0
        %3090 = vmatprep.subr.bf16.mxu0 0
        %3091 = vmatpush1.bf16.msra.mxu0 0
        %3092 = vmatprep.subr.bf16.mxu0 0
        %3093 = vmatpush1.bf16.msra.mxu0 0
        %3094 = vmatprep.subr.bf16.mxu0 0
        %3095 = vmatpush1.bf16.msra.mxu0 0
        %3096 = vmatprep.subr.bf16.mxu0 0
        %3097 = vmatpush1.bf16.msra.mxu0 0
        %3098 = vmatprep.subr.bf16.mxu0 0
        %3099 = vmatpush1.bf16.msra.mxu0 0
        %3100 = vmatprep.subr.bf16.mxu0 0
        %3101 = vmatpush1.bf16.msra.mxu0 0
        %3102 = vmatprep.mubr.bf16.mxu0 0
        %3103 = vmatmul.mubr.bf16.gmra.mrb[0].mxu0 %v2764
        %v3104 = vpop.f32.mrb[0].mxu0
        %v3105 = vadd.f32 %v2993, %v3104
        %v3106 = vpop.f32.mrb[0].mxu0
        %v3107 = vpop.f32.mrb[0].mxu0
        %v3108 = vpop.f32.mrb[0].mxu0
        %3109 = vdwg.mxu0
        %v3114 = vunpack.c.l.b16 %v2970
        %v3115 = vunpack.c.l.b16 %v2971
        %v3116 = vunpack.c.l.b16 %v2972
        %v3117 = vunpack.c.l.b16 %v2973
        %v3118 = vpack.c.b16 %v3115, %v3114
        %v3119 = vpack.c.b16 %v3117, %v3116
        %3122 = vmatprep.subr.bf16.mxu0 0
        %3123 = vmatpush1.bf16.msra.mxu0 %v3118
        %3124 = vmatprep.subr.bf16.mxu0 0
        %3125 = vmatpush1.bf16.msra.mxu0 %v3119
        %3126 = vmatprep.subr.bf16.mxu0 0
        %3127 = vmatpush1.bf16.msra.mxu0 0
        %3128 = vmatprep.subr.bf16.mxu0 0
        %3129 = vmatpush1.bf16.msra.mxu0 0
        %3130 = vmatprep.subr.bf16.mxu0 0
        %3131 = vmatpush1.bf16.msra.mxu0 0
        %3132 = vmatprep.subr.bf16.mxu0 0
        %3133 = vmatpush1.bf16.msra.mxu0 0
        %3134 = vmatprep.subr.bf16.mxu0 0
        %3135 = vmatpush1.bf16.msra.mxu0 0
        %3136 = vmatprep.subr.bf16.mxu0 0
        %3137 = vmatpush1.bf16.msra.mxu0 0
        %3138 = vmatprep.subr.bf16.mxu0 0
        %3139 = vmatpush1.bf16.msra.mxu0 0
        %3140 = vmatprep.subr.bf16.mxu0 0
        %3141 = vmatpush1.bf16.msra.mxu0 0
        %3142 = vmatprep.subr.bf16.mxu0 0
        %3143 = vmatpush1.bf16.msra.mxu0 0
        %3144 = vmatprep.subr.bf16.mxu0 0
        %3145 = vmatpush1.bf16.msra.mxu0 0
        %3146 = vmatprep.subr.bf16.mxu0 0
        %3147 = vmatpush1.bf16.msra.mxu0 0
        %3148 = vmatprep.subr.bf16.mxu0 0
        %3149 = vmatpush1.bf16.msra.mxu0 0
        %3150 = vmatprep.subr.bf16.mxu0 0
        %3151 = vmatpush1.bf16.msra.mxu0 0
        %3152 = vmatprep.subr.bf16.mxu0 0
        %3153 = vmatpush1.bf16.msra.mxu0 0
        %3154 = vmatprep.mubr.bf16.mxu0 0
        %3155 = vmatmul.mubr.bf16.gmra.mrb[0].mxu0 %v2764
        %v3156 = vpop.f32.mrb[0].mxu0
        %v3157 = vadd.f32 %v2997, %v3156
        %v3158 = vpop.f32.mrb[0].mxu0
        %v3159 = vpop.f32.mrb[0].mxu0
        %v3160 = vpop.f32.mrb[0].mxu0
        %3161 = vdwg.mxu0
        %v3166 = vunpack.c.l.b16 %v2974
        %v3167 = vunpack.c.l.b16 %v2975
        %v3168 = vunpack.c.l.b16 %v2976
        %v3169 = vunpack.c.l.b16 %v2977
        %v3170 = vpack.c.b16 %v3167, %v3166
        %v3171 = vpack.c.b16 %v3169, %v3168
        %3174 = vmatprep.subr.bf16.mxu0 0
        %3175 = vmatpush1.bf16.msra.mxu0 %v3170
        %3176 = vmatprep.subr.bf16.mxu0 0
        %3177 = vmatpush1.bf16.msra.mxu0 %v3171
        %3178 = vmatprep.subr.bf16.mxu0 0
        %3179 = vmatpush1.bf16.msra.mxu0 0
        %3180 = vmatprep.subr.bf16.mxu0 0
        %3181 = vmatpush1.bf16.msra.mxu0 0
        %3182 = vmatprep.subr.bf16.mxu0 0
        %3183 = vmatpush1.bf16.msra.mxu0 0
        %3184 = vmatprep.subr.bf16.mxu0 0
        %3185 = vmatpush1.bf16.msra.mxu0 0
        %3186 = vmatprep.subr.bf16.mxu0 0
        %3187 = vmatpush1.bf16.msra.mxu0 0
        %3188 = vmatprep.subr.bf16.mxu0 0
        %3189 = vmatpush1.bf16.msra.mxu0 0
        %3190 = vmatprep.subr.bf16.mxu0 0
        %3191 = vmatpush1.bf16.msra.mxu0 0
        %3192 = vmatprep.subr.bf16.mxu0 0
        %3193 = vmatpush1.bf16.msra.mxu0 0
        %3194 = vmatprep.subr.bf16.mxu0 0
        %3195 = vmatpush1.bf16.msra.mxu0 0
        %3196 = vmatprep.subr.bf16.mxu0 0
        %3197 = vmatpush1.bf16.msra.mxu0 0
        %3198 = vmatprep.subr.bf16.mxu0 0
        %3199 = vmatpush1.bf16.msra.mxu0 0
        %3200 = vmatprep.subr.bf16.mxu0 0
        %3201 = vmatpush1.bf16.msra.mxu0 0
        %3202 = vmatprep.subr.bf16.mxu0 0
        %3203 = vmatpush1.bf16.msra.mxu0 0
        %3204 = vmatprep.subr.bf16.mxu0 0
        %3205 = vmatpush1.bf16.msra.mxu0 0
        %3206 = vmatprep.mubr.bf16.mxu0 0
        %3207 = vmatmul.mubr.bf16.gmra.mrb[0].mxu0 %v2764
        %v3208 = vpop.f32.mrb[0].mxu0
        %v3209 = vadd.f32 %v3001, %v3208
        %v3210 = vpop.f32.mrb[0].mxu0
        %v3211 = vpop.f32.mrb[0].mxu0
        %v3212 = vpop.f32.mrb[0].mxu0
        %3213 = vdwg.mxu0
        %v3214 = vld [vmem:[%s45] sm:$0xf]
        %v3215 = vld [vmem:[%s45 + $0x4] sm:$0xf]
        %v3216 = vld [vmem:[%s45 + $0x8] sm:$0xf]
        %v3217 = vld [vmem:[%s45 + $0xc] sm:$0xf]
        %v3218 = vld [vmem:[%s45 + $0x10] sm:$0xf]
        %v3219 = vld [vmem:[%s45 + $0x14] sm:$0xf]
        %v3220 = vld [vmem:[%s45 + $0x18] sm:$0xf]
        %v3221 = vld [vmem:[%s45 + $0x1c] sm:$0xf]
        %v3222 = vld [vmem:[%s45 + $0x20] sm:$0xf]
        %v3223 = vld [vmem:[%s45 + $0x24] sm:$0xf]
        %v3224 = vld [vmem:[%s45 + $0x28] sm:$0xf]
        %v3225 = vld [vmem:[%s45 + $0x2c] sm:$0xf]
        %v3226 = vld [vmem:[%s45 + $0x30] sm:$0xf]
        %v3227 = vld [vmem:[%s45 + $0x34] sm:$0xf]
        %v3228 = vld [vmem:[%s45 + $0x38] sm:$0xf]
        %v3229 = vld [vmem:[%s45 + $0x3c] sm:$0xf]
        %v3230 = vld [vmem:[%s47] sm:$0x1]
        %v3231 = vld [vmem:[%s47 + $0x1] sm:$0x1]
        %v3232 = vld [vmem:[%s47 + $0x2] sm:$0x1]
        %v3233 = vld [vmem:[%s47 + $0x3] sm:$0x1]
        %v3238 = vlaneseq
        %v3239 = vshrl.u32 %v3238, 7
        %v3240 = vsub.s32 0, %v3239
        %v3241 = vrot.slane %v3230, %v3240
        %v3242 = vlaneseq
        %v3243 = vshrl.u32 %v3242, 7
        %v3244 = vsub.s32 0, %v3243
        %v3245 = vrot.slane %v3231, %v3244
        %v3246 = vlaneseq
        %v3247 = vshrl.u32 %v3246, 7
        %v3248 = vsub.s32 0, %v3247
        %v3249 = vrot.slane %v3232, %v3248
        %v3250 = vlaneseq
        %v3251 = vshrl.u32 %v3250, 7
        %v3252 = vsub.s32 0, %v3251
        %v3253 = vrot.slane %v3233, %v3252
        %v3262 = vunpack.c.l.b16 %v3214
        %v3263 = vunpack.c.l.b16 %v3215
        %v3264 = vunpack.c.l.b16 %v3216
        %v3265 = vunpack.c.l.b16 %v3217
        %v3266 = vpack.c.b16 %v3263, %v3262
        %v3267 = vpack.c.b16 %v3265, %v3264
        %3270 = vmatprep.subr.bf16.mxu0 0
        %3271 = vmatpush1.bf16.msra.mxu0 %v3266
        %3272 = vmatprep.subr.bf16.mxu0 0
        %3273 = vmatpush1.bf16.msra.mxu0 %v3267
        %3274 = vmatprep.subr.bf16.mxu0 0
        %3275 = vmatpush1.bf16.msra.mxu0 0
        %3276 = vmatprep.subr.bf16.mxu0 0
        %3277 = vmatpush1.bf16.msra.mxu0 0
        %3278 = vmatprep.subr.bf16.mxu0 0
        %3279 = vmatpush1.bf16.msra.mxu0 0
        %3280 = vmatprep.subr.bf16.mxu0 0
        %3281 = vmatpush1.bf16.msra.mxu0 0
        %3282 = vmatprep.subr.bf16.mxu0 0
        %3283 = vmatpush1.bf16.msra.mxu0 0
        %3284 = vmatprep.subr.bf16.mxu0 0
        %3285 = vmatpush1.bf16.msra.mxu0 0
        %3286 = vmatprep.subr.bf16.mxu0 0
        %3287 = vmatpush1.bf16.msra.mxu0 0
        %3288 = vmatprep.subr.bf16.mxu0 0
        %3289 = vmatpush1.bf16.msra.mxu0 0
        %3290 = vmatprep.subr.bf16.mxu0 0
        %3291 = vmatpush1.bf16.msra.mxu0 0
        %3292 = vmatprep.subr.bf16.mxu0 0
        %3293 = vmatpush1.bf16.msra.mxu0 0
        %3294 = vmatprep.subr.bf16.mxu0 0
        %3295 = vmatpush1.bf16.msra.mxu0 0
        %3296 = vmatprep.subr.bf16.mxu0 0
        %3297 = vmatpush1.bf16.msra.mxu0 0
        %3298 = vmatprep.subr.bf16.mxu0 0
        %3299 = vmatpush1.bf16.msra.mxu0 0
        %3300 = vmatprep.subr.bf16.mxu0 0
        %3301 = vmatpush1.bf16.msra.mxu0 0
        %3302 = vmatprep.mubr.bf16.mxu0 0
        %3303 = vmatmul.mubr.bf16.gmra.mrb[0].mxu0 %v2764
        %v3304 = vpop.f32.mrb[0].mxu0
        %v3305 = vadd.f32 %v3241, %v3304
        %v3306 = vpop.f32.mrb[0].mxu0
        %v3307 = vpop.f32.mrb[0].mxu0
        %v3308 = vpop.f32.mrb[0].mxu0
        %3309 = vdwg.mxu0
        %v3314 = vunpack.c.l.b16 %v3218
        %v3315 = vunpack.c.l.b16 %v3219
        %v3316 = vunpack.c.l.b16 %v3220
        %v3317 = vunpack.c.l.b16 %v3221
        %v3318 = vpack.c.b16 %v3315, %v3314
        %v3319 = vpack.c.b16 %v3317, %v3316
        %3322 = vmatprep.subr.bf16.mxu0 0
        %3323 = vmatpush1.bf16.msra.mxu0 %v3318
        %3324 = vmatprep.subr.bf16.mxu0 0
        %3325 = vmatpush1.bf16.msra.mxu0 %v3319
        %3326 = vmatprep.subr.bf16.mxu0 0
        %3327 = vmatpush1.bf16.msra.mxu0 0
        %3328 = vmatprep.subr.bf16.mxu0 0
        %3329 = vmatpush1.bf16.msra.mxu0 0
        %3330 = vmatprep.subr.bf16.mxu0 0
        %3331 = vmatpush1.bf16.msra.mxu0 0
        %3332 = vmatprep.subr.bf16.mxu0 0
        %3333 = vmatpush1.bf16.msra.mxu0 0
        %3334 = vmatprep.subr.bf16.mxu0 0
        %3335 = vmatpush1.bf16.msra.mxu0 0
        %3336 = vmatprep.subr.bf16.mxu0 0
        %3337 = vmatpush1.bf16.msra.mxu0 0
        %3338 = vmatprep.subr.bf16.mxu0 0
        %3339 = vmatpush1.bf16.msra.mxu0 0
        %3340 = vmatprep.subr.bf16.mxu0 0
        %3341 = vmatpush1.bf16.msra.mxu0 0
        %3342 = vmatprep.subr.bf16.mxu0 0
        %3343 = vmatpush1.bf16.msra.mxu0 0
        %3344 = vmatprep.subr.bf16.mxu0 0
        %3345 = vmatpush1.bf16.msra.mxu0 0
        %3346 = vmatprep.subr.bf16.mxu0 0
        %3347 = vmatpush1.bf16.msra.mxu0 0
        %3348 = vmatprep.subr.bf16.mxu0 0
        %3349 = vmatpush1.bf16.msra.mxu0 0
        %3350 = vmatprep.subr.bf16.mxu0 0
        %3351 = vmatpush1.bf16.msra.mxu0 0
        %3352 = vmatprep.subr.bf16.mxu0 0
        %3353 = vmatpush1.bf16.msra.mxu0 0
        %3354 = vmatprep.mubr.bf16.mxu0 0
        %3355 = vmatmul.mubr.bf16.gmra.mrb[0].mxu0 %v2764
        %v3356 = vpop.f32.mrb[0].mxu0
        %v3357 = vadd.f32 %v3245, %v3356
        %v3358 = vpop.f32.mrb[0].mxu0
        %v3359 = vpop.f32.mrb[0].mxu0
        %v3360 = vpop.f32.mrb[0].mxu0
        %3361 = vdwg.mxu0
        %v3366 = vunpack.c.l.b16 %v3222
        %v3367 = vunpack.c.l.b16 %v3223
        %v3368 = vunpack.c.l.b16 %v3224
        %v3369 = vunpack.c.l.b16 %v3225
        %v3370 = vpack.c.b16 %v3367, %v3366
        %v3371 = vpack.c.b16 %v3369, %v3368
        %3374 = vmatprep.subr.bf16.mxu0 0
        %3375 = vmatpush1.bf16.msra.mxu0 %v3370
        %3376 = vmatprep.subr.bf16.mxu0 0
        %3377 = vmatpush1.bf16.msra.mxu0 %v3371
        %3378 = vmatprep.subr.bf16.mxu0 0
        %3379 = vmatpush1.bf16.msra.mxu0 0
        %3380 = vmatprep.subr.bf16.mxu0 0
        %3381 = vmatpush1.bf16.msra.mxu0 0
        %3382 = vmatprep.subr.bf16.mxu0 0
        %3383 = vmatpush1.bf16.msra.mxu0 0
        %3384 = vmatprep.subr.bf16.mxu0 0
        %3385 = vmatpush1.bf16.msra.mxu0 0
        %3386 = vmatprep.subr.bf16.mxu0 0
        %3387 = vmatpush1.bf16.msra.mxu0 0
        %3388 = vmatprep.subr.bf16.mxu0 0
        %3389 = vmatpush1.bf16.msra.mxu0 0
        %3390 = vmatprep.subr.bf16.mxu0 0
        %3391 = vmatpush1.bf16.msra.mxu0 0
        %3392 = vmatprep.subr.bf16.mxu0 0
        %3393 = vmatpush1.bf16.msra.mxu0 0
        %3394 = vmatprep.subr.bf16.mxu0 0
        %3395 = vmatpush1.bf16.msra.mxu0 0
        %3396 = vmatprep.subr.bf16.mxu0 0
        %3397 = vmatpush1.bf16.msra.mxu0 0
        %3398 = vmatprep.subr.bf16.mxu0 0
        %3399 = vmatpush1.bf16.msra.mxu0 0
        %3400 = vmatprep.subr.bf16.mxu0 0
        %3401 = vmatpush1.bf16.msra.mxu0 0
        %3402 = vmatprep.subr.bf16.mxu0 0
        %3403 = vmatpush1.bf16.msra.mxu0 0
        %3404 = vmatprep.subr.bf16.mxu0 0
        %3405 = vmatpush1.bf16.msra.mxu0 0
        %3406 = vmatprep.mubr.bf16.mxu0 0
        %3407 = vmatmul.mubr.bf16.gmra.mrb[0].mxu0 %v2764
        %v3408 = vpop.f32.mrb[0].mxu0
        %v3409 = vadd.f32 %v3249, %v3408
        %v3410 = vpop.f32.mrb[0].mxu0
        %v3411 = vpop.f32.mrb[0].mxu0
        %v3412 = vpop.f32.mrb[0].mxu0
        %3413 = vdwg.mxu0
        %v3418 = vunpack.c.l.b16 %v3226
        %v3419 = vunpack.c.l.b16 %v3227
        %v3420 = vunpack.c.l.b16 %v3228
        %v3421 = vunpack.c.l.b16 %v3229
        %v3422 = vpack.c.b16 %v3419, %v3418
        %v3423 = vpack.c.b16 %v3421, %v3420
        %3426 = vmatprep.subr.bf16.mxu0 0
        %3427 = vmatpush1.bf16.msra.mxu0 %v3422
        %3428 = vmatprep.subr.bf16.mxu0 0
        %3429 = vmatpush1.bf16.msra.mxu0 %v3423
        %3430 = vmatprep.subr.bf16.mxu0 0
        %3431 = vmatpush1.bf16.msra.mxu0 0
        %3432 = vmatprep.subr.bf16.mxu0 0
        %3433 = vmatpush1.bf16.msra.mxu0 0
        %3434 = vmatprep.subr.bf16.mxu0 0
        %3435 = vmatpush1.bf16.msra.mxu0 0
        %3436 = vmatprep.subr.bf16.mxu0 0
        %3437 = vmatpush1.bf16.msra.mxu0 0
        %3438 = vmatprep.subr.bf16.mxu0 0
        %3439 = vmatpush1.bf16.msra.mxu0 0
        %3440 = vmatprep.subr.bf16.mxu0 0
        %3441 = vmatpush1.bf16.msra.mxu0 0
        %3442 = vmatprep.subr.bf16.mxu0 0
        %3443 = vmatpush1.bf16.msra.mxu0 0
        %3444 = vmatprep.subr.bf16.mxu0 0
        %3445 = vmatpush1.bf16.msra.mxu0 0
        %3446 = vmatprep.subr.bf16.mxu0 0
        %3447 = vmatpush1.bf16.msra.mxu0 0
        %3448 = vmatprep.subr.bf16.mxu0 0
        %3449 = vmatpush1.bf16.msra.mxu0 0
        %3450 = vmatprep.subr.bf16.mxu0 0
        %3451 = vmatpush1.bf16.msra.mxu0 0
        %3452 = vmatprep.subr.bf16.mxu0 0
        %3453 = vmatpush1.bf16.msra.mxu0 0
        %3454 = vmatprep.subr.bf16.mxu0 0
        %3455 = vmatpush1.bf16.msra.mxu0 0
        %3456 = vmatprep.subr.bf16.mxu0 0
        %3457 = vmatpush1.bf16.msra.mxu0 0
        %3458 = vmatprep.mubr.bf16.mxu0 0
        %3459 = vmatmul.mubr.bf16.gmra.mrb[0].mxu0 %v2764
        %v3460 = vpop.f32.mrb[0].mxu0
        %v3461 = vadd.f32 %v3253, %v3460
        %v3462 = vpop.f32.mrb[0].mxu0
        %v3463 = vpop.f32.mrb[0].mxu0
        %v3464 = vpop.f32.mrb[0].mxu0
        %3465 = vdwg.mxu0
        %v3466 = vmul.f32 %v2801, 0.35355338
        %v3467 = vmul.f32 %v2853, 0.35355338
        %v3468 = vmul.f32 %v2905, 0.35355338
        %v3469 = vmul.f32 %v2957, 0.35355338
        %v3470 = vpack.c.bf16 %v3466, %v3466
        %v3471 = vpack.c.bf16 %v3467, %v3467
        %v3472 = vpack.c.bf16 %v3468, %v3468
        %v3473 = vpack.c.bf16 %v3469, %v3469
        %v3474 = vpack.c.bf16 %v3053, %v3053
        %v3475 = vpack.c.bf16 %v3105, %v3105
        %v3476 = vpack.c.bf16 %v3157, %v3157
        %v3477 = vpack.c.bf16 %v3209, %v3209
        %v3479 = vsel %vm1878, %v3470, 0
        %v3482 = vsel %vm1878, %v3474, 0
        %3484 = vmatprep.subr.bf16.mxu0 0
        %3485 = vmatpush1.bf16.xpose.msra.mxu0 %v3482
        %3486 = vmatprep.subr.bf16.mxu0 0
        %3487 = vmatpush1.bf16.xpose.msra.mxu0 0
        %3488 = vmatprep.subr.bf16.mxu0 0
        %3489 = vmatpush1.bf16.xpose.msra.mxu0 0
        %3490 = vmatprep.subr.bf16.mxu0 0
        %3491 = vmatpush1.bf16.xpose.msra.mxu0 0
        %3492 = vmatprep.subr.bf16.mxu0 0
        %3493 = vmatpush1.bf16.xpose.msra.mxu0 0
        %3494 = vmatprep.subr.bf16.mxu0 0
        %3495 = vmatpush1.bf16.xpose.msra.mxu0 0
        %3496 = vmatprep.subr.bf16.mxu0 0
        %3497 = vmatpush1.bf16.xpose.msra.mxu0 0
        %3498 = vmatprep.subr.bf16.mxu0 0
        %3499 = vmatpush1.bf16.xpose.msra.mxu0 0
        %3500 = vmatprep.subr.bf16.mxu0 0
        %3501 = vmatpush1.bf16.xpose.msra.mxu0 0
        %3502 = vmatprep.subr.bf16.mxu0 0
        %3503 = vmatpush1.bf16.xpose.msra.mxu0 0
        %3504 = vmatprep.subr.bf16.mxu0 0
        %3505 = vmatpush1.bf16.xpose.msra.mxu0 0
        %3506 = vmatprep.subr.bf16.mxu0 0
        %3507 = vmatpush1.bf16.xpose.msra.mxu0 0
        %3508 = vmatprep.subr.bf16.mxu0 0
        %3509 = vmatpush1.bf16.xpose.msra.mxu0 0
        %3510 = vmatprep.subr.bf16.mxu0 0
        %3511 = vmatpush1.bf16.xpose.msra.mxu0 0
        %3512 = vmatprep.subr.bf16.mxu0 0
        %3513 = vmatpush1.bf16.xpose.msra.mxu0 0
        %3514 = vmatprep.subr.bf16.mxu0 0
        %3515 = vmatpush1.bf16.xpose.msra.mxu0 0
        %3516 = vmatprep.mubr.bf16.mxu0 0
        %3517 = vmatmul.mubr.bf16.gmra.mrb[0].mxu0 %v3479
        %v3518 = vpop.f32.mrb[0].mxu0
        %v3519 = vadd.f32 %v1876, %v3518
        %v3520 = vpop.f32.mrb[0].mxu0
        %v3521 = vpop.f32.mrb[0].mxu0
        %v3522 = vpop.f32.mrb[0].mxu0
        %3523 = vdwg.mxu0
        %v3525 = vsel %vm1878, %v3471, 0
        %v3528 = vsel %vm1878, %v3475, 0
        %3530 = vmatprep.subr.bf16.mxu0 0
        %3531 = vmatpush1.bf16.xpose.msra.mxu0 %v3528
        %3532 = vmatprep.subr.bf16.mxu0 0
        %3533 = vmatpush1.bf16.xpose.msra.mxu0 0
        %3534 = vmatprep.subr.bf16.mxu0 0
        %3535 = vmatpush1.bf16.xpose.msra.mxu0 0
        %3536 = vmatprep.subr.bf16.mxu0 0
        %3537 = vmatpush1.bf16.xpose.msra.mxu0 0
        %3538 = vmatprep.subr.bf16.mxu0 0
        %3539 = vmatpush1.bf16.xpose.msra.mxu0 0
        %3540 = vmatprep.subr.bf16.mxu0 0
        %3541 = vmatpush1.bf16.xpose.msra.mxu0 0
        %3542 = vmatprep.subr.bf16.mxu0 0
        %3543 = vmatpush1.bf16.xpose.msra.mxu0 0
        %3544 = vmatprep.subr.bf16.mxu0 0
        %3545 = vmatpush1.bf16.xpose.msra.mxu0 0
        %3546 = vmatprep.subr.bf16.mxu0 0
        %3547 = vmatpush1.bf16.xpose.msra.mxu0 0
        %3548 = vmatprep.subr.bf16.mxu0 0
        %3549 = vmatpush1.bf16.xpose.msra.mxu0 0
        %3550 = vmatprep.subr.bf16.mxu0 0
        %3551 = vmatpush1.bf16.xpose.msra.mxu0 0
        %3552 = vmatprep.subr.bf16.mxu0 0
        %3553 = vmatpush1.bf16.xpose.msra.mxu0 0
        %3554 = vmatprep.subr.bf16.mxu0 0
        %3555 = vmatpush1.bf16.xpose.msra.mxu0 0
        %3556 = vmatprep.subr.bf16.mxu0 0
        %3557 = vmatpush1.bf16.xpose.msra.mxu0 0
        %3558 = vmatprep.subr.bf16.mxu0 0
        %3559 = vmatpush1.bf16.xpose.msra.mxu0 0
        %3560 = vmatprep.subr.bf16.mxu0 0
        %3561 = vmatpush1.bf16.xpose.msra.mxu0 0
        %3562 = vmatprep.mubr.bf16.mxu0 0
        %3563 = vmatmul.mubr.bf16.gmra.mrb[0].mxu0 %v3525
        %v3564 = vpop.f32.mrb[0].mxu0
        %v3565 = vadd.f32 %v1876, %v3564
        %v3566 = vpop.f32.mrb[0].mxu0
        %v3567 = vpop.f32.mrb[0].mxu0
        %v3568 = vpop.f32.mrb[0].mxu0
        %3569 = vdwg.mxu0
        %v3571 = vsel %vm1878, %v3472, 0
        %v3574 = vsel %vm1878, %v3476, 0
        %3576 = vmatprep.subr.bf16.mxu0 0
        %3577 = vmatpush1.bf16.xpose.msra.mxu0 %v3574
        %3578 = vmatprep.subr.bf16.mxu0 0
        %3579 = vmatpush1.bf16.xpose.msra.mxu0 0
        %3580 = vmatprep.subr.bf16.mxu0 0
        %3581 = vmatpush1.bf16.xpose.msra.mxu0 0
        %3582 = vmatprep.subr.bf16.mxu0 0
        %3583 = vmatpush1.bf16.xpose.msra.mxu0 0
        %3584 = vmatprep.subr.bf16.mxu0 0
        %3585 = vmatpush1.bf16.xpose.msra.mxu0 0
        %3586 = vmatprep.subr.bf16.mxu0 0
        %3587 = vmatpush1.bf16.xpose.msra.mxu0 0
        %3588 = vmatprep.subr.bf16.mxu0 0
        %3589 = vmatpush1.bf16.xpose.msra.mxu0 0
        %3590 = vmatprep.subr.bf16.mxu0 0
        %3591 = vmatpush1.bf16.xpose.msra.mxu0 0
        %3592 = vmatprep.subr.bf16.mxu0 0
        %3593 = vmatpush1.bf16.xpose.msra.mxu0 0
        %3594 = vmatprep.subr.bf16.mxu0 0
        %3595 = vmatpush1.bf16.xpose.msra.mxu0 0
        %3596 = vmatprep.subr.bf16.mxu0 0
        %3597 = vmatpush1.bf16.xpose.msra.mxu0 0
        %3598 = vmatprep.subr.bf16.mxu0 0
        %3599 = vmatpush1.bf16.xpose.msra.mxu0 0
        %3600 = vmatprep.subr.bf16.mxu0 0
        %3601 = vmatpush1.bf16.xpose.msra.mxu0 0
        %3602 = vmatprep.subr.bf16.mxu0 0
        %3603 = vmatpush1.bf16.xpose.msra.mxu0 0
        %3604 = vmatprep.subr.bf16.mxu0 0
        %3605 = vmatpush1.bf16.xpose.msra.mxu0 0
        %3606 = vmatprep.subr.bf16.mxu0 0
        %3607 = vmatpush1.bf16.xpose.msra.mxu0 0
        %3608 = vmatprep.mubr.bf16.mxu0 0
        %3609 = vmatmul.mubr.bf16.gmra.mrb[0].mxu0 %v3571
        %v3610 = vpop.f32.mrb[0].mxu0
        %v3611 = vadd.f32 %v1876, %v3610
        %v3612 = vpop.f32.mrb[0].mxu0
        %v3613 = vpop.f32.mrb[0].mxu0
        %v3614 = vpop.f32.mrb[0].mxu0
        %3615 = vdwg.mxu0
        %v3617 = vsel %vm1878, %v3473, 0
        %v3620 = vsel %vm1878, %v3477, 0
        %3622 = vmatprep.subr.bf16.mxu0 0
        %3623 = vmatpush1.bf16.xpose.msra.mxu0 %v3620
        %3624 = vmatprep.subr.bf16.mxu0 0
        %3625 = vmatpush1.bf16.xpose.msra.mxu0 0
        %3626 = vmatprep.subr.bf16.mxu0 0
        %3627 = vmatpush1.bf16.xpose.msra.mxu0 0
        %3628 = vmatprep.subr.bf16.mxu0 0
        %3629 = vmatpush1.bf16.xpose.msra.mxu0 0
        %3630 = vmatprep.subr.bf16.mxu0 0
        %3631 = vmatpush1.bf16.xpose.msra.mxu0 0
        %3632 = vmatprep.subr.bf16.mxu0 0
        %3633 = vmatpush1.bf16.xpose.msra.mxu0 0
        %3634 = vmatprep.subr.bf16.mxu0 0
        %3635 = vmatpush1.bf16.xpose.msra.mxu0 0
        %3636 = vmatprep.subr.bf16.mxu0 0
        %3637 = vmatpush1.bf16.xpose.msra.mxu0 0
        %3638 = vmatprep.subr.bf16.mxu0 0
        %3639 = vmatpush1.bf16.xpose.msra.mxu0 0
        %3640 = vmatprep.subr.bf16.mxu0 0
        %3641 = vmatpush1.bf16.xpose.msra.mxu0 0
        %3642 = vmatprep.subr.bf16.mxu0 0
        %3643 = vmatpush1.bf16.xpose.msra.mxu0 0
        %3644 = vmatprep.subr.bf16.mxu0 0
        %3645 = vmatpush1.bf16.xpose.msra.mxu0 0
        %3646 = vmatprep.subr.bf16.mxu0 0
        %3647 = vmatpush1.bf16.xpose.msra.mxu0 0
        %3648 = vmatprep.subr.bf16.mxu0 0
        %3649 = vmatpush1.bf16.xpose.msra.mxu0 0
        %3650 = vmatprep.subr.bf16.mxu0 0
        %3651 = vmatpush1.bf16.xpose.msra.mxu0 0
        %3652 = vmatprep.subr.bf16.mxu0 0
        %3653 = vmatpush1.bf16.xpose.msra.mxu0 0
        %3654 = vmatprep.mubr.bf16.mxu0 0
        %3655 = vmatmul.mubr.bf16.gmra.mrb[0].mxu0 %v3617
        %v3656 = vpop.f32.mrb[0].mxu0
        %v3657 = vadd.f32 %v1876, %v3656
        %v3658 = vpop.f32.mrb[0].mxu0
        %v3659 = vpop.f32.mrb[0].mxu0
        %v3660 = vpop.f32.mrb[0].mxu0
        %3661 = vdwg.mxu0
        %v3662 = vsel %vm1878, %v3519, -inf
        %3663 = vmax.xlane.f32.xlu0 %v3662
        %v3664 = vpop.xlane.xlu0 %3663
        %v3665 = vsel %vm1878, %v3565, -inf
        %3666 = vmax.xlane.f32.xlu0 %v3665
        %v3667 = vpop.xlane.xlu0 %3666
        %v3668 = vsel %vm1878, %v3611, -inf
        %3669 = vmax.xlane.f32.xlu0 %v3668
        %v3670 = vpop.xlane.xlu0 %3669
        %v3671 = vsel %vm1878, %v3657, -inf
        %3672 = vmax.xlane.f32.xlu0 %v3671
        %v3673 = vpop.xlane.xlu0 %3672
        %v3674 = vsub.f32 %v3519, %v3664
        %v3675 = vsub.f32 %v3565, %v3667
        %v3676 = vsub.f32 %v3611, %v3670
        %v3677 = vsub.f32 %v3657, %v3673
        %v3678 = vmul.f32 %v3674, 1.442695
        %v3679 = vpow.pop %v3678
        %v3680 = vmul.f32 %v3675, 1.442695
        %v3681 = vpow.pop %v3680
        %v3682 = vmul.f32 %v3676, 1.442695
        %v3683 = vpow.pop %v3682
        %v3684 = vmul.f32 %v3677, 1.442695
        %v3685 = vpow.pop %v3684
        %v3686 = vsel %vm1878, %v3679, 0.0
        %3687 = vadd.xlane.f32.xlu0 %v3686
        %v3688 = vpop.xlane.xlu0 %3687
        %v3689 = vsel %vm1878, %v3681, 0.0
        %3690 = vadd.xlane.f32.xlu0 %v3689
        %v3691 = vpop.xlane.xlu0 %3690
        %v3692 = vsel %vm1878, %v3683, 0.0
        %3693 = vadd.xlane.f32.xlu0 %v3692
        %v3694 = vpop.xlane.xlu0 %3693
        %v3695 = vsel %vm1878, %v3685, 0.0
        %3696 = vadd.xlane.f32.xlu0 %v3695
        %v3697 = vpop.xlane.xlu0 %3696
        %v3698 = vrcp.pop %v3688
        %v3699 = vrcp.pop %v3691
        %v3700 = vrcp.pop %v3694
        %v3701 = vrcp.pop %v3697
        %v3702 = vmul.f32 %v3679, %v3698
        %v3703 = vmul.f32 %v3681, %v3699
        %v3704 = vmul.f32 %v3683, %v3700
        %v3705 = vmul.f32 %v3685, %v3701
        %v3706 = vpack.c.bf16 %v3702, %v3702
        %v3707 = vpack.c.bf16 %v3703, %v3703
        %v3708 = vpack.c.bf16 %v3704, %v3704
        %v3709 = vpack.c.bf16 %v3705, %v3705
        %v3710 = vpack.c.bf16 %v3305, %v3305
        %v3711 = vpack.c.bf16 %v3357, %v3357
        %v3712 = vpack.c.bf16 %v3409, %v3409
        %v3713 = vpack.c.bf16 %v3461, %v3461
        %v3715 = vsel %vm1878, %v3706, 0
        %v3718 = vsel %vm2118, %v3710, 0
        %3720 = vmatprep.subr.bf16.mxu0 0
        %3721 = vmatpush1.bf16.msra.mxu0 %v3718
        %3722 = vmatprep.subr.bf16.mxu0 0
        %3723 = vmatpush1.bf16.msra.mxu0 0
        %3724 = vmatprep.subr.bf16.mxu0 0
        %3725 = vmatpush1.bf16.msra.mxu0 0
        %3726 = vmatprep.subr.bf16.mxu0 0
        %3727 = vmatpush1.bf16.msra.mxu0 0
        %3728 = vmatprep.subr.bf16.mxu0 0
        %3729 = vmatpush1.bf16.msra.mxu0 0
        %3730 = vmatprep.subr.bf16.mxu0 0
        %3731 = vmatpush1.bf16.msra.mxu0 0
        %3732 = vmatprep.subr.bf16.mxu0 0
        %3733 = vmatpush1.bf16.msra.mxu0 0
        %3734 = vmatprep.subr.bf16.mxu0 0
        %3735 = vmatpush1.bf16.msra.mxu0 0
        %3736 = vmatprep.subr.bf16.mxu0 0
        %3737 = vmatpush1.bf16.msra.mxu0 0
        %3738 = vmatprep.subr.bf16.mxu0 0
        %3739 = vmatpush1.bf16.msra.mxu0 0
        %3740 = vmatprep.subr.bf16.mxu0 0
        %3741 = vmatpush1.bf16.msra.mxu0 0
        %3742 = vmatprep.subr.bf16.mxu0 0
        %3743 = vmatpush1.bf16.msra.mxu0 0
        %3744 = vmatprep.subr.bf16.mxu0 0
        %3745 = vmatpush1.bf16.msra.mxu0 0
        %3746 = vmatprep.subr.bf16.mxu0 0
        %3747 = vmatpush1.bf16.msra.mxu0 0
        %3748 = vmatprep.subr.bf16.mxu0 0
        %3749 = vmatpush1.bf16.msra.mxu0 0
        %3750 = vmatprep.subr.bf16.mxu0 0
        %3751 = vmatpush1.bf16.msra.mxu0 0
        %3752 = vmatprep.mubr.bf16.mxu0 0
        %3753 = vmatmul.mubr.bf16.gmra.mrb[0].mxu0 %v3715
        %v3754 = vpop.f32.mrb[0].mxu0
        %v3755 = vadd.f32 0.0, %v3754
        %v3756 = vpop.f32.mrb[0].mxu0
        %v3757 = vpop.f32.mrb[0].mxu0
        %v3758 = vpop.f32.mrb[0].mxu0
        %3759 = vdwg.mxu0
        %v3761 = vsel %vm1878, %v3707, 0
        %v3764 = vsel %vm2118, %v3711, 0
        %3766 = vmatprep.subr.bf16.mxu0 0
        %3767 = vmatpush1.bf16.msra.mxu0 %v3764
        %3768 = vmatprep.subr.bf16.mxu0 0
        %3769 = vmatpush1.bf16.msra.mxu0 0
        %3770 = vmatprep.subr.bf16.mxu0 0
        %3771 = vmatpush1.bf16.msra.mxu0 0
        %3772 = vmatprep.subr.bf16.mxu0 0
        %3773 = vmatpush1.bf16.msra.mxu0 0
        %3774 = vmatprep.subr.bf16.mxu0 0
        %3775 = vmatpush1.bf16.msra.mxu0 0
        %3776 = vmatprep.subr.bf16.mxu0 0
        %3777 = vmatpush1.bf16.msra.mxu0 0
        %3778 = vmatprep.subr.bf16.mxu0 0
        %3779 = vmatpush1.bf16.msra.mxu0 0
        %3780 = vmatprep.subr.bf16.mxu0 0
        %3781 = vmatpush1.bf16.msra.mxu0 0
        %3782 = vmatprep.subr.bf16.mxu0 0
        %3783 = vmatpush1.bf16.msra.mxu0 0
        %3784 = vmatprep.subr.bf16.mxu0 0
        %3785 = vmatpush1.bf16.msra.mxu0 0
        %3786 = vmatprep.subr.bf16.mxu0 0
        %3787 = vmatpush1.bf16.msra.mxu0 0
        %3788 = vmatprep.subr.bf16.mxu0 0
        %3789 = vmatpush1.bf16.msra.mxu0 0
        %3790 = vmatprep.subr.bf16.mxu0 0
        %3791 = vmatpush1.bf16.msra.mxu0 0
        %3792 = vmatprep.subr.bf16.mxu0 0
        %3793 = vmatpush1.bf16.msra.mxu0 0
        %3794 = vmatprep.subr.bf16.mxu0 0
        %3795 = vmatpush1.bf16.msra.mxu0 0
        %3796 = vmatprep.subr.bf16.mxu0 0
        %3797 = vmatpush1.bf16.msra.mxu0 0
        %3798 = vmatprep.mubr.bf16.mxu0 0
        %3799 = vmatmul.mubr.bf16.gmra.mrb[0].mxu0 %v3761
        %v3800 = vpop.f32.mrb[0].mxu0
        %v3801 = vadd.f32 0.0, %v3800
        %v3802 = vpop.f32.mrb[0].mxu0
        %v3803 = vpop.f32.mrb[0].mxu0
        %v3804 = vpop.f32.mrb[0].mxu0
        %3805 = vdwg.mxu0
        %v3807 = vsel %vm1878, %v3708, 0
        %v3810 = vsel %vm2118, %v3712, 0
        %3812 = vmatprep.subr.bf16.mxu0 0
        %3813 = vmatpush1.bf16.msra.mxu0 %v3810
        %3814 = vmatprep.subr.bf16.mxu0 0
        %3815 = vmatpush1.bf16.msra.mxu0 0
        %3816 = vmatprep.subr.bf16.mxu0 0
        %3817 = vmatpush1.bf16.msra.mxu0 0
        %3818 = vmatprep.subr.bf16.mxu0 0
        %3819 = vmatpush1.bf16.msra.mxu0 0
        %3820 = vmatprep.subr.bf16.mxu0 0
        %3821 = vmatpush1.bf16.msra.mxu0 0
        %3822 = vmatprep.subr.bf16.mxu0 0
        %3823 = vmatpush1.bf16.msra.mxu0 0
        %3824 = vmatprep.subr.bf16.mxu0 0
        %3825 = vmatpush1.bf16.msra.mxu0 0
        %3826 = vmatprep.subr.bf16.mxu0 0
        %3827 = vmatpush1.bf16.msra.mxu0 0
        %3828 = vmatprep.subr.bf16.mxu0 0
        %3829 = vmatpush1.bf16.msra.mxu0 0
        %3830 = vmatprep.subr.bf16.mxu0 0
        %3831 = vmatpush1.bf16.msra.mxu0 0
        %3832 = vmatprep.subr.bf16.mxu0 0
        %3833 = vmatpush1.bf16.msra.mxu0 0
        %3834 = vmatprep.subr.bf16.mxu0 0
        %3835 = vmatpush1.bf16.msra.mxu0 0
        %3836 = vmatprep.subr.bf16.mxu0 0
        %3837 = vmatpush1.bf16.msra.mxu0 0
        %3838 = vmatprep.subr.bf16.mxu0 0
        %3839 = vmatpush1.bf16.msra.mxu0 0
        %3840 = vmatprep.subr.bf16.mxu0 0
        %3841 = vmatpush1.bf16.msra.mxu0 0
        %3842 = vmatprep.subr.bf16.mxu0 0
        %3843 = vmatpush1.bf16.msra.mxu0 0
        %3844 = vmatprep.mubr.bf16.mxu0 0
        %3845 = vmatmul.mubr.bf16.gmra.mrb[0].mxu0 %v3807
        %v3846 = vpop.f32.mrb[0].mxu0
        %v3847 = vadd.f32 0.0, %v3846
        %v3848 = vpop.f32.mrb[0].mxu0
        %v3849 = vpop.f32.mrb[0].mxu0
        %v3850 = vpop.f32.mrb[0].mxu0
        %3851 = vdwg.mxu0
        %v3853 = vsel %vm1878, %v3709, 0
        %v3856 = vsel %vm2118, %v3713, 0
        %3858 = vmatprep.subr.bf16.mxu0 0
        %3859 = vmatpush1.bf16.msra.mxu0 %v3856
        %3860 = vmatprep.subr.bf16.mxu0 0
        %3861 = vmatpush1.bf16.msra.mxu0 0
        %3862 = vmatprep.subr.bf16.mxu0 0
        %3863 = vmatpush1.bf16.msra.mxu0 0
        %3864 = vmatprep.subr.bf16.mxu0 0
        %3865 = vmatpush1.bf16.msra.mxu0 0
        %3866 = vmatprep.subr.bf16.mxu0 0
        %3867 = vmatpush1.bf16.msra.mxu0 0
        %3868 = vmatprep.subr.bf16.mxu0 0
        %3869 = vmatpush1.bf16.msra.mxu0 0
        %3870 = vmatprep.subr.bf16.mxu0 0
        %3871 = vmatpush1.bf16.msra.mxu0 0
        %3872 = vmatprep.subr.bf16.mxu0 0
        %3873 = vmatpush1.bf16.msra.mxu0 0
        %3874 = vmatprep.subr.bf16.mxu0 0
        %3875 = vmatpush1.bf16.msra.mxu0 0
        %3876 = vmatprep.subr.bf16.mxu0 0
        %3877 = vmatpush1.bf16.msra.mxu0 0
        %3878 = vmatprep.subr.bf16.mxu0 0
        %3879 = vmatpush1.bf16.msra.mxu0 0
        %3880 = vmatprep.subr.bf16.mxu0 0
        %3881 = vmatpush1.bf16.msra.mxu0 0
        %3882 = vmatprep.subr.bf16.mxu0 0
        %3883 = vmatpush1.bf16.msra.mxu0 0
        %3884 = vmatprep.subr.bf16.mxu0 0
        %3885 = vmatpush1.bf16.msra.mxu0 0
        %3886 = vmatprep.subr.bf16.mxu0 0
        %3887 = vmatpush1.bf16.msra.mxu0 0
        %3888 = vmatprep.subr.bf16.mxu0 0
        %3889 = vmatpush1.bf16.msra.mxu0 0
        %3890 = vmatprep.mubr.bf16.mxu0 0
        %3891 = vmatmul.mubr.bf16.gmra.mrb[0].mxu0 %v3853
        %v3892 = vpop.f32.mrb[0].mxu0
        %v3893 = vadd.f32 0.0, %v3892
        %v3894 = vpop.f32.mrb[0].mxu0
        %v3895 = vpop.f32.mrb[0].mxu0
        %v3896 = vpop.f32.mrb[0].mxu0
        %3897 = vdwg.mxu0
        %v3898 = vpack.c.bf16 %v3755, %v3755
        %v3899 = vpack.c.bf16 %v3801, %v3801
        %v3900 = vpack.c.bf16 %v3847, %v3847
        %v3901 = vpack.c.bf16 %v3893, %v3893
        %v3902 = vld [vmem:[%s49] sm:$0xf]
        %v3903 = vld [vmem:[%s49 + $0x4] sm:$0xf]
        %v3904 = vld [vmem:[%s49 + $0x8] sm:$0xf]
        %v3905 = vld [vmem:[%s49 + $0xc] sm:$0xf]
        %v3907 = vsel %vm1878, %v3898, 0
        %v3910 = vsel %vm2118, %v3902, 0
        %3912 = vmatprep.subr.bf16.mxu0 0
        %3913 = vmatpush1.bf16.msra.mxu0 %v3910
        %3914 = vmatprep.subr.bf16.mxu0 0
        %3915 = vmatpush1.bf16.msra.mxu0 0
        %3916 = vmatprep.subr.bf16.mxu0 0
        %3917 = vmatpush1.bf16.msra.mxu0 0
        %3918 = vmatprep.subr.bf16.mxu0 0
        %3919 = vmatpush1.bf16.msra.mxu0 0
        %3920 = vmatprep.subr.bf16.mxu0 0
        %3921 = vmatpush1.bf16.msra.mxu0 0
        %3922 = vmatprep.subr.bf16.mxu0 0
        %3923 = vmatpush1.bf16.msra.mxu0 0
        %3924 = vmatprep.subr.bf16.mxu0 0
        %3925 = vmatpush1.bf16.msra.mxu0 0
        %3926 = vmatprep.subr.bf16.mxu0 0
        %3927 = vmatpush1.bf16.msra.mxu0 0
        %3928 = vmatprep.subr.bf16.mxu0 0
        %3929 = vmatpush1.bf16.msra.mxu0 0
        %3930 = vmatprep.subr.bf16.mxu0 0
        %3931 = vmatpush1.bf16.msra.mxu0 0
        %3932 = vmatprep.subr.bf16.mxu0 0
        %3933 = vmatpush1.bf16.msra.mxu0 0
        %3934 = vmatprep.subr.bf16.mxu0 0
        %3935 = vmatpush1.bf16.msra.mxu0 0
        %3936 = vmatprep.subr.bf16.mxu0 0
        %3937 = vmatpush1.bf16.msra.mxu0 0
        %3938 = vmatprep.subr.bf16.mxu0 0
        %3939 = vmatpush1.bf16.msra.mxu0 0
        %3940 = vmatprep.subr.bf16.mxu0 0
        %3941 = vmatpush1.bf16.msra.mxu0 0
        %3942 = vmatprep.subr.bf16.mxu0 0
        %3943 = vmatpush1.bf16.msra.mxu0 0
        %3944 = vmatprep.mubr.bf16.mxu0 0
        %3945 = vmatmul.mubr.bf16.gmra.mrb[0].mxu0 %v3907
        %v3946 = vpop.f32.mrb[0].mxu0
        %v3947 = vadd.f32 0.0, %v3946
        %v3948 = vpop.f32.mrb[0].mxu0
        %v3949 = vpop.f32.mrb[0].mxu0
        %v3950 = vpop.f32.mrb[0].mxu0
        %3951 = vdwg.mxu0
        %v3953 = vsel %vm1878, %v3899, 0
        %v3956 = vsel %vm2118, %v3903, 0
        %3958 = vmatprep.subr.bf16.mxu0 0
        %3959 = vmatpush1.bf16.msra.mxu0 %v3956
        %3960 = vmatprep.subr.bf16.mxu0 0
        %3961 = vmatpush1.bf16.msra.mxu0 0
        %3962 = vmatprep.subr.bf16.mxu0 0
        %3963 = vmatpush1.bf16.msra.mxu0 0
        %3964 = vmatprep.subr.bf16.mxu0 0
        %3965 = vmatpush1.bf16.msra.mxu0 0
        %3966 = vmatprep.subr.bf16.mxu0 0
        %3967 = vmatpush1.bf16.msra.mxu0 0
        %3968 = vmatprep.subr.bf16.mxu0 0
        %3969 = vmatpush1.bf16.msra.mxu0 0
        %3970 = vmatprep.subr.bf16.mxu0 0
        %3971 = vmatpush1.bf16.msra.mxu0 0
        %3972 = vmatprep.subr.bf16.mxu0 0
        %3973 = vmatpush1.bf16.msra.mxu0 0
        %3974 = vmatprep.subr.bf16.mxu0 0
        %3975 = vmatpush1.bf16.msra.mxu0 0
        %3976 = vmatprep.subr.bf16.mxu0 0
        %3977 = vmatpush1.bf16.msra.mxu0 0
        %3978 = vmatprep.subr.bf16.mxu0 0
        %3979 = vmatpush1.bf16.msra.mxu0 0
        %3980 = vmatprep.subr.bf16.mxu0 0
        %3981 = vmatpush1.bf16.msra.mxu0 0
        %3982 = vmatprep.subr.bf16.mxu0 0
        %3983 = vmatpush1.bf16.msra.mxu0 0
        %3984 = vmatprep.subr.bf16.mxu0 0
        %3985 = vmatpush1.bf16.msra.mxu0 0
        %3986 = vmatprep.subr.bf16.mxu0 0
        %3987 = vmatpush1.bf16.msra.mxu0 0
        %3988 = vmatprep.subr.bf16.mxu0 0
        %3989 = vmatpush1.bf16.msra.mxu0 0
        %3990 = vmatprep.mubr.bf16.mxu0 0
        %3991 = vmatmul.mubr.bf16.gmra.mrb[0].mxu0 %v3953
        %v3992 = vpop.f32.mrb[0].mxu0
        %v3993 = vadd.f32 0.0, %v3992
        %v3994 = vpop.f32.mrb[0].mxu0
        %v3995 = vpop.f32.mrb[0].mxu0
        %v3996 = vpop.f32.mrb[0].mxu0
        %3997 = vdwg.mxu0
        %v3999 = vsel %vm1878, %v3900, 0
        %v4002 = vsel %vm2118, %v3904, 0
        %4004 = vmatprep.subr.bf16.mxu0 0
        %4005 = vmatpush1.bf16.msra.mxu0 %v4002
        %4006 = vmatprep.subr.bf16.mxu0 0
        %4007 = vmatpush1.bf16.msra.mxu0 0
        %4008 = vmatprep.subr.bf16.mxu0 0
        %4009 = vmatpush1.bf16.msra.mxu0 0
        %4010 = vmatprep.subr.bf16.mxu0 0
        %4011 = vmatpush1.bf16.msra.mxu0 0
        %4012 = vmatprep.subr.bf16.mxu0 0
        %4013 = vmatpush1.bf16.msra.mxu0 0
        %4014 = vmatprep.subr.bf16.mxu0 0
        %4015 = vmatpush1.bf16.msra.mxu0 0
        %4016 = vmatprep.subr.bf16.mxu0 0
        %4017 = vmatpush1.bf16.msra.mxu0 0
        %4018 = vmatprep.subr.bf16.mxu0 0
        %4019 = vmatpush1.bf16.msra.mxu0 0
        %4020 = vmatprep.subr.bf16.mxu0 0
        %4021 = vmatpush1.bf16.msra.mxu0 0
        %4022 = vmatprep.subr.bf16.mxu0 0
        %4023 = vmatpush1.bf16.msra.mxu0 0
        %4024 = vmatprep.subr.bf16.mxu0 0
        %4025 = vmatpush1.bf16.msra.mxu0 0
        %4026 = vmatprep.subr.bf16.mxu0 0
        %4027 = vmatpush1.bf16.msra.mxu0 0
        %4028 = vmatprep.subr.bf16.mxu0 0
        %4029 = vmatpush1.bf16.msra.mxu0 0
        %4030 = vmatprep.subr.bf16.mxu0 0
        %4031 = vmatpush1.bf16.msra.mxu0 0
        %4032 = vmatprep.subr.bf16.mxu0 0
        %4033 = vmatpush1.bf16.msra.mxu0 0
        %4034 = vmatprep.subr.bf16.mxu0 0
        %4035 = vmatpush1.bf16.msra.mxu0 0
        %4036 = vmatprep.mubr.bf16.mxu0 0
        %4037 = vmatmul.mubr.bf16.gmra.mrb[0].mxu0 %v3999
        %v4038 = vpop.f32.mrb[0].mxu0
        %v4039 = vadd.f32 0.0, %v4038
        %v4040 = vpop.f32.mrb[0].mxu0
        %v4041 = vpop.f32.mrb[0].mxu0
        %v4042 = vpop.f32.mrb[0].mxu0
        %4043 = vdwg.mxu0
        %v4045 = vsel %vm1878, %v3901, 0
        %v4048 = vsel %vm2118, %v3905, 0
        %4050 = vmatprep.subr.bf16.mxu0 0
        %4051 = vmatpush1.bf16.msra.mxu0 %v4048
        %4052 = vmatprep.subr.bf16.mxu0 0
        %4053 = vmatpush1.bf16.msra.mxu0 0
        %4054 = vmatprep.subr.bf16.mxu0 0
        %4055 = vmatpush1.bf16.msra.mxu0 0
        %4056 = vmatprep.subr.bf16.mxu0 0
        %4057 = vmatpush1.bf16.msra.mxu0 0
        %4058 = vmatprep.subr.bf16.mxu0 0
        %4059 = vmatpush1.bf16.msra.mxu0 0
        %4060 = vmatprep.subr.bf16.mxu0 0
        %4061 = vmatpush1.bf16.msra.mxu0 0
        %4062 = vmatprep.subr.bf16.mxu0 0
        %4063 = vmatpush1.bf16.msra.mxu0 0
        %4064 = vmatprep.subr.bf16.mxu0 0
        %4065 = vmatpush1.bf16.msra.mxu0 0
        %4066 = vmatprep.subr.bf16.mxu0 0
        %4067 = vmatpush1.bf16.msra.mxu0 0
        %4068 = vmatprep.subr.bf16.mxu0 0
        %4069 = vmatpush1.bf16.msra.mxu0 0
        %4070 = vmatprep.subr.bf16.mxu0 0
        %4071 = vmatpush1.bf16.msra.mxu0 0
        %4072 = vmatprep.subr.bf16.mxu0 0
        %4073 = vmatpush1.bf16.msra.mxu0 0
        %4074 = vmatprep.subr.bf16.mxu0 0
        %4075 = vmatpush1.bf16.msra.mxu0 0
        %4076 = vmatprep.subr.bf16.mxu0 0
        %4077 = vmatpush1.bf16.msra.mxu0 0
        %4078 = vmatprep.subr.bf16.mxu0 0
        %4079 = vmatpush1.bf16.msra.mxu0 0
        %4080 = vmatprep.subr.bf16.mxu0 0
        %4081 = vmatpush1.bf16.msra.mxu0 0
        %4082 = vmatprep.mubr.bf16.mxu0 0
        %4083 = vmatmul.mubr.bf16.gmra.mrb[0].mxu0 %v4045
        %v4084 = vpop.f32.mrb[0].mxu0
        %v4085 = vadd.f32 0.0, %v4084
        %v4086 = vpop.f32.mrb[0].mxu0
        %v4087 = vpop.f32.mrb[0].mxu0
        %v4088 = vpop.f32.mrb[0].mxu0
        %4089 = vdwg.mxu0
        %v4090 = vsel %vm1156, %v3947, 0.0
        %v4091 = vsel %vm1156, %v3993, 0.0
        %v4092 = vadd.f32 %v4090, %v4091
        %v4093 = vsel %vm1156, %v4039, 0.0
        %v4094 = vadd.f32 %v4092, %v4093
        %v4095 = vsel %vm1156, %v4085, 0.0
        %v4096 = vadd.f32 %v4094, %v4095
        %v4097 = vld [vmem:[%s51] sm:$0x1]
        %v4099 = vlaneseq
        %v4100 = vshrl.u32 %v4099, 7
        %v4101 = vsub.s32 0, %v4100
        %v4102 = vrot.slane %v4097, %v4101
        %v4104 = vadd.f32 %v4096, %v4102
        %v4105 = vadd.f32 %v2703, %v4104
        %v4106 = vsel %vm1156, %v4105, 0.0
        %4107 = vadd.xlane.f32.xlu0 %v4106
        %v4108 = vpop.xlane.xlu0 %4107
        %v4109 = vmul.f32 %v4108, %v2511
        %v4110 = vsub.f32 %v4105, %v4109
        %v4111 = vmul.f32 %v4110, %v4110
        %v4112 = vsel %vm1156, %v4111, 0.0
        %4113 = vadd.xlane.f32.xlu0 %v4112
        %v4114 = vpop.xlane.xlu0 %4113
        %v4115 = vmul.f32 %v4114, %v2511
        %v4116 = vadd.f32 %v4115, 1e-05
        %v4117 = vrsqrt.pop %v4116
        %v4118 = vmul.f32 %v4110, %v4117
        %v4120 = vlaneseq
        %v4121 = vshrl.u32 %v4120, 7
        %v4122 = vsub.s32 0, %v4121
        %v4123 = vrot.slane %v2704, %v4122
        %v4125 = vmul.f32 %v4118, %v4123
        %v4127 = vlaneseq
        %v4128 = vshrl.u32 %v4127, 7
        %v4129 = vsub.s32 0, %v4128
        %v4130 = vrot.slane %v2705, %v4129
        %v4132 = vadd.f32 %v4125, %v4130
        %v4133 = vpack.c.bf16 %v4132, %v4132
        %v4134 = vld [vmem:[%s57] sm:$0xf]
        %v4135 = vld [vmem:[%s57 + $0x4] sm:$0xf]
        %v4136 = vld [vmem:[%s57 + $0x8] sm:$0xf]
        %v4137 = vld [vmem:[%s57 + $0xc] sm:$0xf]
        %v4138 = vld [vmem:[%s59] sm:$0x1]
        %v4140 = vlaneseq
        %v4141 = vshrl.u32 %v4140, 7
        %v4142 = vsub.s32 0, %v4141
        %v4143 = vrot.slane %v4138, %v4142
        %v4149 = vunpack.c.l.b16 %v4134
        %v4150 = vunpack.c.l.b16 %v4135
        %v4151 = vunpack.c.l.b16 %v4136
        %v4152 = vunpack.c.l.b16 %v4137
        %v4153 = vpack.c.b16 %v4150, %v4149
        %v4154 = vpack.c.b16 %v4152, %v4151
        %v4158 = vsel %vm1156, %v4133, 0
        %4160 = vmatprep.subr.bf16.mxu0 0
        %4161 = vmatpush1.bf16.msra.mxu0 %v4153
        %4162 = vmatprep.subr.bf16.mxu0 0
        %4163 = vmatpush1.bf16.msra.mxu0 %v4154
        %4164 = vmatprep.subr.bf16.mxu0 0
        %4165 = vmatpush1.bf16.msra.mxu0 0
        %4166 = vmatprep.subr.bf16.mxu0 0
        %4167 = vmatpush1.bf16.msra.mxu0 0
        %4168 = vmatprep.subr.bf16.mxu0 0
        %4169 = vmatpush1.bf16.msra.mxu0 0
        %4170 = vmatprep.subr.bf16.mxu0 0
        %4171 = vmatpush1.bf16.msra.mxu0 0
        %4172 = vmatprep.subr.bf16.mxu0 0
        %4173 = vmatpush1.bf16.msra.mxu0 0
        %4174 = vmatprep.subr.bf16.mxu0 0
        %4175 = vmatpush1.bf16.msra.mxu0 0
        %4176 = vmatprep.subr.bf16.mxu0 0
        %4177 = vmatpush1.bf16.msra.mxu0 0
        %4178 = vmatprep.subr.bf16.mxu0 0
        %4179 = vmatpush1.bf16.msra.mxu0 0
        %4180 = vmatprep.subr.bf16.mxu0 0
        %4181 = vmatpush1.bf16.msra.mxu0 0
        %4182 = vmatprep.subr.bf16.mxu0 0
        %4183 = vmatpush1.bf16.msra.mxu0 0
        %4184 = vmatprep.subr.bf16.mxu0 0
        %4185 = vmatpush1.bf16.msra.mxu0 0
        %4186 = vmatprep.subr.bf16.mxu0 0
        %4187 = vmatpush1.bf16.msra.mxu0 0
        %4188 = vmatprep.subr.bf16.mxu0 0
        %4189 = vmatpush1.bf16.msra.mxu0 0
        %4190 = vmatprep.subr.bf16.mxu0 0
        %4191 = vmatpush1.bf16.msra.mxu0 0
        %4192 = vmatprep.mubr.bf16.mxu0 0
        %4193 = vmatmul.mubr.bf16.gmra.mrb[0].mxu0 %v4158
        %v4194 = vpop.f32.mrb[0].mxu0
        %v4195 = vadd.f32 %v4143, %v4194
        %v4196 = vpop.f32.mrb[0].mxu0
        %v4197 = vpop.f32.mrb[0].mxu0
        %v4198 = vpop.f32.mrb[0].mxu0
        %4199 = vdwg.mxu0
        %v4200 = vmax.f32 %v4195, 0.0
        %v4201 = vpack.c.bf16 %v4200, %v4200
        %v4202 = vld [vmem:[%s61] sm:$0xf]
        %v4203 = vld [vmem:[%s61 + $0x4] sm:$0xf]
        %v4204 = vld [vmem:[%s61 + $0x8] sm:$0xf]
        %v4205 = vld [vmem:[%s61 + $0xc] sm:$0xf]
        %v4206 = vld [vmem:[%s61 + $0x10] sm:$0xf]
        %v4207 = vld [vmem:[%s61 + $0x14] sm:$0xf]
        %v4208 = vld [vmem:[%s61 + $0x18] sm:$0xf]
        %v4209 = vld [vmem:[%s61 + $0x1c] sm:$0xf]
        %v4210 = vld [vmem:[%s63] sm:$0x1]
        %v4212 = vlaneseq
        %v4213 = vshrl.u32 %v4212, 7
        %v4214 = vsub.s32 0, %v4213
        %v4215 = vrot.slane %v4210, %v4214
        %v4225 = vunpack.c.l.b16 %v4202
        %v4226 = vunpack.c.l.b16 %v4203
        %v4227 = vunpack.c.l.b16 %v4204
        %v4228 = vunpack.c.l.b16 %v4205
        %v4229 = vunpack.c.l.b16 %v4206
        %v4230 = vunpack.c.l.b16 %v4207
        %v4231 = vunpack.c.l.b16 %v4208
        %v4232 = vunpack.c.l.b16 %v4209
        %v4233 = vpack.c.b16 %v4226, %v4225
        %v4234 = vpack.c.b16 %v4228, %v4227
        %v4235 = vpack.c.b16 %v4230, %v4229
        %v4236 = vpack.c.b16 %v4232, %v4231
        %v4242 = vsel %vm2644, %v4201, 0
        %4244 = vmatprep.subr.bf16.mxu0 0
        %4245 = vmatpush1.bf16.msra.mxu0 %v4233
        %4246 = vmatprep.subr.bf16.mxu0 0
        %4247 = vmatpush1.bf16.msra.mxu0 %v4234
        %4248 = vmatprep.subr.bf16.mxu0 0
        %4249 = vmatpush1.bf16.msra.mxu0 %v4235
        %4250 = vmatprep.subr.bf16.mxu0 0
        %4251 = vmatpush1.bf16.msra.mxu0 %v4236
        %4252 = vmatprep.subr.bf16.mxu0 0
        %4253 = vmatpush1.bf16.msra.mxu0 0
        %4254 = vmatprep.subr.bf16.mxu0 0
        %4255 = vmatpush1.bf16.msra.mxu0 0
        %4256 = vmatprep.subr.bf16.mxu0 0
        %4257 = vmatpush1.bf16.msra.mxu0 0
        %4258 = vmatprep.subr.bf16.mxu0 0
        %4259 = vmatpush1.bf16.msra.mxu0 0
        %4260 = vmatprep.subr.bf16.mxu0 0
        %4261 = vmatpush1.bf16.msra.mxu0 0
        %4262 = vmatprep.subr.bf16.mxu0 0
        %4263 = vmatpush1.bf16.msra.mxu0 0
        %4264 = vmatprep.subr.bf16.mxu0 0
        %4265 = vmatpush1.bf16.msra.mxu0 0
        %4266 = vmatprep.subr.bf16.mxu0 0
        %4267 = vmatpush1.bf16.msra.mxu0 0
        %4268 = vmatprep.subr.bf16.mxu0 0
        %4269 = vmatpush1.bf16.msra.mxu0 0
        %4270 = vmatprep.subr.bf16.mxu0 0
        %4271 = vmatpush1.bf16.msra.mxu0 0
        %4272 = vmatprep.subr.bf16.mxu0 0
        %4273 = vmatpush1.bf16.msra.mxu0 0
        %4274 = vmatprep.subr.bf16.mxu0 0
        %4275 = vmatpush1.bf16.msra.mxu0 0
        %4276 = vmatprep.mubr.bf16.mxu0 0
        %4277 = vmatmul.mubr.bf16.gmra.mrb[0].mxu0 %v4242
        %v4278 = vpop.f32.mrb[0].mxu0
        %v4279 = vadd.f32 %v4215, %v4278
        %v4280 = vpop.f32.mrb[0].mxu0
        %v4281 = vpop.f32.mrb[0].mxu0
        %v4282 = vpop.f32.mrb[0].mxu0
        %4283 = vdwg.mxu0
        %v4284 = vadd.f32 %v4132, %v4279
        %v4285 = vsel %vm1156, %v4284, 0.0
        %4286 = vadd.xlane.f32.xlu0 %v4285
        %v4287 = vpop.xlane.xlu0 %4286
        %v4288 = vmul.f32 %v4287, %v2511
        %v4289 = vsub.f32 %v4284, %v4288
        %v4290 = vmul.f32 %v4289, %v4289
        %v4291 = vsel %vm1156, %v4290, 0.0
        %4292 = vadd.xlane.f32.xlu0 %v4291
        %v4293 = vpop.xlane.xlu0 %4292
        %v4294 = vmul.f32 %v4293, %v2511
        %v4295 = vadd.f32 %v4294, 1e-05
        %v4296 = vrsqrt.pop %v4295
        %v4297 = vmul.f32 %v4289, %v4296
        %v4298 = vmul.f32 %v4297, %v4123
        %v4299 = vadd.f32 %v4298, %v4130
        %4300 = vst.msk [vmem:[%s988] sm:$0xff] %vm1156, %v4299
        %s4301 = sand.u32 %s769, 1
        %s4302 = scalar_lea.sflag [#allocation3], %s4301
        %s4303 = sand.u32 %s769, 1
        %s4304 = smul.addr %s4303, 8
        %s4305 = scalar_lea.vmem [#allocation2], %s4304
        // Predicated region
        $region149: #{tpu_custom_call.1} parent=147 // pred_check
          %p4306 = pneg %p779
        $region150: #{tpu_custom_call.1} parent=147 // pred_check_branch
          %4308 = sbr.rel (%p4306) target = $region152
        $region151: #{tpu_custom_call.1} parent=147 // pred_region
          %s4310 = ssub.s32 128, 128
          %4311 = vsyncadd %s4302, %s4310
          %s4312 = smul.addr %s79, 128
          %s4313 = scalar_lea.hbm %s65, %s4312
          %s4315 = sshll.u32 %s4305, 4
          %s4316 = int_to_ptr.vmem [resolvable:$true] %s4315
          %4318 = dma.vmem_to_hbm [thread:$0]  %s4316, 128, %s4313, %s4302
        $region152: #{tpu_custom_call.1} parent=147 // pred_fallthru
          _
      $region148: #{tpu_custom_call.1} parent=5 // pred_fallthru
        _
      %p4319 = scmp.le.s32.totalorder 2, %s74
      // Predicated region
      $region153: #{tpu_custom_call.1} parent=5 // pred_check
        %p4320 = pneg %p4319
      $region154: #{tpu_custom_call.1} parent=5 // pred_check_branch
        %4322 = sbr.rel (%p4320) target = $region156
      $region155: #{tpu_custom_call.1} parent=5 // pred_region
        %s4323 = ssub.s32 %s74, 2
        // Predicated region
        $region157: #{tpu_custom_call.1} parent=155 // pred_check
          %p4324 = pneg %p785
        $region158: #{tpu_custom_call.1} parent=155 // pred_check_branch
          %4326 = sbr.rel (%p4324) target = $region160
        $region159: #{tpu_custom_call.1} parent=155 // pred_region
          %s4327 = sand.u32 %s770, 1
          %s4328 = scalar_lea.sflag [#allocation3], %s4327
          %s4329 = sand.u32 %s770, 1
          %s4330 = smul.addr %s4329, 8
          %s4331 = scalar_lea.vmem [#allocation2], %s4330
          %4332 = dma.done %s4328, 128
        $region160: #{tpu_custom_call.1} parent=155 // pred_fallthru
          _
      $region156: #{tpu_custom_call.1} parent=5 // pred_fallthru
        _
    $region6: #{tpu_custom_call.1} parent=1 // loop_footer
      %s78 = sadd.s32 1, %s74
    $region7: #{tpu_custom_call.1} parent=1 // loop_footer_branch
      %73 = sbr.rel target = $region3
    $region8: #{tpu_custom_call.1} parent=1 // loop_exit
      _
    %4333 = vsyncpa [#allocation3], 1
    %s4334 = scalar_lea.sflag [#allocation3], 1
    %4335 = vsyncpa %s4334, 1

</llo_original>
